<compile_context>
chip_gen: v7x
topology: tpu7x:2x2x1
jax: 0.10.0
libtpu: 0.0.40
codegen_flags: <defaults>
</compile_context>

<pallas_src>
import functools
import math

import jax
import jax.numpy as jnp
from jax.experimental import pallas as pl
from jax.experimental.pallas import tpu as pltpu

# ----------------------------- problem sizes ---------------------------------
B, LX, LC, D, H, DFF = 2, 8, 16, 32, 4, 128   # batch, x-seq, cross-seq, d_model, heads, d_ff
DH = D // H
NUM_LAYERS = 2            # Encoder with two EncoderLayers, norm_layer=None, projection=None
EPS = 1e-5                # nn.LayerNorm default

# ------------------- packed per-layer parameter slab layout -------------------
# One (ROWS, 128) f32 slab per layer; stacked over layers -> (NUM_LAYERS, ROWS, 128).
LANES = 128
R_QKV_S = 0     # 32 rows, lanes 0:96   self-attn  [Wq|Wk|Wv]  (Wq pre-scaled by 1/sqrt(DH))
R_QKV_C = 32    # 32 rows, lanes 0:96   cross-attn [Wq|Wk|Wv]  (Wq pre-scaled)
R_OUT   = 64    # 32 rows, lanes 0:64   [Wo_self | Wo_cross]
R_G1    = 96    # 32 rows, lanes 0:16   ChannelGate fc1 (D -> D//2, no bias)
R_G2    = 128   # 16 rows, lanes 0:32   ChannelGate fc2 (D//2 -> D, no bias)
R_C1    = 144   # 32 rows, lanes 0:128  conv1 weight (D, DFF)
R_C2T   = 176   # 32 rows, lanes 0:128  conv2 weight, stored TRANSPOSED (D, DFF)
R_VEC   = 208   # 16 rows               bias / LayerNorm rows (V_* indices below)
ROWS    = 224

(V_BQ_S, V_BK_S, V_BV_S, V_BQ_C, V_BK_C, V_BV_C, V_BO_S, V_BO_C,
 V_C2B, V_LN1G, V_LN1B, V_LN2G, V_LN2B, V_LN3G, V_LN3B, V_C1B) = range(16)
N_VEC = 16


# ---------------------- shared building blocks (pure jnp) --------------------
def _layernorm(x, g, b):
    mu = jnp.mean(x, axis=-1, keepdims=True)
    var = jnp.mean(jnp.square(x - mu), axis=-1, keepdims=True)
    return (x - mu) * jax.lax.rsqrt(var + EPS) * g + b


def _stable_sigmoid(x):
    e = jnp.exp(-jnp.abs(x))
    return jnp.where(x >= 0, 1.0 / (1.0 + e), e / (1.0 + e))


def _mha(q, k, v, nb, lq, lk):
    """Multi-head attention with the batch folded into rows.

    q: (nb*lq, D), k/v: (nb*lk, D); the 1/sqrt(DH) scale is already folded
    into q.  Static loop over H heads; each head processes every batch at once
    through free row reshapes + a leading-batch einsum, so there is no
    per-(batch, head) stack / concat relayout.
    """
    heads = []
    for h in range(H):
        sl = slice(h * DH, (h + 1) * DH)
        qh = q[:, sl].reshape(nb, lq, DH)
        kh = k[:, sl].reshape(nb, lk, DH)
        vh = v[:, sl].reshape(nb, lk, DH)
        s = jnp.einsum("bqd,bkd->bqk", qh, kh, preferred_element_type=jnp.float32)
        s = s - jnp.max(s, axis=-1, keepdims=True)
        p = jnp.exp(s)
        p = p / jnp.sum(p, axis=-1, keepdims=True)           # exact softmax
        heads.append(jnp.einsum("bqk,bkd->bqd", p, vh,
                                preferred_element_type=jnp.float32))
    return jnp.concatenate(heads, axis=-1).reshape(nb * lq, D)


# ------------------------------ Pallas kernel ---------------------------------
def encoder_kernel(x_ref, cross_ref, slab_ref, out_ref, xk_ref, *, nb, lx, lc):
    """One grid step == one EncoderLayer; running activations live in xk_ref."""
    layer = pl.program_id(0)

    @pl.when(layer == 0)
    def _():
        xk_ref[...] = x_ref[...]

    xf = xk_ref[...]                      # (nb*lx, D) running activations
    cf = cross_ref[...]                   # (nb*lc, D)

    def vrow(i):                          # (1, D) bias / LayerNorm row
        return slab_ref[R_VEC + i:R_VEC + i + 1, :D]

    # --- x1 = norm1(x + SelfAttention(x, x, x)); fused QKV matmul -------------
    qkv = jnp.dot(xf, slab_ref[R_QKV_S:R_QKV_S + D, :3 * D],
                  preferred_element_type=jnp.float32)
    q = qkv[:, 0 * D:1 * D] + vrow(V_BQ_S)          # scale pre-folded into Wq / bq
    k = qkv[:, 1 * D:2 * D] + vrow(V_BK_S)
    v = qkv[:, 2 * D:3 * D] + vrow(V_BV_S)
    attn = _mha(q, k, v, nb, lx, lx)
    attn = jnp.dot(attn, slab_ref[R_OUT:R_OUT + D, :D],
                   preferred_element_type=jnp.float32) + vrow(V_BO_S)
    x1 = _layernorm(xf + attn, vrow(V_LN1G), vrow(V_LN1B))

    # --- ChannelGate: gated = cross * sigmoid(fc2(relu(fc1(cross)))) ----------
    g = jnp.maximum(jnp.dot(cf, slab_ref[R_G1:R_G1 + D, :D // 2],
                            preferred_element_type=jnp.float32), 0.0)
    g = jnp.dot(g, slab_ref[R_G2:R_G2 + D // 2, :D],
                preferred_element_type=jnp.float32)
    gated = cf * _stable_sigmoid(g)

    # --- x2 = norm2(x1 + CrossAttention(x1, gated, gated)); fused KV matmul ---
    qc = jnp.dot(x1, slab_ref[R_QKV_C:R_QKV_C + D, :D],
                 preferred_element_type=jnp.float32) + vrow(V_BQ_C)
    kv = jnp.dot(gated, slab_ref[R_QKV_C:R_QKV_C + D, D:3 * D],
                 preferred_element_type=jnp.float32)
    kc = kv[:, :D] + vrow(V_BK_C)
    vc = kv[:, D:] + vrow(V_BV_C)
    o = _mha(qc, kc, vc, nb, lx, lc)
    o = jnp.dot(o, slab_ref[R_OUT:R_OUT + D, D:2 * D],
                preferred_element_type=jnp.float32) + vrow(V_BO_C)
    x2 = _layernorm(x1 + o, vrow(V_LN2G), vrow(V_LN2B))

    # --- y = conv2(relu(conv1(x2)))  (kernel_size=1 convs == per-position linear)
    y = jnp.dot(x2, slab_ref[R_C1:R_C1 + D, :],
                preferred_element_type=jnp.float32)
    y = jnp.maximum(y + slab_ref[R_VEC + V_C1B:R_VEC + V_C1B + 1, :], 0.0)
    c2t = slab_ref[R_C2T:R_C2T + D, :]               # conv2 weight, stored (D, DFF)
    y = jax.lax.dot_general(y, c2t, (((1,), (1,)), ((), ())),
                            preferred_element_type=jnp.float32) + vrow(V_C2B)

    x3 = _layernorm(x2 + y, vrow(V_LN3G), vrow(V_LN3B))
    xk_ref[...] = x3                      # carry to the next layer

    @pl.when(layer == pl.num_programs(0) - 1)
    def _():
        out_ref[...] = x3


# ------------------------------- wrapper --------------------------------------
def encoder_forward(x, cross, slabs):
    """Fused Encoder.forward.  x: (B, LX, D), cross: (B, LC, D),
    slabs: (NUM_LAYERS, ROWS, 128) packed per-layer parameters."""
    b, lx, d = x.shape
    _, lc, _ = cross.shape
    n_layers = slabs.shape[0]
    xf = x.reshape(b * lx, d)             # fold batch into matmul rows (free reshape)
    cf = cross.reshape(b * lc, d)

    out = pl.pallas_call(
        functools.partial(encoder_kernel, nb=b, lx=lx, lc=lc),
        out_shape=jax.ShapeDtypeStruct((b * lx, d), jnp.float32),
        grid=(n_layers,),
        in_specs=[
            pl.BlockSpec((b * lx, d), lambda l: (0, 0)),             # x (read at layer 0)
            pl.BlockSpec((b * lc, d), lambda l: (0, 0)),             # cross (resident)
            pl.BlockSpec((None, ROWS, LANES), lambda l: (l, 0, 0)),  # layer-l param slab
        ],
        out_specs=pl.BlockSpec((b * lx, d), lambda l: (0, 0)),
        scratch_shapes=[pltpu.VMEM((b * lx, d), jnp.float32)],       # running activations
        compiler_params=pltpu.CompilerParams(
            dimension_semantics=("arbitrary",)),                     # layers are sequential
    )(xf, cf, slabs)
    return out.reshape(b, lx, d)


# --------------------------- plain-JAX reference ------------------------------
def _mha_ref(q_in, kv_in, wq, bq, wk, bk, wv, bv, wo, bo):
    Q = q_in @ wq + bq
    K = kv_in @ wk + bk
    V = kv_in @ wv + bv
    scale = 1.0 / math.sqrt(DH)
    heads = []
    for h in range(H):
        sl = slice(h * DH, (h + 1) * DH)
        p = jax.nn.softmax((Q[:, sl] @ K[:, sl].T) * scale, axis=-1)
        heads.append(p @ V[:, sl])
    return jnp.concatenate(heads, axis=-1) @ wo + bo


def _layer_ref(xb, cb, p):
    ws, wc = p["w_qkv_s"], p["w_qkv_c"]
    x1 = _layernorm(
        xb + _mha_ref(xb, xb, ws[:, :D], p["b_q_s"], ws[:, D:2 * D], p["b_k_s"],
                      ws[:, 2 * D:], p["b_v_s"], p["w_out_s"], p["b_out_s"]),
        p["ln1_g"], p["ln1_b"])
    gate = jax.nn.sigmoid(jnp.maximum(cb @ p["w_gate1"], 0.0) @ p["w_gate2"])
    gated = cb * gate
    x2 = _layernorm(
        x1 + _mha_ref(x1, gated, wc[:, :D], p["b_q_c"], wc[:, D:2 * D], p["b_k_c"],
                      wc[:, 2 * D:], p["b_v_c"], p["w_out_c"], p["b_out_c"]),
        p["ln2_g"], p["ln2_b"])
    y = jnp.maximum(x2 @ p["w_conv1"] + p["b_conv1"], 0.0)
    y = y @ p["w_conv2"] + p["b_conv2"]
    return _layernorm(x2 + y, p["ln3_g"], p["ln3_b"])


def encoder_forward_ref(x, cross, layer_params):
    for p in layer_params:
        x = jnp.stack([_layer_ref(x[i], cross[i], p) for i in range(x.shape[0])])
    return x


# ------------------------------ parameter init --------------------------------
def init_layer_params(key):
    ks = iter(jax.random.split(key, 24))
    nk = lambda: next(ks)
    w = lambda shape, s=0.1: s * jax.random.normal(nk(), shape, jnp.float32)
    return {
        "w_qkv_s": w((D, 3 * D)),
        "b_q_s": w((D,), 0.02), "b_k_s": w((D,), 0.02), "b_v_s": w((D,), 0.02),
        "w_qkv_c": w((D, 3 * D)),
        "b_q_c": w((D,), 0.02), "b_k_c": w((D,), 0.02), "b_v_c": w((D,), 0.02),
        "w_out_s": w((D, D)), "b_out_s": w((D,), 0.02),
        "w_out_c": w((D, D)), "b_out_c": w((D,), 0.02),
        "w_gate1": w((D, D // 2)),
        "w_gate2": w((D // 2, D)),
        "w_conv1": w((D, DFF)), "b_conv1": w((DFF,), 0.02),
        "w_conv2": w((DFF, D)), "b_conv2": w((D,), 0.02),
        "ln1_g": jnp.ones((D,), jnp.float32), "ln1_b": jnp.zeros((D,), jnp.float32),
        "ln2_g": jnp.ones((D,), jnp.float32), "ln2_b": jnp.zeros((D,), jnp.float32),
        "ln3_g": jnp.ones((D,), jnp.float32), "ln3_b": jnp.zeros((D,), jnp.float32),
    }


def pack_layer_params(p):
    """Pack one layer's parameters into a lane-dense (ROWS, 128) slab.
    The attention scale 1/sqrt(DH) is folded into Wq / bq; conv2 is stored
    transposed so every matmul operand is a clean, aligned slab slice."""
    scale = 1.0 / math.sqrt(DH)
    slab = jnp.zeros((ROWS, LANES), jnp.float32)
    wqkv_s = jnp.concatenate([p["w_qkv_s"][:, :D] * scale, p["w_qkv_s"][:, D:]], axis=1)
    wqkv_c = jnp.concatenate([p["w_qkv_c"][:, :D] * scale, p["w_qkv_c"][:, D:]], axis=1)
    slab = slab.at[R_QKV_S:R_QKV_S + D, :3 * D].set(wqkv_s)
    slab = slab.at[R_QKV_C:R_QKV_C + D, :3 * D].set(wqkv_c)
    slab = slab.at[R_OUT:R_OUT + D, :D].set(p["w_out_s"])
    slab = slab.at[R_OUT:R_OUT + D, D:2 * D].set(p["w_out_c"])
    slab = slab.at[R_G1:R_G1 + D, :D // 2].set(p["w_gate1"])
    slab = slab.at[R_G2:R_G2 + D // 2, :D].set(p["w_gate2"])
    slab = slab.at[R_C1:R_C1 + D, :DFF].set(p["w_conv1"])
    slab = slab.at[R_C2T:R_C2T + D, :DFF].set(p["w_conv2"].T)
    vec_rows = {
        V_BQ_S: p["b_q_s"] * scale, V_BK_S: p["b_k_s"], V_BV_S: p["b_v_s"],
        V_BQ_C: p["b_q_c"] * scale, V_BK_C: p["b_k_c"], V_BV_C: p["b_v_c"],
        V_BO_S: p["b_out_s"], V_BO_C: p["b_out_c"], V_C2B: p["b_conv2"],
        V_LN1G: p["ln1_g"], V_LN1B: p["ln1_b"], V_LN2G: p["ln2_g"],
        V_LN2B: p["ln2_b"], V_LN3G: p["ln3_g"], V_LN3B: p["ln3_b"],
    }
    for idx, vec in vec_rows.items():
        slab = slab.at[R_VEC + idx, :D].set(vec)
    slab = slab.at[R_VEC + V_C1B, :DFF].set(p["b_conv1"])
    return slab


# ----------------------------------- main --------------------------------------
if __name__ == "__main__":
    key = jax.random.PRNGKey(0)
    kx, kc, kp = jax.random.split(key, 3)
    x = jax.random.normal(kx, (B, LX, D), jnp.float32)
    cross = jax.random.normal(kc, (B, LC, D), jnp.float32)
    layer_params = [init_layer_params(k) for k in jax.random.split(kp, NUM_LAYERS)]
    slabs = jnp.stack([pack_layer_params(p) for p in layer_params], axis=0)

    out = jax.block_until_ready(jax.jit(encoder_forward)(x, cross, slabs))
    ref = encoder_forward_ref(x, cross, layer_params)

    assert out.shape == (B, LX, D)
    err = float(jnp.max(jnp.abs(out - ref)))
    # f32 everywhere with exact softmax / sigmoid; tolerance only covers MXU
    # f32-pass vs XLA default matmul-precision differences.  Layout/fusion bugs
    # would show up as O(1) errors, far above this threshold.
    assert jnp.allclose(out, ref, atol=2e-2, rtol=2e-2), f"max abs err = {err}"
    print("KERNEL_OK")
</pallas_src>

<mosaic_0001>
module attributes {stable_mosaic.version = 11 : i64} {
  func.func @encoder_kernel(%arg0: i32, %arg1: memref<16x32xf32, #tpu.memory_space<vmem>>, %arg2: memref<32x32xf32, #tpu.memory_space<vmem>>, %arg3: memref<1x224x128xf32, #tpu.memory_space<vmem>>, %arg4: memref<16x32xf32, #tpu.memory_space<vmem>>, %arg5: memref<16x32xf32, #tpu.memory_space<vmem>>) attributes {dimension_semantics = [#tpu.dimension_semantics<arbitrary>], iteration_bounds = array<i64: 2>, scalar_prefetch = 0 : i64, scratch_operands = 1 : i64, tpu.core_type = #tpu.core_type<tc>, window_params = [{pipeline_mode = #tpu.pipeline_mode<synchronous>, transform_indices = @transform_0, window_bounds = array<i64: 16, 32>}, {pipeline_mode = #tpu.pipeline_mode<synchronous>, transform_indices = @transform_1, window_bounds = array<i64: 32, 32>}, {transform_indices = @transform_2, window_bounds = array<i64: 1, 224, 128>}, {pipeline_mode = #tpu.pipeline_mode<synchronous>, transform_indices = @transform_3, window_bounds = array<i64: 16, 32>}]} {
    %c0_i32 = arith.constant 0 : i32
    %0 = arith.cmpi eq, %arg0, %c0_i32 : i32
    %1 = arith.extui %0 : i1 to i32
    %c0_i32_0 = arith.constant 0 : i32
    %2 = arith.cmpi ne, %1, %c0_i32_0 : i32
    scf.if %2 {
      %c0_122 = arith.constant 0 : index
      %c0_123 = arith.constant 0 : index
      %321 = vector.load %arg1[%c0_122, %c0_123] : memref<16x32xf32, #tpu.memory_space<vmem>>, vector<16x32xf32>
      %c0_124 = arith.constant 0 : index
      %c0_125 = arith.constant 0 : index
      %322 = vector.load %arg5[%c0_124, %c0_125] : memref<16x32xf32, #tpu.memory_space<vmem>>, vector<16x32xf32>
      tpu.vector_store %arg5[%c0_124, %c0_125], %321 {strides = array<i32>} : memref<16x32xf32, #tpu.memory_space<vmem>>, vector<16x32xf32>,
    } else {
    }
    %c0 = arith.constant 0 : index
    %c0_1 = arith.constant 0 : index
    %3 = vector.load %arg5[%c0, %c0_1] : memref<16x32xf32, #tpu.memory_space<vmem>>, vector<16x32xf32>
    %c0_2 = arith.constant 0 : index
    %c0_3 = arith.constant 0 : index
    %4 = vector.load %arg2[%c0_2, %c0_3] : memref<32x32xf32, #tpu.memory_space<vmem>>, vector<32x32xf32>
    %c0_4 = arith.constant 0 : index
    %c0_5 = arith.constant 0 : index
    %c0_6 = arith.constant 0 : index
    %5 = vector.load %arg3[%c0_4, %c0_5, %c0_6] : memref<1x224x128xf32, #tpu.memory_space<vmem>>, vector<1x32x96xf32>
    %6 = vector.shape_cast %5 : vector<1x32x96xf32> to vector<32x96xf32>
    %cst = arith.constant dense<0.000000e+00> : vector<16x96xf32>
    %7 = tpu.matmul %3, %6, %cst {dimension_numbers = #tpu.dot_dimension_numbers<[1], [0], [0], [1], [0, 0, 1, 1], [], []>} : vector<16x32xf32>, vector<32x96xf32>, vector<16x96xf32> -> vector<16x96xf32>
    %8 = vector.extract_strided_slice %7 {offsets = [0, 0], sizes = [16, 32], strides = [1, 1]} : vector<16x96xf32> to vector<16x32xf32>
    %c0_7 = arith.constant 0 : index
    %c208 = arith.constant 208 : index
    %c0_8 = arith.constant 0 : index
    %9 = vector.load %arg3[%c0_7, %c208, %c0_8] : memref<1x224x128xf32, #tpu.memory_space<vmem>>, vector<1x1x32xf32>
    %10 = vector.shape_cast %9 : vector<1x1x32xf32> to vector<1x32xf32>
    %11 = vector.broadcast %10 : vector<1x32xf32> to vector<16x32xf32>
    %12 = arith.addf %8, %11 : vector<16x32xf32>
    %13 = vector.extract_strided_slice %7 {offsets = [0, 32], sizes = [16, 32], strides = [1, 1]} : vector<16x96xf32> to vector<16x32xf32>
    %c0_9 = arith.constant 0 : index
    %c209 = arith.constant 209 : index
    %c0_10 = arith.constant 0 : index
    %14 = vector.load %arg3[%c0_9, %c209, %c0_10] : memref<1x224x128xf32, #tpu.memory_space<vmem>>, vector<1x1x32xf32>
    %15 = vector.shape_cast %14 : vector<1x1x32xf32> to vector<1x32xf32>
    %16 = vector.broadcast %15 : vector<1x32xf32> to vector<16x32xf32>
    %17 = arith.addf %13, %16 : vector<16x32xf32>
    %18 = vector.extract_strided_slice %7 {offsets = [0, 64], sizes = [16, 32], strides = [1, 1]} : vector<16x96xf32> to vector<16x32xf32>
    %c0_11 = arith.constant 0 : index
    %c210 = arith.constant 210 : index
    %c0_12 = arith.constant 0 : index
    %19 = vector.load %arg3[%c0_11, %c210, %c0_12] : memref<1x224x128xf32, #tpu.memory_space<vmem>>, vector<1x1x32xf32>
    %20 = vector.shape_cast %19 : vector<1x1x32xf32> to vector<1x32xf32>
    %21 = vector.broadcast %20 : vector<1x32xf32> to vector<16x32xf32>
    %22 = arith.addf %18, %21 : vector<16x32xf32>
    %23 = vector.extract_strided_slice %12 {offsets = [0, 0], sizes = [16, 8], strides = [1, 1]} : vector<16x32xf32> to vector<16x8xf32>
    %24 = vector.shape_cast %23 : vector<16x8xf32> to vector<2x8x8xf32>
    %25 = vector.extract_strided_slice %17 {offsets = [0, 0], sizes = [16, 8], strides = [1, 1]} : vector<16x32xf32> to vector<16x8xf32>
    %26 = vector.shape_cast %25 : vector<16x8xf32> to vector<2x8x8xf32>
    %27 = vector.extract_strided_slice %22 {offsets = [0, 0], sizes = [16, 8], strides = [1, 1]} : vector<16x32xf32> to vector<16x8xf32>
    %28 = vector.shape_cast %27 : vector<16x8xf32> to vector<2x8x8xf32>
    "tpu.trace_start"() <{level = 10 : i32, message = "bqd,bkd->bqk"}> : () -> ()
    %cst_13 = arith.constant dense<0.000000e+00> : vector<2x8x8xf32>
    %29 = tpu.matmul %24, %26, %cst_13 {dimension_numbers = #tpu.dot_dimension_numbers<[2], [2], [1], [1], [0, 0, 0, 1, 1, 1], [0], [0]>} : vector<2x8x8xf32>, vector<2x8x8xf32>, vector<2x8x8xf32> -> vector<2x8x8xf32>
    "tpu.trace_stop"() : () -> ()
    %cst_14 = arith.constant dense<0xFF800000> : vector<2x8xf32>
    %30 = vector.multi_reduction <maximumf>, %29, %cst_14 [2] : vector<2x8x8xf32> to vector<2x8xf32>
    %31 = vector.shape_cast %30 : vector<2x8xf32> to vector<2x8x1xf32>
    %32 = vector.broadcast %31 : vector<2x8x1xf32> to vector<2x8x8xf32>
    %33 = arith.subf %29, %32 : vector<2x8x8xf32>
    %34 = math.exp %33 : vector<2x8x8xf32>
    %cst_15 = arith.constant dense<0.000000e+00> : vector<2x8xf32>
    %35 = vector.multi_reduction <add>, %34, %cst_15 [2] : vector<2x8x8xf32> to vector<2x8xf32>
    %36 = vector.shape_cast %35 : vector<2x8xf32> to vector<2x8x1xf32>
    %37 = vector.broadcast %36 : vector<2x8x1xf32> to vector<2x8x8xf32>
    %38 = arith.divf %34, %37 : vector<2x8x8xf32>
    "tpu.trace_start"() <{level = 10 : i32, message = "bqk,bkd->bqd"}> : () -> ()
    %cst_16 = arith.constant dense<0.000000e+00> : vector<2x8x8xf32>
    %39 = tpu.matmul %38, %28, %cst_16 {dimension_numbers = #tpu.dot_dimension_numbers<[2], [1], [1], [2], [0, 0, 0, 1, 1, 2], [0], [0]>} : vector<2x8x8xf32>, vector<2x8x8xf32>, vector<2x8x8xf32> -> vector<2x8x8xf32>
    "tpu.trace_stop"() : () -> ()
    %40 = vector.extract_strided_slice %12 {offsets = [0, 8], sizes = [16, 8], strides = [1, 1]} : vector<16x32xf32> to vector<16x8xf32>
    %41 = vector.shape_cast %40 : vector<16x8xf32> to vector<2x8x8xf32>
    %42 = vector.extract_strided_slice %17 {offsets = [0, 8], sizes = [16, 8], strides = [1, 1]} : vector<16x32xf32> to vector<16x8xf32>
    %43 = vector.shape_cast %42 : vector<16x8xf32> to vector<2x8x8xf32>
    %44 = vector.extract_strided_slice %22 {offsets = [0, 8], sizes = [16, 8], strides = [1, 1]} : vector<16x32xf32> to vector<16x8xf32>
    %45 = vector.shape_cast %44 : vector<16x8xf32> to vector<2x8x8xf32>
    "tpu.trace_start"() <{level = 10 : i32, message = "bqd,bkd->bqk"}> : () -> ()
    %cst_17 = arith.constant dense<0.000000e+00> : vector<2x8x8xf32>
    %46 = tpu.matmul %41, %43, %cst_17 {dimension_numbers = #tpu.dot_dimension_numbers<[2], [2], [1], [1], [0, 0, 0, 1, 1, 1], [0], [0]>} : vector<2x8x8xf32>, vector<2x8x8xf32>, vector<2x8x8xf32> -> vector<2x8x8xf32>
    "tpu.trace_stop"() : () -> ()
    %cst_18 = arith.constant dense<0xFF800000> : vector<2x8xf32>
    %47 = vector.multi_reduction <maximumf>, %46, %cst_18 [2] : vector<2x8x8xf32> to vector<2x8xf32>
    %48 = vector.shape_cast %47 : vector<2x8xf32> to vector<2x8x1xf32>
    %49 = vector.broadcast %48 : vector<2x8x1xf32> to vector<2x8x8xf32>
    %50 = arith.subf %46, %49 : vector<2x8x8xf32>
    %51 = math.exp %50 : vector<2x8x8xf32>
    %cst_19 = arith.constant dense<0.000000e+00> : vector<2x8xf32>
    %52 = vector.multi_reduction <add>, %51, %cst_19 [2] : vector<2x8x8xf32> to vector<2x8xf32>
    %53 = vector.shape_cast %52 : vector<2x8xf32> to vector<2x8x1xf32>
    %54 = vector.broadcast %53 : vector<2x8x1xf32> to vector<2x8x8xf32>
    %55 = arith.divf %51, %54 : vector<2x8x8xf32>
    "tpu.trace_start"() <{level = 10 : i32, message = "bqk,bkd->bqd"}> : () -> ()
    %cst_20 = arith.constant dense<0.000000e+00> : vector<2x8x8xf32>
    %56 = tpu.matmul %55, %45, %cst_20 {dimension_numbers = #tpu.dot_dimension_numbers<[2], [1], [1], [2], [0, 0, 0, 1, 1, 2], [0], [0]>} : vector<2x8x8xf32>, vector<2x8x8xf32>, vector<2x8x8xf32> -> vector<2x8x8xf32>
    "tpu.trace_stop"() : () -> ()
    %57 = vector.extract_strided_slice %12 {offsets = [0, 16], sizes = [16, 8], strides = [1, 1]} : vector<16x32xf32> to vector<16x8xf32>
    %58 = vector.shape_cast %57 : vector<16x8xf32> to vector<2x8x8xf32>
    %59 = vector.extract_strided_slice %17 {offsets = [0, 16], sizes = [16, 8], strides = [1, 1]} : vector<16x32xf32> to vector<16x8xf32>
    %60 = vector.shape_cast %59 : vector<16x8xf32> to vector<2x8x8xf32>
    %61 = vector.extract_strided_slice %22 {offsets = [0, 16], sizes = [16, 8], strides = [1, 1]} : vector<16x32xf32> to vector<16x8xf32>
    %62 = vector.shape_cast %61 : vector<16x8xf32> to vector<2x8x8xf32>
    "tpu.trace_start"() <{level = 10 : i32, message = "bqd,bkd->bqk"}> : () -> ()
    %cst_21 = arith.constant dense<0.000000e+00> : vector<2x8x8xf32>
    %63 = tpu.matmul %58, %60, %cst_21 {dimension_numbers = #tpu.dot_dimension_numbers<[2], [2], [1], [1], [0, 0, 0, 1, 1, 1], [0], [0]>} : vector<2x8x8xf32>, vector<2x8x8xf32>, vector<2x8x8xf32> -> vector<2x8x8xf32>
    "tpu.trace_stop"() : () -> ()
    %cst_22 = arith.constant dense<0xFF800000> : vector<2x8xf32>
    %64 = vector.multi_reduction <maximumf>, %63, %cst_22 [2] : vector<2x8x8xf32> to vector<2x8xf32>
    %65 = vector.shape_cast %64 : vector<2x8xf32> to vector<2x8x1xf32>
    %66 = vector.broadcast %65 : vector<2x8x1xf32> to vector<2x8x8xf32>
    %67 = arith.subf %63, %66 : vector<2x8x8xf32>
    %68 = math.exp %67 : vector<2x8x8xf32>
    %cst_23 = arith.constant dense<0.000000e+00> : vector<2x8xf32>
    %69 = vector.multi_reduction <add>, %68, %cst_23 [2] : vector<2x8x8xf32> to vector<2x8xf32>
    %70 = vector.shape_cast %69 : vector<2x8xf32> to vector<2x8x1xf32>
    %71 = vector.broadcast %70 : vector<2x8x1xf32> to vector<2x8x8xf32>
    %72 = arith.divf %68, %71 : vector<2x8x8xf32>
    "tpu.trace_start"() <{level = 10 : i32, message = "bqk,bkd->bqd"}> : () -> ()
    %cst_24 = arith.constant dense<0.000000e+00> : vector<2x8x8xf32>
    %73 = tpu.matmul %72, %62, %cst_24 {dimension_numbers = #tpu.dot_dimension_numbers<[2], [1], [1], [2], [0, 0, 0, 1, 1, 2], [0], [0]>} : vector<2x8x8xf32>, vector<2x8x8xf32>, vector<2x8x8xf32> -> vector<2x8x8xf32>
    "tpu.trace_stop"() : () -> ()
    %74 = vector.extract_strided_slice %12 {offsets = [0, 24], sizes = [16, 8], strides = [1, 1]} : vector<16x32xf32> to vector<16x8xf32>
    %75 = vector.shape_cast %74 : vector<16x8xf32> to vector<2x8x8xf32>
    %76 = vector.extract_strided_slice %17 {offsets = [0, 24], sizes = [16, 8], strides = [1, 1]} : vector<16x32xf32> to vector<16x8xf32>
    %77 = vector.shape_cast %76 : vector<16x8xf32> to vector<2x8x8xf32>
    %78 = vector.extract_strided_slice %22 {offsets = [0, 24], sizes = [16, 8], strides = [1, 1]} : vector<16x32xf32> to vector<16x8xf32>
    %79 = vector.shape_cast %78 : vector<16x8xf32> to vector<2x8x8xf32>
    "tpu.trace_start"() <{level = 10 : i32, message = "bqd,bkd->bqk"}> : () -> ()
    %cst_25 = arith.constant dense<0.000000e+00> : vector<2x8x8xf32>
    %80 = tpu.matmul %75, %77, %cst_25 {dimension_numbers = #tpu.dot_dimension_numbers<[2], [2], [1], [1], [0, 0, 0, 1, 1, 1], [0], [0]>} : vector<2x8x8xf32>, vector<2x8x8xf32>, vector<2x8x8xf32> -> vector<2x8x8xf32>
    "tpu.trace_stop"() : () -> ()
    %cst_26 = arith.constant dense<0xFF800000> : vector<2x8xf32>
    %81 = vector.multi_reduction <maximumf>, %80, %cst_26 [2] : vector<2x8x8xf32> to vector<2x8xf32>
    %82 = vector.shape_cast %81 : vector<2x8xf32> to vector<2x8x1xf32>
    %83 = vector.broadcast %82 : vector<2x8x1xf32> to vector<2x8x8xf32>
    %84 = arith.subf %80, %83 : vector<2x8x8xf32>
    %85 = math.exp %84 : vector<2x8x8xf32>
    %cst_27 = arith.constant dense<0.000000e+00> : vector<2x8xf32>
    %86 = vector.multi_reduction <add>, %85, %cst_27 [2] : vector<2x8x8xf32> to vector<2x8xf32>
    %87 = vector.shape_cast %86 : vector<2x8xf32> to vector<2x8x1xf32>
    %88 = vector.broadcast %87 : vector<2x8x1xf32> to vector<2x8x8xf32>
    %89 = arith.divf %85, %88 : vector<2x8x8xf32>
    "tpu.trace_start"() <{level = 10 : i32, message = "bqk,bkd->bqd"}> : () -> ()
    %cst_28 = arith.constant dense<0.000000e+00> : vector<2x8x8xf32>
    %90 = tpu.matmul %89, %79, %cst_28 {dimension_numbers = #tpu.dot_dimension_numbers<[2], [1], [1], [2], [0, 0, 0, 1, 1, 2], [0], [0]>} : vector<2x8x8xf32>, vector<2x8x8xf32>, vector<2x8x8xf32> -> vector<2x8x8xf32>
    "tpu.trace_stop"() : () -> ()
    %91 = tpu.concatenate %39, %56, %73, %90 in 2 : vector<2x8x8xf32>, vector<2x8x8xf32>, vector<2x8x8xf32>, vector<2x8x8xf32> -> vector<2x8x32xf32>
    %92 = vector.shape_cast %91 : vector<2x8x32xf32> to vector<16x32xf32>
    %c0_29 = arith.constant 0 : index
    %c64 = arith.constant 64 : index
    %c0_30 = arith.constant 0 : index
    %93 = vector.load %arg3[%c0_29, %c64, %c0_30] : memref<1x224x128xf32, #tpu.memory_space<vmem>>, vector<1x32x32xf32>
    %94 = vector.shape_cast %93 : vector<1x32x32xf32> to vector<32x32xf32>
    %cst_31 = arith.constant dense<0.000000e+00> : vector<16x32xf32>
    %95 = tpu.matmul %92, %94, %cst_31 {dimension_numbers = #tpu.dot_dimension_numbers<[1], [0], [0], [1], [0, 0, 1, 1], [], []>} : vector<16x32xf32>, vector<32x32xf32>, vector<16x32xf32> -> vector<16x32xf32>
    %c0_32 = arith.constant 0 : index
    %c214 = arith.constant 214 : index
    %c0_33 = arith.constant 0 : index
    %96 = vector.load %arg3[%c0_32, %c214, %c0_33] : memref<1x224x128xf32, #tpu.memory_space<vmem>>, vector<1x1x32xf32>
    %97 = vector.shape_cast %96 : vector<1x1x32xf32> to vector<1x32xf32>
    %98 = vector.broadcast %97 : vector<1x32xf32> to vector<16x32xf32>
    %99 = arith.addf %95, %98 : vector<16x32xf32>
    %100 = arith.addf %3, %99 : vector<16x32xf32>
    %c0_34 = arith.constant 0 : index
    %c217 = arith.constant 217 : index
    %c0_35 = arith.constant 0 : index
    %101 = vector.load %arg3[%c0_34, %c217, %c0_35] : memref<1x224x128xf32, #tpu.memory_space<vmem>>, vector<1x1x32xf32>
    %102 = vector.shape_cast %101 : vector<1x1x32xf32> to vector<1x32xf32>
    %c0_36 = arith.constant 0 : index
    %c218 = arith.constant 218 : index
    %c0_37 = arith.constant 0 : index
    %103 = vector.load %arg3[%c0_36, %c218, %c0_37] : memref<1x224x128xf32, #tpu.memory_space<vmem>>, vector<1x1x32xf32>
    %104 = vector.shape_cast %103 : vector<1x1x32xf32> to vector<1x32xf32>
    %cst_38 = arith.constant dense<0.000000e+00> : vector<16xf32>
    %105 = vector.multi_reduction <add>, %100, %cst_38 [1] : vector<16x32xf32> to vector<16xf32>
    %106 = vector.shape_cast %105 : vector<16xf32> to vector<16x1xf32>
    %cst_39 = arith.constant 3.200000e+01 : f32
    %107 = vector.broadcast %cst_39 : f32 to vector<16x1xf32>
    %108 = arith.divf %106, %107 : vector<16x1xf32>
    %109 = vector.broadcast %108 : vector<16x1xf32> to vector<16x32xf32>
    %110 = arith.subf %100, %109 : vector<16x32xf32>
    %111 = arith.mulf %110, %110 : vector<16x32xf32>
    %cst_40 = arith.constant dense<0.000000e+00> : vector<16xf32>
    %112 = vector.multi_reduction <add>, %111, %cst_40 [1] : vector<16x32xf32> to vector<16xf32>
    %113 = vector.shape_cast %112 : vector<16xf32> to vector<16x1xf32>
    %cst_41 = arith.constant 3.200000e+01 : f32
    %114 = vector.broadcast %cst_41 : f32 to vector<16x1xf32>
    %115 = arith.divf %113, %114 : vector<16x1xf32>
    %116 = vector.broadcast %108 : vector<16x1xf32> to vector<16x32xf32>
    %117 = arith.subf %100, %116 : vector<16x32xf32>
    %cst_42 = arith.constant 9.99999974E-6 : f32
    %118 = vector.broadcast %cst_42 : f32 to vector<16x1xf32>
    %119 = arith.addf %115, %118 : vector<16x1xf32>
    %120 = math.rsqrt %119 : vector<16x1xf32>
    %121 = vector.broadcast %120 : vector<16x1xf32> to vector<16x32xf32>
    %122 = arith.mulf %117, %121 : vector<16x32xf32>
    %123 = vector.broadcast %102 : vector<1x32xf32> to vector<16x32xf32>
    %124 = arith.mulf %122, %123 : vector<16x32xf32>
    %125 = vector.broadcast %104 : vector<1x32xf32> to vector<16x32xf32>
    %126 = arith.addf %124, %125 : vector<16x32xf32>
    %c0_43 = arith.constant 0 : index
    %c96 = arith.constant 96 : index
    %c0_44 = arith.constant 0 : index
    %127 = vector.load %arg3[%c0_43, %c96, %c0_44] : memref<1x224x128xf32, #tpu.memory_space<vmem>>, vector<1x32x16xf32>
    %128 = vector.shape_cast %127 : vector<1x32x16xf32> to vector<32x16xf32>
    %cst_45 = arith.constant dense<0.000000e+00> : vector<32x16xf32>
    %129 = tpu.matmul %4, %128, %cst_45 {dimension_numbers = #tpu.dot_dimension_numbers<[1], [0], [0], [1], [0, 0, 1, 1], [], []>} : vector<32x32xf32>, vector<32x16xf32>, vector<32x16xf32> -> vector<32x16xf32>
    %cst_46 = arith.constant 0.000000e+00 : f32
    %130 = vector.broadcast %cst_46 : f32 to vector<32x16xf32>
    %131 = arith.maximumf %129, %130 : vector<32x16xf32>
    %c0_47 = arith.constant 0 : index
    %c128 = arith.constant 128 : index
    %c0_48 = arith.constant 0 : index
    %132 = vector.load %arg3[%c0_47, %c128, %c0_48] : memref<1x224x128xf32, #tpu.memory_space<vmem>>, vector<1x16x32xf32>
    %133 = vector.shape_cast %132 : vector<1x16x32xf32> to vector<16x32xf32>
    %cst_49 = arith.constant dense<0.000000e+00> : vector<32x32xf32>
    %134 = tpu.matmul %131, %133, %cst_49 {dimension_numbers = #tpu.dot_dimension_numbers<[1], [0], [0], [1], [0, 0, 1, 1], [], []>} : vector<32x16xf32>, vector<16x32xf32>, vector<32x32xf32> -> vector<32x32xf32>
    %135 = math.absf %134 : vector<32x32xf32>
    %cst_50 = arith.constant 0.000000e+00 : f32
    %136 = vector.broadcast %cst_50 : f32 to vector<32x32xf32>
    %137 = arith.subf %136, %135 : vector<32x32xf32>
    %138 = math.exp %137 : vector<32x32xf32>
    %cst_51 = arith.constant 0.000000e+00 : f32
    %139 = vector.broadcast %cst_51 : f32 to vector<32x32xf32>
    %140 = arith.cmpf oge, %134, %139 : vector<32x32xf32>
    %cst_52 = arith.constant 1.000000e+00 : f32
    %141 = vector.broadcast %cst_52 : f32 to vector<32x32xf32>
    %142 = arith.addf %141, %138 : vector<32x32xf32>
    %cst_53 = arith.constant 1.000000e+00 : f32
    %143 = vector.broadcast %cst_53 : f32 to vector<32x32xf32>
    %144 = arith.divf %143, %142 : vector<32x32xf32>
    %cst_54 = arith.constant 1.000000e+00 : f32
    %145 = vector.broadcast %cst_54 : f32 to vector<32x32xf32>
    %146 = arith.addf %145, %138 : vector<32x32xf32>
    %147 = arith.divf %138, %146 : vector<32x32xf32>
    %148 = arith.select %140, %144, %147 : vector<32x32xi1>, vector<32x32xf32>
    %149 = arith.mulf %4, %148 : vector<32x32xf32>
    %c0_55 = arith.constant 0 : index
    %c32 = arith.constant 32 : index
    %c0_56 = arith.constant 0 : index
    %150 = vector.load %arg3[%c0_55, %c32, %c0_56] : memref<1x224x128xf32, #tpu.memory_space<vmem>>, vector<1x32x32xf32>
    %151 = vector.shape_cast %150 : vector<1x32x32xf32> to vector<32x32xf32>
    %cst_57 = arith.constant dense<0.000000e+00> : vector<16x32xf32>
    %152 = tpu.matmul %126, %151, %cst_57 {dimension_numbers = #tpu.dot_dimension_numbers<[1], [0], [0], [1], [0, 0, 1, 1], [], []>} : vector<16x32xf32>, vector<32x32xf32>, vector<16x32xf32> -> vector<16x32xf32>
    %c0_58 = arith.constant 0 : index
    %c211 = arith.constant 211 : index
    %c0_59 = arith.constant 0 : index
    %153 = vector.load %arg3[%c0_58, %c211, %c0_59] : memref<1x224x128xf32, #tpu.memory_space<vmem>>, vector<1x1x32xf32>
    %154 = vector.shape_cast %153 : vector<1x1x32xf32> to vector<1x32xf32>
    %155 = vector.broadcast %154 : vector<1x32xf32> to vector<16x32xf32>
    %156 = arith.addf %152, %155 : vector<16x32xf32>
    %c0_60 = arith.constant 0 : index
    %c32_61 = arith.constant 32 : index
    %c32_62 = arith.constant 32 : index
    %157 = vector.load %arg3[%c0_60, %c32_61, %c32_62] : memref<1x224x128xf32, #tpu.memory_space<vmem>>, vector<1x32x64xf32>
    %158 = vector.shape_cast %157 : vector<1x32x64xf32> to vector<32x64xf32>
    %cst_63 = arith.constant dense<0.000000e+00> : vector<32x64xf32>
    %159 = tpu.matmul %149, %158, %cst_63 {dimension_numbers = #tpu.dot_dimension_numbers<[1], [0], [0], [1], [0, 0, 1, 1], [], []>} : vector<32x32xf32>, vector<32x64xf32>, vector<32x64xf32> -> vector<32x64xf32>
    %160 = vector.extract_strided_slice %159 {offsets = [0, 0], sizes = [32, 32], strides = [1, 1]} : vector<32x64xf32> to vector<32x32xf32>
    %c0_64 = arith.constant 0 : index
    %c212 = arith.constant 212 : index
    %c0_65 = arith.constant 0 : index
    %161 = vector.load %arg3[%c0_64, %c212, %c0_65] : memref<1x224x128xf32, #tpu.memory_space<vmem>>, vector<1x1x32xf32>
    %162 = vector.shape_cast %161 : vector<1x1x32xf32> to vector<1x32xf32>
    %163 = vector.broadcast %162 : vector<1x32xf32> to vector<32x32xf32>
    %164 = arith.addf %160, %163 : vector<32x32xf32>
    %165 = vector.extract_strided_slice %159 {offsets = [0, 32], sizes = [32, 32], strides = [1, 1]} : vector<32x64xf32> to vector<32x32xf32>
    %c0_66 = arith.constant 0 : index
    %c213 = arith.constant 213 : index
    %c0_67 = arith.constant 0 : index
    %166 = vector.load %arg3[%c0_66, %c213, %c0_67] : memref<1x224x128xf32, #tpu.memory_space<vmem>>, vector<1x1x32xf32>
    %167 = vector.shape_cast %166 : vector<1x1x32xf32> to vector<1x32xf32>
    %168 = vector.broadcast %167 : vector<1x32xf32> to vector<32x32xf32>
    %169 = arith.addf %165, %168 : vector<32x32xf32>
    %170 = vector.extract_strided_slice %156 {offsets = [0, 0], sizes = [16, 8], strides = [1, 1]} : vector<16x32xf32> to vector<16x8xf32>
    %171 = vector.shape_cast %170 : vector<16x8xf32> to vector<2x8x8xf32>
    %172 = vector.extract_strided_slice %164 {offsets = [0, 0], sizes = [32, 8], strides = [1, 1]} : vector<32x32xf32> to vector<32x8xf32>
    %173 = vector.shape_cast %172 : vector<32x8xf32> to vector<2x16x8xf32>
    %174 = vector.extract_strided_slice %169 {offsets = [0, 0], sizes = [32, 8], strides = [1, 1]} : vector<32x32xf32> to vector<32x8xf32>
    %175 = vector.shape_cast %174 : vector<32x8xf32> to vector<2x16x8xf32>
    "tpu.trace_start"() <{level = 10 : i32, message = "bqd,bkd->bqk"}> : () -> ()
    %cst_68 = arith.constant dense<0.000000e+00> : vector<2x8x16xf32>
    %176 = tpu.matmul %171, %173, %cst_68 {dimension_numbers = #tpu.dot_dimension_numbers<[2], [2], [1], [1], [0, 0, 0, 1, 1, 1], [0], [0]>} : vector<2x8x8xf32>, vector<2x16x8xf32>, vector<2x8x16xf32> -> vector<2x8x16xf32>
    "tpu.trace_stop"() : () -> ()
    %cst_69 = arith.constant dense<0xFF800000> : vector<2x8xf32>
    %177 = vector.multi_reduction <maximumf>, %176, %cst_69 [2] : vector<2x8x16xf32> to vector<2x8xf32>
    %178 = vector.shape_cast %177 : vector<2x8xf32> to vector<2x8x1xf32>
    %179 = vector.broadcast %178 : vector<2x8x1xf32> to vector<2x8x16xf32>
    %180 = arith.subf %176, %179 : vector<2x8x16xf32>
    %181 = math.exp %180 : vector<2x8x16xf32>
    %cst_70 = arith.constant dense<0.000000e+00> : vector<2x8xf32>
    %182 = vector.multi_reduction <add>, %181, %cst_70 [2] : vector<2x8x16xf32> to vector<2x8xf32>
    %183 = vector.shape_cast %182 : vector<2x8xf32> to vector<2x8x1xf32>
    %184 = vector.broadcast %183 : vector<2x8x1xf32> to vector<2x8x16xf32>
    %185 = arith.divf %181, %184 : vector<2x8x16xf32>
    "tpu.trace_start"() <{level = 10 : i32, message = "bqk,bkd->bqd"}> : () -> ()
    %cst_71 = arith.constant dense<0.000000e+00> : vector<2x8x8xf32>
    %186 = tpu.matmul %185, %175, %cst_71 {dimension_numbers = #tpu.dot_dimension_numbers<[2], [1], [1], [2], [0, 0, 0, 1, 1, 2], [0], [0]>} : vector<2x8x16xf32>, vector<2x16x8xf32>, vector<2x8x8xf32> -> vector<2x8x8xf32>
    "tpu.trace_stop"() : () -> ()
    %187 = vector.extract_strided_slice %156 {offsets = [0, 8], sizes = [16, 8], strides = [1, 1]} : vector<16x32xf32> to vector<16x8xf32>
    %188 = vector.shape_cast %187 : vector<16x8xf32> to vector<2x8x8xf32>
    %189 = vector.extract_strided_slice %164 {offsets = [0, 8], sizes = [32, 8], strides = [1, 1]} : vector<32x32xf32> to vector<32x8xf32>
    %190 = vector.shape_cast %189 : vector<32x8xf32> to vector<2x16x8xf32>
    %191 = vector.extract_strided_slice %169 {offsets = [0, 8], sizes = [32, 8], strides = [1, 1]} : vector<32x32xf32> to vector<32x8xf32>
    %192 = vector.shape_cast %191 : vector<32x8xf32> to vector<2x16x8xf32>
    "tpu.trace_start"() <{level = 10 : i32, message = "bqd,bkd->bqk"}> : () -> ()
    %cst_72 = arith.constant dense<0.000000e+00> : vector<2x8x16xf32>
    %193 = tpu.matmul %188, %190, %cst_72 {dimension_numbers = #tpu.dot_dimension_numbers<[2], [2], [1], [1], [0, 0, 0, 1, 1, 1], [0], [0]>} : vector<2x8x8xf32>, vector<2x16x8xf32>, vector<2x8x16xf32> -> vector<2x8x16xf32>
    "tpu.trace_stop"() : () -> ()
    %cst_73 = arith.constant dense<0xFF800000> : vector<2x8xf32>
    %194 = vector.multi_reduction <maximumf>, %193, %cst_73 [2] : vector<2x8x16xf32> to vector<2x8xf32>
    %195 = vector.shape_cast %194 : vector<2x8xf32> to vector<2x8x1xf32>
    %196 = vector.broadcast %195 : vector<2x8x1xf32> to vector<2x8x16xf32>
    %197 = arith.subf %193, %196 : vector<2x8x16xf32>
    %198 = math.exp %197 : vector<2x8x16xf32>
    %cst_74 = arith.constant dense<0.000000e+00> : vector<2x8xf32>
    %199 = vector.multi_reduction <add>, %198, %cst_74 [2] : vector<2x8x16xf32> to vector<2x8xf32>
    %200 = vector.shape_cast %199 : vector<2x8xf32> to vector<2x8x1xf32>
    %201 = vector.broadcast %200 : vector<2x8x1xf32> to vector<2x8x16xf32>
    %202 = arith.divf %198, %201 : vector<2x8x16xf32>
    "tpu.trace_start"() <{level = 10 : i32, message = "bqk,bkd->bqd"}> : () -> ()
    %cst_75 = arith.constant dense<0.000000e+00> : vector<2x8x8xf32>
    %203 = tpu.matmul %202, %192, %cst_75 {dimension_numbers = #tpu.dot_dimension_numbers<[2], [1], [1], [2], [0, 0, 0, 1, 1, 2], [0], [0]>} : vector<2x8x16xf32>, vector<2x16x8xf32>, vector<2x8x8xf32> -> vector<2x8x8xf32>
    "tpu.trace_stop"() : () -> ()
    %204 = vector.extract_strided_slice %156 {offsets = [0, 16], sizes = [16, 8], strides = [1, 1]} : vector<16x32xf32> to vector<16x8xf32>
    %205 = vector.shape_cast %204 : vector<16x8xf32> to vector<2x8x8xf32>
    %206 = vector.extract_strided_slice %164 {offsets = [0, 16], sizes = [32, 8], strides = [1, 1]} : vector<32x32xf32> to vector<32x8xf32>
    %207 = vector.shape_cast %206 : vector<32x8xf32> to vector<2x16x8xf32>
    %208 = vector.extract_strided_slice %169 {offsets = [0, 16], sizes = [32, 8], strides = [1, 1]} : vector<32x32xf32> to vector<32x8xf32>
    %209 = vector.shape_cast %208 : vector<32x8xf32> to vector<2x16x8xf32>
    "tpu.trace_start"() <{level = 10 : i32, message = "bqd,bkd->bqk"}> : () -> ()
    %cst_76 = arith.constant dense<0.000000e+00> : vector<2x8x16xf32>
    %210 = tpu.matmul %205, %207, %cst_76 {dimension_numbers = #tpu.dot_dimension_numbers<[2], [2], [1], [1], [0, 0, 0, 1, 1, 1], [0], [0]>} : vector<2x8x8xf32>, vector<2x16x8xf32>, vector<2x8x16xf32> -> vector<2x8x16xf32>
    "tpu.trace_stop"() : () -> ()
    %cst_77 = arith.constant dense<0xFF800000> : vector<2x8xf32>
    %211 = vector.multi_reduction <maximumf>, %210, %cst_77 [2] : vector<2x8x16xf32> to vector<2x8xf32>
    %212 = vector.shape_cast %211 : vector<2x8xf32> to vector<2x8x1xf32>
    %213 = vector.broadcast %212 : vector<2x8x1xf32> to vector<2x8x16xf32>
    %214 = arith.subf %210, %213 : vector<2x8x16xf32>
    %215 = math.exp %214 : vector<2x8x16xf32>
    %cst_78 = arith.constant dense<0.000000e+00> : vector<2x8xf32>
    %216 = vector.multi_reduction <add>, %215, %cst_78 [2] : vector<2x8x16xf32> to vector<2x8xf32>
    %217 = vector.shape_cast %216 : vector<2x8xf32> to vector<2x8x1xf32>
    %218 = vector.broadcast %217 : vector<2x8x1xf32> to vector<2x8x16xf32>
    %219 = arith.divf %215, %218 : vector<2x8x16xf32>
    "tpu.trace_start"() <{level = 10 : i32, message = "bqk,bkd->bqd"}> : () -> ()
    %cst_79 = arith.constant dense<0.000000e+00> : vector<2x8x8xf32>
    %220 = tpu.matmul %219, %209, %cst_79 {dimension_numbers = #tpu.dot_dimension_numbers<[2], [1], [1], [2], [0, 0, 0, 1, 1, 2], [0], [0]>} : vector<2x8x16xf32>, vector<2x16x8xf32>, vector<2x8x8xf32> -> vector<2x8x8xf32>
    "tpu.trace_stop"() : () -> ()
    %221 = vector.extract_strided_slice %156 {offsets = [0, 24], sizes = [16, 8], strides = [1, 1]} : vector<16x32xf32> to vector<16x8xf32>
    %222 = vector.shape_cast %221 : vector<16x8xf32> to vector<2x8x8xf32>
    %223 = vector.extract_strided_slice %164 {offsets = [0, 24], sizes = [32, 8], strides = [1, 1]} : vector<32x32xf32> to vector<32x8xf32>
    %224 = vector.shape_cast %223 : vector<32x8xf32> to vector<2x16x8xf32>
    %225 = vector.extract_strided_slice %169 {offsets = [0, 24], sizes = [32, 8], strides = [1, 1]} : vector<32x32xf32> to vector<32x8xf32>
    %226 = vector.shape_cast %225 : vector<32x8xf32> to vector<2x16x8xf32>
    "tpu.trace_start"() <{level = 10 : i32, message = "bqd,bkd->bqk"}> : () -> ()
    %cst_80 = arith.constant dense<0.000000e+00> : vector<2x8x16xf32>
    %227 = tpu.matmul %222, %224, %cst_80 {dimension_numbers = #tpu.dot_dimension_numbers<[2], [2], [1], [1], [0, 0, 0, 1, 1, 1], [0], [0]>} : vector<2x8x8xf32>, vector<2x16x8xf32>, vector<2x8x16xf32> -> vector<2x8x16xf32>
    "tpu.trace_stop"() : () -> ()
    %cst_81 = arith.constant dense<0xFF800000> : vector<2x8xf32>
    %228 = vector.multi_reduction <maximumf>, %227, %cst_81 [2] : vector<2x8x16xf32> to vector<2x8xf32>
    %229 = vector.shape_cast %228 : vector<2x8xf32> to vector<2x8x1xf32>
    %230 = vector.broadcast %229 : vector<2x8x1xf32> to vector<2x8x16xf32>
    %231 = arith.subf %227, %230 : vector<2x8x16xf32>
    %232 = math.exp %231 : vector<2x8x16xf32>
    %cst_82 = arith.constant dense<0.000000e+00> : vector<2x8xf32>
    %233 = vector.multi_reduction <add>, %232, %cst_82 [2] : vector<2x8x16xf32> to vector<2x8xf32>
    %234 = vector.shape_cast %233 : vector<2x8xf32> to vector<2x8x1xf32>
    %235 = vector.broadcast %234 : vector<2x8x1xf32> to vector<2x8x16xf32>
    %236 = arith.divf %232, %235 : vector<2x8x16xf32>
    "tpu.trace_start"() <{level = 10 : i32, message = "bqk,bkd->bqd"}> : () -> ()
    %cst_83 = arith.constant dense<0.000000e+00> : vector<2x8x8xf32>
    %237 = tpu.matmul %236, %226, %cst_83 {dimension_numbers = #tpu.dot_dimension_numbers<[2], [1], [1], [2], [0, 0, 0, 1, 1, 2], [0], [0]>} : vector<2x8x16xf32>, vector<2x16x8xf32>, vector<2x8x8xf32> -> vector<2x8x8xf32>
    "tpu.trace_stop"() : () -> ()
    %238 = tpu.concatenate %186, %203, %220, %237 in 2 : vector<2x8x8xf32>, vector<2x8x8xf32>, vector<2x8x8xf32>, vector<2x8x8xf32> -> vector<2x8x32xf32>
    %239 = vector.shape_cast %238 : vector<2x8x32xf32> to vector<16x32xf32>
    %c0_84 = arith.constant 0 : index
    %c64_85 = arith.constant 64 : index
    %c32_86 = arith.constant 32 : index
    %240 = vector.load %arg3[%c0_84, %c64_85, %c32_86] : memref<1x224x128xf32, #tpu.memory_space<vmem>>, vector<1x32x32xf32>
    %241 = vector.shape_cast %240 : vector<1x32x32xf32> to vector<32x32xf32>
    %cst_87 = arith.constant dense<0.000000e+00> : vector<16x32xf32>
    %242 = tpu.matmul %239, %241, %cst_87 {dimension_numbers = #tpu.dot_dimension_numbers<[1], [0], [0], [1], [0, 0, 1, 1], [], []>} : vector<16x32xf32>, vector<32x32xf32>, vector<16x32xf32> -> vector<16x32xf32>
    %c0_88 = arith.constant 0 : index
    %c215 = arith.constant 215 : index
    %c0_89 = arith.constant 0 : index
    %243 = vector.load %arg3[%c0_88, %c215, %c0_89] : memref<1x224x128xf32, #tpu.memory_space<vmem>>, vector<1x1x32xf32>
    %244 = vector.shape_cast %243 : vector<1x1x32xf32> to vector<1x32xf32>
    %245 = vector.broadcast %244 : vector<1x32xf32> to vector<16x32xf32>
    %246 = arith.addf %242, %245 : vector<16x32xf32>
    %247 = arith.addf %126, %246 : vector<16x32xf32>
    %c0_90 = arith.constant 0 : index
    %c219 = arith.constant 219 : index
    %c0_91 = arith.constant 0 : index
    %248 = vector.load %arg3[%c0_90, %c219, %c0_91] : memref<1x224x128xf32, #tpu.memory_space<vmem>>, vector<1x1x32xf32>
    %249 = vector.shape_cast %248 : vector<1x1x32xf32> to vector<1x32xf32>
    %c0_92 = arith.constant 0 : index
    %c220 = arith.constant 220 : index
    %c0_93 = arith.constant 0 : index
    %250 = vector.load %arg3[%c0_92, %c220, %c0_93] : memref<1x224x128xf32, #tpu.memory_space<vmem>>, vector<1x1x32xf32>
    %251 = vector.shape_cast %250 : vector<1x1x32xf32> to vector<1x32xf32>
    %cst_94 = arith.constant dense<0.000000e+00> : vector<16xf32>
    %252 = vector.multi_reduction <add>, %247, %cst_94 [1] : vector<16x32xf32> to vector<16xf32>
    %253 = vector.shape_cast %252 : vector<16xf32> to vector<16x1xf32>
    %cst_95 = arith.constant 3.200000e+01 : f32
    %254 = vector.broadcast %cst_95 : f32 to vector<16x1xf32>
    %255 = arith.divf %253, %254 : vector<16x1xf32>
    %256 = vector.broadcast %255 : vector<16x1xf32> to vector<16x32xf32>
    %257 = arith.subf %247, %256 : vector<16x32xf32>
    %258 = arith.mulf %257, %257 : vector<16x32xf32>
    %cst_96 = arith.constant dense<0.000000e+00> : vector<16xf32>
    %259 = vector.multi_reduction <add>, %258, %cst_96 [1] : vector<16x32xf32> to vector<16xf32>
    %260 = vector.shape_cast %259 : vector<16xf32> to vector<16x1xf32>
    %cst_97 = arith.constant 3.200000e+01 : f32
    %261 = vector.broadcast %cst_97 : f32 to vector<16x1xf32>
    %262 = arith.divf %260, %261 : vector<16x1xf32>
    %263 = vector.broadcast %255 : vector<16x1xf32> to vector<16x32xf32>
    %264 = arith.subf %247, %263 : vector<16x32xf32>
    %cst_98 = arith.constant 9.99999974E-6 : f32
    %265 = vector.broadcast %cst_98 : f32 to vector<16x1xf32>
    %266 = arith.addf %262, %265 : vector<16x1xf32>
    %267 = math.rsqrt %266 : vector<16x1xf32>
    %268 = vector.broadcast %267 : vector<16x1xf32> to vector<16x32xf32>
    %269 = arith.mulf %264, %268 : vector<16x32xf32>
    %270 = vector.broadcast %249 : vector<1x32xf32> to vector<16x32xf32>
    %271 = arith.mulf %269, %270 : vector<16x32xf32>
    %272 = vector.broadcast %251 : vector<1x32xf32> to vector<16x32xf32>
    %273 = arith.addf %271, %272 : vector<16x32xf32>
    %c0_99 = arith.constant 0 : index
    %c144 = arith.constant 144 : index
    %c0_100 = arith.constant 0 : index
    %274 = vector.load %arg3[%c0_99, %c144, %c0_100] : memref<1x224x128xf32, #tpu.memory_space<vmem>>, vector<1x32x128xf32>
    %275 = vector.shape_cast %274 : vector<1x32x128xf32> to vector<32x128xf32>
    %cst_101 = arith.constant dense<0.000000e+00> : vector<16x128xf32>
    %276 = tpu.matmul %273, %275, %cst_101 {dimension_numbers = #tpu.dot_dimension_numbers<[1], [0], [0], [1], [0, 0, 1, 1], [], []>} : vector<16x32xf32>, vector<32x128xf32>, vector<16x128xf32> -> vector<16x128xf32>
    %c0_102 = arith.constant 0 : index
    %c223 = arith.constant 223 : index
    %c0_103 = arith.constant 0 : index
    %277 = vector.load %arg3[%c0_102, %c223, %c0_103] : memref<1x224x128xf32, #tpu.memory_space<vmem>>, vector<1x1x128xf32>
    %278 = vector.shape_cast %277 : vector<1x1x128xf32> to vector<1x128xf32>
    %279 = vector.broadcast %278 : vector<1x128xf32> to vector<16x128xf32>
    %280 = arith.addf %276, %279 : vector<16x128xf32>
    %cst_104 = arith.constant 0.000000e+00 : f32
    %281 = vector.broadcast %cst_104 : f32 to vector<16x128xf32>
    %282 = arith.maximumf %280, %281 : vector<16x128xf32>
    %c0_105 = arith.constant 0 : index
    %c176 = arith.constant 176 : index
    %c0_106 = arith.constant 0 : index
    %283 = vector.load %arg3[%c0_105, %c176, %c0_106] : memref<1x224x128xf32, #tpu.memory_space<vmem>>, vector<1x32x128xf32>
    %284 = vector.shape_cast %283 : vector<1x32x128xf32> to vector<32x128xf32>
    %cst_107 = arith.constant dense<0.000000e+00> : vector<16x32xf32>
    %285 = tpu.matmul %282, %284, %cst_107 {dimension_numbers = #tpu.dot_dimension_numbers<[1], [1], [0], [0], [0, 0, 1, 0], [], []>} : vector<16x128xf32>, vector<32x128xf32>, vector<16x32xf32> -> vector<16x32xf32>
    %c0_108 = arith.constant 0 : index
    %c216 = arith.constant 216 : index
    %c0_109 = arith.constant 0 : index
    %286 = vector.load %arg3[%c0_108, %c216, %c0_109] : memref<1x224x128xf32, #tpu.memory_space<vmem>>, vector<1x1x32xf32>
    %287 = vector.shape_cast %286 : vector<1x1x32xf32> to vector<1x32xf32>
    %288 = vector.broadcast %287 : vector<1x32xf32> to vector<16x32xf32>
    %289 = arith.addf %285, %288 : vector<16x32xf32>
    %290 = arith.addf %273, %289 : vector<16x32xf32>
    %c0_110 = arith.constant 0 : index
    %c221 = arith.constant 221 : index
    %c0_111 = arith.constant 0 : index
    %291 = vector.load %arg3[%c0_110, %c221, %c0_111] : memref<1x224x128xf32, #tpu.memory_space<vmem>>, vector<1x1x32xf32>
    %292 = vector.shape_cast %291 : vector<1x1x32xf32> to vector<1x32xf32>
    %c0_112 = arith.constant 0 : index
    %c222 = arith.constant 222 : index
    %c0_113 = arith.constant 0 : index
    %293 = vector.load %arg3[%c0_112, %c222, %c0_113] : memref<1x224x128xf32, #tpu.memory_space<vmem>>, vector<1x1x32xf32>
    %294 = vector.shape_cast %293 : vector<1x1x32xf32> to vector<1x32xf32>
    %cst_114 = arith.constant dense<0.000000e+00> : vector<16xf32>
    %295 = vector.multi_reduction <add>, %290, %cst_114 [1] : vector<16x32xf32> to vector<16xf32>
    %296 = vector.shape_cast %295 : vector<16xf32> to vector<16x1xf32>
    %cst_115 = arith.constant 3.200000e+01 : f32
    %297 = vector.broadcast %cst_115 : f32 to vector<16x1xf32>
    %298 = arith.divf %296, %297 : vector<16x1xf32>
    %299 = vector.broadcast %298 : vector<16x1xf32> to vector<16x32xf32>
    %300 = arith.subf %290, %299 : vector<16x32xf32>
    %301 = arith.mulf %300, %300 : vector<16x32xf32>
    %cst_116 = arith.constant dense<0.000000e+00> : vector<16xf32>
    %302 = vector.multi_reduction <add>, %301, %cst_116 [1] : vector<16x32xf32> to vector<16xf32>
    %303 = vector.shape_cast %302 : vector<16xf32> to vector<16x1xf32>
    %cst_117 = arith.constant 3.200000e+01 : f32
    %304 = vector.broadcast %cst_117 : f32 to vector<16x1xf32>
    %305 = arith.divf %303, %304 : vector<16x1xf32>
    %306 = vector.broadcast %298 : vector<16x1xf32> to vector<16x32xf32>
    %307 = arith.subf %290, %306 : vector<16x32xf32>
    %cst_118 = arith.constant 9.99999974E-6 : f32
    %308 = vector.broadcast %cst_118 : f32 to vector<16x1xf32>
    %309 = arith.addf %305, %308 : vector<16x1xf32>
    %310 = math.rsqrt %309 : vector<16x1xf32>
    %311 = vector.broadcast %310 : vector<16x1xf32> to vector<16x32xf32>
    %312 = arith.mulf %307, %311 : vector<16x32xf32>
    %313 = vector.broadcast %292 : vector<1x32xf32> to vector<16x32xf32>
    %314 = arith.mulf %312, %313 : vector<16x32xf32>
    %315 = vector.broadcast %294 : vector<1x32xf32> to vector<16x32xf32>
    %316 = arith.addf %314, %315 : vector<16x32xf32>
    %c0_119 = arith.constant 0 : index
    %c0_120 = arith.constant 0 : index
    %317 = vector.load %arg5[%c0_119, %c0_120] : memref<16x32xf32, #tpu.memory_space<vmem>>, vector<16x32xf32>
    tpu.vector_store %arg5[%c0_119, %c0_120], %316 {strides = array<i32>} : memref<16x32xf32, #tpu.memory_space<vmem>>, vector<16x32xf32>,
    %c1_i32 = arith.constant 1 : i32
    %318 = arith.cmpi eq, %arg0, %c1_i32 : i32
    %319 = arith.extui %318 : i1 to i32
    %c0_i32_121 = arith.constant 0 : i32
    %320 = arith.cmpi ne, %319, %c0_i32_121 : i32
    scf.if %320 {
      %c0_122 = arith.constant 0 : index
      %c0_123 = arith.constant 0 : index
      %321 = vector.load %arg4[%c0_122, %c0_123] : memref<16x32xf32, #tpu.memory_space<vmem>>, vector<16x32xf32>
      tpu.vector_store %arg4[%c0_122, %c0_123], %316 {strides = array<i32>} : memref<16x32xf32, #tpu.memory_space<vmem>>, vector<16x32xf32>,
    } else {
    }
    return
  }
  func.func @transform_0(%arg0: i32) -> (i32, i32) {
    %c0_i32 = arith.constant 0 : i32
    %c0_i32_0 = arith.constant 0 : i32
    %c0_i32_1 = arith.constant 0 : i32
    return %c0_i32, %c0_i32_0 : i32, i32
  }
  func.func @transform_1(%arg0: i32) -> (i32, i32) {
    %c0_i32 = arith.constant 0 : i32
    %c0_i32_0 = arith.constant 0 : i32
    %c0_i32_1 = arith.constant 0 : i32
    return %c0_i32, %c0_i32_0 : i32, i32
  }
  func.func @transform_2(%arg0: i32) -> (i32, i32, i32) {
    %c0_i32 = arith.constant 0 : i32
    %c0_i32_0 = arith.constant 0 : i32
    %c0_i32_1 = arith.constant 0 : i32
    return %arg0, %c0_i32, %c0_i32_0 : i32, i32, i32
  }
  func.func @transform_3(%arg0: i32) -> (i32, i32) {
    %c0_i32 = arith.constant 0 : i32
    %c0_i32_0 = arith.constant 0 : i32
    %c0_i32_1 = arith.constant 0 : i32
    return %c0_i32, %c0_i32_0 : i32, i32
  }
}

</mosaic_0001>

<llo_original>
// kernel: encoder_forward.1
$region0: #{encoder_forward.1}
  #allocation0 [shape = 'u32[]', space=smem, size = 0x4, offset = 0x4, fixed_abs, tag = 'smem constant byte address 0x4 - core index']
  #allocation1 [shape = 'u32[144,128]{1,0:T(1,128)}', space=vmem, size = 0x12000, scoped, tag = 'internal scratch']
  #allocation2 [shape = 'f32[16,32]{1,0:T(8,128)}', space=vmem, size = 0x2000, scoped, tag = 'scratch operand']
  %s0 = inlined_call_operand.hbm [shape: f32[16,32], index: 0, kind: input, shape index: {}]
  %s1 = inlined_call_operand.hbm [shape: f32[32,32], index: 1, kind: input, shape index: {}]
  %s2 = inlined_call_operand.hbm [shape: f32[2,224,128], index: 2, kind: input, shape index: {}]
  %s3 = inlined_call_operand.hbm [shape: f32[16,32], index: 3, kind: output, shape index: {}]
  %s4 = sld [smem:[#allocation0]]
  $region65: #{encoder_forward.1} parent=0
    _
  %s6 = ssub.s32 1, %s4
  %s7 = scalar_select 0, %s6, %s4
  $region1: #{encoder_forward.1} parent=0
    #allocation3 [shape = 'u8[8192]{0}', space=vmem, size = 0x2000, scoped, tag = 'input window, operand 0, single buffered']
    #allocation4 [shape = 's32[2]{0}', space=sflag, size = 0x8, scoped, tag = 'scoped memory for encoder_forward.1']
    #allocation5 [shape = 's32[2]{0}', space=sflag, size = 0x8, scoped, tag = 'scoped memory for encoder_forward.1']
    #allocation6 [shape = 'u8[16384]{0}', space=vmem, size = 0x4000, scoped, tag = 'input window, operand 1, single buffered']
    #allocation7 [shape = 's32[1]{0}', space=sflag, size = 0x4, scoped, tag = 'scoped memory for encoder_forward.1']
    #allocation8 [shape = 'u8[229376]{0}', space=vmem, size = 0x38000, scoped, tag = 'input window, operand 2']
    #allocation9 [shape = 'u8[8192]{0}', space=vmem, size = 0x2000, scoped, tag = 'output window, operand 0, single buffered']
    %8 = vsyncpa [#allocation4], 0
    %9 = vsyncpa [#allocation7], 0
    %10 = vsyncpa [#allocation5], 0
    loop: start=0, step=1, limit=4
    $region2: #{encoder_forward.1} parent=1 // loop_pre_header
      _
    $region3: #{encoder_forward.1} parent=1 // loop_header
      %s12 = sphi 0, %s16
      %p13 = scmp.ge.s32.totalorder %s12, 4
      %s20 = sphi 0, %s20
      %s22 = sphi 0, %s20
      %s23 = sphi 0, %s22
      %s37 = sphi 0, %s23
      %s41 = sphi 0, %s41
      %s43 = sphi 0, %s41
      %s44 = sphi 0, %s43
      %s58 = sphi 0, %s44
      %s64 = sphi 0, %s66
      %s67 = sphi 0, %s64
      %s68 = sphi 0, %s67
      %s84 = sphi 0, %s68
      %s88 = sphi 0, %s88
      %s90 = sphi 0, %s88
      %s91 = sphi 0, %s90
      %s105 = sphi 0, %s91
    $region4: #{encoder_forward.1} parent=1 // loop_header_branch
      %15 = sbr.rel (%p13) target = $region8
    $region5: #{encoder_forward.1} parent=1 // loop_body
      %s17 = ssub.s32 %s12, 1
      %s18 = ssub.s32 %s12, 2
      %s19 = sadd.s32 %s12, 1
      %s21 = sadd.s32 %s20, 1
      %p24 = scmp.eq.s32.totalorder %s12, 1
      %p25 = scmp.ne.s32.totalorder %s20, %s22
      %p26 = scmp.eq.s32.totalorder %s12, 0
      %p27 = por %p25, %p26
      %p28 = scmp.ne.s32.totalorder %s20, %s22
      %p29 = scmp.eq.s32.totalorder %s17, 1
      %p30 = por %p28, %p29
      %p31 = scmp.ne.s32.totalorder %s22, %s23
      %p32 = scmp.eq.s32.totalorder %s17, 0
      %p33 = por %p31, %p32
      %p34 = scmp.ne.s32.totalorder %s22, %s23
      %p35 = scmp.eq.s32.totalorder %s18, 1
      %p36 = por %p34, %p35
      %p38 = scmp.ne.s32.totalorder %s23, %s37
      %p39 = scmp.eq.s32.totalorder %s18, 0
      %p40 = por %p38, %p39
      %s42 = sadd.s32 %s41, 1
      %p45 = scmp.eq.s32.totalorder %s12, 1
      %p46 = scmp.ne.s32.totalorder %s41, %s43
      %p47 = scmp.eq.s32.totalorder %s12, 0
      %p48 = por %p46, %p47
      %p49 = scmp.ne.s32.totalorder %s41, %s43
      %p50 = scmp.eq.s32.totalorder %s17, 1
      %p51 = por %p49, %p50
      %p52 = scmp.ne.s32.totalorder %s43, %s44
      %p53 = scmp.eq.s32.totalorder %s17, 0
      %p54 = por %p52, %p53
      %p55 = scmp.ne.s32.totalorder %s43, %s44
      %p56 = scmp.eq.s32.totalorder %s18, 1
      %p57 = por %p55, %p56
      %p59 = scmp.ne.s32.totalorder %s44, %s58
      %p60 = scmp.eq.s32.totalorder %s18, 0
      %p61 = por %p59, %p60
      %s62 = ssub.s32 %s12, %s19
      %p63 = scmp.eq.s32.totalorder %s62, 0
      %s65 = sadd.s32 %s64, 1
      %s66 = scalar_select %p63, %s64, %s65
      %p69 = pneg %p63
      %p70 = scmp.eq.s32.totalorder %s12, 1
      %p71 = por %p69, %p70
      %p72 = scmp.ne.s32.totalorder %s64, %s67
      %p73 = scmp.eq.s32.totalorder %s12, 0
      %p74 = por %p72, %p73
      %p75 = scmp.ne.s32.totalorder %s64, %s67
      %p76 = scmp.eq.s32.totalorder %s17, 1
      %p77 = por %p75, %p76
      %p78 = scmp.ne.s32.totalorder %s67, %s68
      %p79 = scmp.eq.s32.totalorder %s17, 0
      %p80 = por %p78, %p79
      %p81 = scmp.ne.s32.totalorder %s67, %s68
      %p82 = scmp.eq.s32.totalorder %s18, 1
      %p83 = por %p81, %p82
      %p85 = scmp.ne.s32.totalorder %s68, %s84
      %p86 = scmp.eq.s32.totalorder %s18, 0
      %p87 = por %p85, %p86
      %s89 = sadd.s32 %s88, 1
      %p92 = scmp.eq.s32.totalorder %s12, 1
      %p93 = scmp.ne.s32.totalorder %s88, %s90
      %p94 = scmp.eq.s32.totalorder %s12, 0
      %p95 = por %p93, %p94
      %p96 = scmp.ne.s32.totalorder %s88, %s90
      %p97 = scmp.eq.s32.totalorder %s17, 1
      %p98 = por %p96, %p97
      %p99 = scmp.ne.s32.totalorder %s90, %s91
      %p100 = scmp.eq.s32.totalorder %s17, 0
      %p101 = por %p99, %p100
      %p102 = scmp.ne.s32.totalorder %s90, %s91
      %p103 = scmp.eq.s32.totalorder %s18, 1
      %p104 = por %p102, %p103
      %p106 = scmp.ne.s32.totalorder %s91, %s105
      %p107 = scmp.eq.s32.totalorder %s18, 0
      %p108 = por %p106, %p107
      %p109 = scmp.le.s32.totalorder 1, %s12
      %p110 = scmp.lt.s32.totalorder %s12, 3
      %p111 = pnand %p109, %p110
      %p112 = pneg %p111
      // Predicated region
      $region9: #{encoder_forward.1} parent=5 // pred_check
        _
      $region10: #{encoder_forward.1} parent=5 // pred_check_branch
        %114 = sbr.rel (%p111) target = $region12
      $region11: #{encoder_forward.1} parent=5 // pred_region
        %s115 = ssub.s32 %s12, 1
        // Predicated region
        $region13: #{encoder_forward.1} parent=11 // pred_check
          %p116 = pneg %p33
        $region14: #{encoder_forward.1} parent=11 // pred_check_branch
          %118 = sbr.rel (%p116) target = $region16
        $region15: #{encoder_forward.1} parent=11 // pred_region
          %s120 = ssub.s32 256, 256
          %121 = vsyncadd [#allocation4], %s120
          %s122 = sshll.u32 [#allocation3], 4
          %s123 = int_to_ptr.vmem [resolvable:$true] %s122
          %128 = dma.hbm_to_vmem [thread:$0]  %s0, 256, %s123, [#allocation4], 128, 128, 8
        $region16: #{encoder_forward.1} parent=11 // pred_fallthru
          _
        // Predicated region
        $region17: #{encoder_forward.1} parent=11 // pred_check
          %p129 = pneg %p54
        $region18: #{encoder_forward.1} parent=11 // pred_check_branch
          %131 = sbr.rel (%p129) target = $region20
        $region19: #{encoder_forward.1} parent=11 // pred_region
          %s133 = ssub.s32 512, 512
          %134 = vsyncadd [#allocation7], %s133
          %s135 = sshll.u32 [#allocation6], 4
          %s136 = int_to_ptr.vmem [resolvable:$true] %s135
          %141 = dma.hbm_to_vmem [thread:$0]  %s1, 512, %s136, [#allocation7], 128, 128, 8
        $region20: #{encoder_forward.1} parent=11 // pred_fallthru
          _
      $region12: #{encoder_forward.1} parent=5 // pred_fallthru
        _
      %p142 = scmp.lt.s32.totalorder %s12, 2
      // Predicated region
      $region21: #{encoder_forward.1} parent=5 // pred_check
        %p143 = pneg %p142
      $region22: #{encoder_forward.1} parent=5 // pred_check_branch
        %145 = sbr.rel (%p143) target = $region24
      $region23: #{encoder_forward.1} parent=5 // pred_region
        // Predicated region
        $region25: #{encoder_forward.1} parent=23 // pred_check
          %p146 = pneg %p74
        $region26: #{encoder_forward.1} parent=23 // pred_check_branch
          %148 = sbr.rel (%p146) target = $region28
        $region27: #{encoder_forward.1} parent=23 // pred_region
          %s149 = sand.u32 %s12, 1
          %s150 = scalar_lea.sflag [#allocation4], %s149
          %s151 = sand.u32 %s64, 1
          %s152 = smul.addr %s151, 224
          %s153 = scalar_lea.vmem [#allocation8], %s152
          %s155 = ssub.s32 3584, 3584
          %156 = vsyncadd %s150, %s155
          %s157 = smul.addr %s12, 28
          %s158 = smul.addr %s157, 128
          %s159 = scalar_lea.hbm %s2, %s158
          %s160 = sshll.u32 %s153, 4
          %s161 = int_to_ptr.vmem [resolvable:$true] %s160
          %166 = dma.hbm_to_vmem [thread:$0]  %s159, 3584, %s161, %s150, 128, 128, 8
        $region28: #{encoder_forward.1} parent=23 // pred_fallthru
          _
      $region24: #{encoder_forward.1} parent=5 // pred_fallthru
        _
      %p167 = scmp.le.s32.totalorder 1, %s12
      %p168 = scmp.lt.s32.totalorder %s12, 3
      %p169 = pnand %p167, %p168
      %p170 = pneg %p169
      // Predicated region
      $region29: #{encoder_forward.1} parent=5 // pred_check
        _
      $region30: #{encoder_forward.1} parent=5 // pred_check_branch
        %172 = sbr.rel (%p169) target = $region32
      $region31: #{encoder_forward.1} parent=5 // pred_region
        %s173 = ssub.s32 %s12, 1
        // Predicated region
        $region33: #{encoder_forward.1} parent=31 // pred_check
          %p174 = pneg %p33
        $region34: #{encoder_forward.1} parent=31 // pred_check_branch
          %176 = sbr.rel (%p174) target = $region36
        $region35: #{encoder_forward.1} parent=31 // pred_region
          %177 = dma.done [#allocation4], 256
        $region36: #{encoder_forward.1} parent=31 // pred_fallthru
          _
        // Predicated region
        $region37: #{encoder_forward.1} parent=31 // pred_check
          %p178 = pneg %p54
        $region38: #{encoder_forward.1} parent=31 // pred_check_branch
          %180 = sbr.rel (%p178) target = $region40
        $region39: #{encoder_forward.1} parent=31 // pred_region
          %181 = dma.done [#allocation7], 512
        $region40: #{encoder_forward.1} parent=31 // pred_fallthru
          _
        %s182 = sand.u32 %s17, 1
        %s183 = scalar_lea.sflag [#allocation4], %s182
        %s184 = sand.u32 %s67, 1
        %s185 = smul.addr %s184, 224
        %s186 = scalar_lea.vmem [#allocation8], %s185
        // Predicated region
        $region41: #{encoder_forward.1} parent=31 // pred_check
          %p187 = pneg %p80
        $region42: #{encoder_forward.1} parent=31 // pred_check_branch
          %189 = sbr.rel (%p187) target = $region44
        $region43: #{encoder_forward.1} parent=31 // pred_region
          %190 = dma.done %s183, 3584
        $region44: #{encoder_forward.1} parent=31 // pred_fallthru
          _
        %p191 = pneg %p33
        %p192 = pneg %p30
        %p193 = pneg %p54
        %p194 = pneg %p51
        %s195 = sand.u32 %s17, 1
        %s196 = scalar_lea.sflag [#allocation4], %s195
        %s197 = sand.u32 %s67, 1
        %s198 = smul.addr %s197, 224
        %s199 = scalar_lea.vmem [#allocation8], %s198
        %p200 = pneg %p80
        %p201 = pneg %p77
        %p202 = pneg %p101
        %p203 = pneg %p98
        %p204 = scmp.eq.s32.totalorder %s17, 0
        // Predicated region
        $region45: #{encoder_forward.1} parent=31 // pred_check
          %p205 = pneg %p204
        $region46: #{encoder_forward.1} parent=31 // pred_check_branch
          %207 = sbr.rel (%p205) target = $region48
        $region47: #{encoder_forward.1} parent=31 // pred_region
          %v208 = vld [vmem:[#allocation3] sm:$0xff]
          %v209 = vld [vmem:[#allocation3 + $0x8] sm:$0xff]
          %vm210 = vcmask 261120
          %211 = vst.msk [vmem:[#allocation2] sm:$0xff] %vm210, %v208
          %212 = vst.msk [vmem:[#allocation2 + $0x8] sm:$0xff] %vm210, %v209
        $region48: #{encoder_forward.1} parent=31 // pred_fallthru
          _
        %v213 = vld [vmem:[#allocation2] sm:$0xff]
        %v214 = vld [vmem:[#allocation2 + $0x8] sm:$0xff]
        %v215 = vld [vmem:[#allocation6] sm:$0xff]
        %v216 = vld [vmem:[#allocation6 + $0x8] sm:$0xff]
        %v217 = vld [vmem:[#allocation6 + $0x10] sm:$0xff]
        %v218 = vld [vmem:[#allocation6 + $0x18] sm:$0xff]
        %v219 = vld [vmem:[%s186] sm:$0xff]
        %v220 = vld [vmem:[%s186 + $0x8] sm:$0xff]
        %v221 = vld [vmem:[%s186 + $0x10] sm:$0xff]
        %v222 = vld [vmem:[%s186 + $0x18] sm:$0xff]
        %vm223 = vcmask 261120
        %v225 = vsel %vm223, %v213, 0
        %v228 = vsel %vm223, %v214, 0
        %230 = vmatprep.subr.mxu0 0.0
        %231 = vmatpush1.msra.mxu0 %v219
        %232 = vmatprep.subr.mxu0 0.0
        %233 = vmatpush1.msra.mxu0 %v220
        %234 = vmatprep.subr.mxu0 0.0
        %235 = vmatpush1.msra.mxu0 %v221
        %236 = vmatprep.subr.mxu0 0.0
        %237 = vmatpush1.msra.mxu0 %v222
        %238 = vmatprep.subr.mxu0 0.0
        %239 = vmatpush1.msra.mxu0 0.0
        %240 = vmatprep.subr.mxu0 0.0
        %241 = vmatpush1.msra.mxu0 0.0
        %242 = vmatprep.subr.mxu0 0.0
        %243 = vmatpush1.msra.mxu0 0.0
        %244 = vmatprep.subr.mxu0 0.0
        %245 = vmatpush1.msra.mxu0 0.0
        %246 = vmatprep.subr.mxu0 0.0
        %247 = vmatpush1.msra.mxu0 0.0
        %248 = vmatprep.subr.mxu0 0.0
        %249 = vmatpush1.msra.mxu0 0.0
        %250 = vmatprep.subr.mxu0 0.0
        %251 = vmatpush1.msra.mxu0 0.0
        %252 = vmatprep.subr.mxu0 0.0
        %253 = vmatpush1.msra.mxu0 0.0
        %254 = vmatprep.subr.mxu0 0.0
        %255 = vmatpush1.msra.mxu0 0.0
        %256 = vmatprep.subr.mxu0 0.0
        %257 = vmatpush1.msra.mxu0 0.0
        %258 = vmatprep.subr.mxu0 0.0
        %259 = vmatpush1.msra.mxu0 0.0
        %260 = vmatprep.subr.mxu0 0.0
        %261 = vmatpush1.msra.mxu0 0.0
        %262 = vmatprep.subr.mxu0 0.0
        %263 = vmatpush1.msra.mxu0 0.0
        %264 = vmatprep.subr.mxu0 0.0
        %265 = vmatpush1.msra.mxu0 0.0
        %266 = vmatprep.subr.mxu0 0.0
        %267 = vmatpush1.msra.mxu0 0.0
        %268 = vmatprep.subr.mxu0 0.0
        %269 = vmatpush1.msra.mxu0 0.0
        %270 = vmatprep.subr.mxu0 0.0
        %271 = vmatpush1.msra.mxu0 0.0
        %272 = vmatprep.subr.mxu0 0.0
        %273 = vmatpush1.msra.mxu0 0.0
        %274 = vmatprep.subr.mxu0 0.0
        %275 = vmatpush1.msra.mxu0 0.0
        %276 = vmatprep.subr.mxu0 0.0
        %277 = vmatpush1.msra.mxu0 0.0
        %278 = vmatprep.subr.mxu0 0.0
        %279 = vmatpush1.msra.mxu0 0.0
        %280 = vmatprep.subr.mxu0 0.0
        %281 = vmatpush1.msra.mxu0 0.0
        %282 = vmatprep.subr.mxu0 0.0
        %283 = vmatpush1.msra.mxu0 0.0
        %284 = vmatprep.subr.mxu0 0.0
        %285 = vmatpush1.msra.mxu0 0.0
        %286 = vmatprep.subr.mxu0 0.0
        %287 = vmatpush1.msra.mxu0 0.0
        %288 = vmatprep.subr.mxu0 0.0
        %289 = vmatpush1.msra.mxu0 0.0
        %290 = vmatprep.subr.mxu0 0.0
        %291 = vmatpush1.msra.mxu0 0.0
        %292 = vmatprep.subr.mxu0 0.0
        %293 = vmatpush1.msra.mxu0 0.0
        %294 = vmatprep.mubr.f32.mxu0 0.0
        %295 = vmatmul.mubr.f32.gmra.mrb[0].mxu0 %v225
        %v296 = vpop.f32.mrb[0].mxu0
        %v297 = vadd.f32 0.0, %v296
        %v298 = vpop.f32.mrb[0].mxu0
        %299 = vmatprep.mubr.f32.mxu0 0.0
        %300 = vmatmul.mubr.f32.gmra.mrb[0].mxu0 %v228
        %v301 = vpop.f32.mrb[0].mxu0
        %v302 = vadd.f32 0.0, %v301
        %v303 = vpop.f32.mrb[0].mxu0
        %304 = vdwg.mxu0
        %v305 = vld [vmem:[%s186 + $0xd0] sm:$0x1]
        %v306 = vlaneseq
        %v307 = vshrl.u32 %v306, 7
        %v308 = vsub.s32 0, %v307
        %v309 = vrot.slane %v305, %v308
        %v310 = vadd.f32 %v297, %v309
        %v311 = vadd.f32 %v302, %v309
        %v312 = vld [vmem:[%s186 + $0xd1] sm:$0x1]
        %v313 = vlaneseq
        %v314 = vshrl.u32 %v313, 7
        %v315 = vsub.s32 0, %v314
        %v316 = vrot.slane %v312, %v315
        %318 = vrot.lane.b32.xlu0 %v316, 32
        %v319 = vpop.permute.xlu0 %318
        %v321 = vadd.f32 %v297, %v319
        %v322 = vadd.f32 %v302, %v319
        %v323 = vld [vmem:[%s186 + $0xd2] sm:$0x1]
        %v324 = vlaneseq
        %v325 = vshrl.u32 %v324, 7
        %v326 = vsub.s32 0, %v325
        %v327 = vrot.slane %v323, %v326
        %329 = vrot.lane.b32.xlu0 %v327, 64
        %v330 = vpop.permute.xlu0 %329
        %v332 = vadd.f32 %v297, %v330
        %v333 = vadd.f32 %v302, %v330
        %335 = vrot.lane.b32.xlu0 %v321, 96
        %v336 = vpop.permute.xlu0 %335
        %vm337 = vcmask 64512
        %v339 = vsel %vm337, %v310, 0
        %v341 = vsel %vm337, %v336, 0
        %343 = vmatprep.subr.mxu0 0.0
        %344 = vmatpush1.xpose.msra.mxu0 %v341
        %345 = vmatprep.subr.mxu0 0.0
        %346 = vmatpush1.xpose.msra.mxu0 0.0
        %347 = vmatprep.subr.mxu0 0.0
        %348 = vmatpush1.xpose.msra.mxu0 0.0
        %349 = vmatprep.subr.mxu0 0.0
        %350 = vmatpush1.xpose.msra.mxu0 0.0
        %351 = vmatprep.subr.mxu0 0.0
        %352 = vmatpush1.xpose.msra.mxu0 0.0
        %353 = vmatprep.subr.mxu0 0.0
        %354 = vmatpush1.xpose.msra.mxu0 0.0
        %355 = vmatprep.subr.mxu0 0.0
        %356 = vmatpush1.xpose.msra.mxu0 0.0
        %357 = vmatprep.subr.mxu0 0.0
        %358 = vmatpush1.xpose.msra.mxu0 0.0
        %359 = vmatprep.subr.mxu0 0.0
        %360 = vmatpush1.xpose.msra.mxu0 0.0
        %361 = vmatprep.subr.mxu0 0.0
        %362 = vmatpush1.xpose.msra.mxu0 0.0
        %363 = vmatprep.subr.mxu0 0.0
        %364 = vmatpush1.xpose.msra.mxu0 0.0
        %365 = vmatprep.subr.mxu0 0.0
        %366 = vmatpush1.xpose.msra.mxu0 0.0
        %367 = vmatprep.subr.mxu0 0.0
        %368 = vmatpush1.xpose.msra.mxu0 0.0
        %369 = vmatprep.subr.mxu0 0.0
        %370 = vmatpush1.xpose.msra.mxu0 0.0
        %371 = vmatprep.subr.mxu0 0.0
        %372 = vmatpush1.xpose.msra.mxu0 0.0
        %373 = vmatprep.subr.mxu0 0.0
        %374 = vmatpush1.xpose.msra.mxu0 0.0
        %375 = vmatprep.subr.mxu0 0.0
        %376 = vmatpush1.xpose.msra.mxu0 0.0
        %377 = vmatprep.subr.mxu0 0.0
        %378 = vmatpush1.xpose.msra.mxu0 0.0
        %379 = vmatprep.subr.mxu0 0.0
        %380 = vmatpush1.xpose.msra.mxu0 0.0
        %381 = vmatprep.subr.mxu0 0.0
        %382 = vmatpush1.xpose.msra.mxu0 0.0
        %383 = vmatprep.subr.mxu0 0.0
        %384 = vmatpush1.xpose.msra.mxu0 0.0
        %385 = vmatprep.subr.mxu0 0.0
        %386 = vmatpush1.xpose.msra.mxu0 0.0
        %387 = vmatprep.subr.mxu0 0.0
        %388 = vmatpush1.xpose.msra.mxu0 0.0
        %389 = vmatprep.subr.mxu0 0.0
        %390 = vmatpush1.xpose.msra.mxu0 0.0
        %391 = vmatprep.subr.mxu0 0.0
        %392 = vmatpush1.xpose.msra.mxu0 0.0
        %393 = vmatprep.subr.mxu0 0.0
        %394 = vmatpush1.xpose.msra.mxu0 0.0
        %395 = vmatprep.subr.mxu0 0.0
        %396 = vmatpush1.xpose.msra.mxu0 0.0
        %397 = vmatprep.subr.mxu0 0.0
        %398 = vmatpush1.xpose.msra.mxu0 0.0
        %399 = vmatprep.subr.mxu0 0.0
        %400 = vmatpush1.xpose.msra.mxu0 0.0
        %401 = vmatprep.subr.mxu0 0.0
        %402 = vmatpush1.xpose.msra.mxu0 0.0
        %403 = vmatprep.subr.mxu0 0.0
        %404 = vmatpush1.xpose.msra.mxu0 0.0
        %405 = vmatprep.subr.mxu0 0.0
        %406 = vmatpush1.xpose.msra.mxu0 0.0
        %407 = vmatprep.mubr.f32.mxu0 0.0
        %408 = vmatmul.mubr.f32.gmra.mrb[0].mxu0 %v339
        %v409 = vpop.f32.mrb[0].mxu0
        %v410 = vadd.f32 0.0, %v409
        %v411 = vpop.f32.mrb[0].mxu0
        %412 = vdwg.mxu0
        %414 = vrot.lane.b32.xlu0 %v322, 96
        %v415 = vpop.permute.xlu0 %414
        %v417 = vsel %vm337, %v311, 0
        %v419 = vsel %vm337, %v415, 0
        %421 = vmatprep.subr.mxu0 0.0
        %422 = vmatpush1.xpose.msra.mxu0 %v419
        %423 = vmatprep.subr.mxu0 0.0
        %424 = vmatpush1.xpose.msra.mxu0 0.0
        %425 = vmatprep.subr.mxu0 0.0
        %426 = vmatpush1.xpose.msra.mxu0 0.0
        %427 = vmatprep.subr.mxu0 0.0
        %428 = vmatpush1.xpose.msra.mxu0 0.0
        %429 = vmatprep.subr.mxu0 0.0
        %430 = vmatpush1.xpose.msra.mxu0 0.0
        %431 = vmatprep.subr.mxu0 0.0
        %432 = vmatpush1.xpose.msra.mxu0 0.0
        %433 = vmatprep.subr.mxu0 0.0
        %434 = vmatpush1.xpose.msra.mxu0 0.0
        %435 = vmatprep.subr.mxu0 0.0
        %436 = vmatpush1.xpose.msra.mxu0 0.0
        %437 = vmatprep.subr.mxu0 0.0
        %438 = vmatpush1.xpose.msra.mxu0 0.0
        %439 = vmatprep.subr.mxu0 0.0
        %440 = vmatpush1.xpose.msra.mxu0 0.0
        %441 = vmatprep.subr.mxu0 0.0
        %442 = vmatpush1.xpose.msra.mxu0 0.0
        %443 = vmatprep.subr.mxu0 0.0
        %444 = vmatpush1.xpose.msra.mxu0 0.0
        %445 = vmatprep.subr.mxu0 0.0
        %446 = vmatpush1.xpose.msra.mxu0 0.0
        %447 = vmatprep.subr.mxu0 0.0
        %448 = vmatpush1.xpose.msra.mxu0 0.0
        %449 = vmatprep.subr.mxu0 0.0
        %450 = vmatpush1.xpose.msra.mxu0 0.0
        %451 = vmatprep.subr.mxu0 0.0
        %452 = vmatpush1.xpose.msra.mxu0 0.0
        %453 = vmatprep.subr.mxu0 0.0
        %454 = vmatpush1.xpose.msra.mxu0 0.0
        %455 = vmatprep.subr.mxu0 0.0
        %456 = vmatpush1.xpose.msra.mxu0 0.0
        %457 = vmatprep.subr.mxu0 0.0
        %458 = vmatpush1.xpose.msra.mxu0 0.0
        %459 = vmatprep.subr.mxu0 0.0
        %460 = vmatpush1.xpose.msra.mxu0 0.0
        %461 = vmatprep.subr.mxu0 0.0
        %462 = vmatpush1.xpose.msra.mxu0 0.0
        %463 = vmatprep.subr.mxu0 0.0
        %464 = vmatpush1.xpose.msra.mxu0 0.0
        %465 = vmatprep.subr.mxu0 0.0
        %466 = vmatpush1.xpose.msra.mxu0 0.0
        %467 = vmatprep.subr.mxu0 0.0
        %468 = vmatpush1.xpose.msra.mxu0 0.0
        %469 = vmatprep.subr.mxu0 0.0
        %470 = vmatpush1.xpose.msra.mxu0 0.0
        %471 = vmatprep.subr.mxu0 0.0
        %472 = vmatpush1.xpose.msra.mxu0 0.0
        %473 = vmatprep.subr.mxu0 0.0
        %474 = vmatpush1.xpose.msra.mxu0 0.0
        %475 = vmatprep.subr.mxu0 0.0
        %476 = vmatpush1.xpose.msra.mxu0 0.0
        %477 = vmatprep.subr.mxu0 0.0
        %478 = vmatpush1.xpose.msra.mxu0 0.0
        %479 = vmatprep.subr.mxu0 0.0
        %480 = vmatpush1.xpose.msra.mxu0 0.0
        %481 = vmatprep.subr.mxu0 0.0
        %482 = vmatpush1.xpose.msra.mxu0 0.0
        %483 = vmatprep.subr.mxu0 0.0
        %484 = vmatpush1.xpose.msra.mxu0 0.0
        %485 = vmatprep.mubr.f32.mxu0 0.0
        %486 = vmatmul.mubr.f32.gmra.mrb[0].mxu0 %v417
        %v487 = vpop.f32.mrb[0].mxu0
        %v488 = vadd.f32 0.0, %v487
        %v489 = vpop.f32.mrb[0].mxu0
        %490 = vdwg.mxu0
        %v491 = vsel %vm337, %v410, -inf
        %492 = vmax.xlane.f32.xlu0 %v491
        %v493 = vpop.xlane.xlu0 %492
        %v494 = vsel %vm337, %v488, -inf
        %495 = vmax.xlane.f32.xlu0 %v494
        %v496 = vpop.xlane.xlu0 %495
        %v497 = vsub.f32 %v410, %v493
        %v498 = vsub.f32 %v488, %v496
        %v499 = vmul.f32 %v497, 1.442695
        %v500 = vpow.pop %v499
        %v501 = vmul.f32 %v498, 1.442695
        %v502 = vpow.pop %v501
        %v503 = vsel %vm337, %v500, 0.0
        %504 = vadd.xlane.f32.xlu0 %v503
        %v505 = vpop.xlane.xlu0 %504
        %v506 = vsel %vm337, %v502, 0.0
        %507 = vadd.xlane.f32.xlu0 %v506
        %v508 = vpop.xlane.xlu0 %507
        %v509 = vrcp.pop %v505
        %v510 = vmul.f32 %v500, %v509
        %v511 = vrcp.pop %v508
        %v512 = vmul.f32 %v502, %v511
        %514 = vrot.lane.b32.xlu0 %v332, 64
        %v515 = vpop.permute.xlu0 %514
        %v518 = vsel %vm337, %v510, 0
        %520 = vmatprep.subr.mxu0 0.0
        %521 = vmatpush1.msra.mxu0 %v515
        %522 = vmatprep.subr.mxu0 0.0
        %523 = vmatpush1.msra.mxu0 0.0
        %524 = vmatprep.subr.mxu0 0.0
        %525 = vmatpush1.msra.mxu0 0.0
        %526 = vmatprep.subr.mxu0 0.0
        %527 = vmatpush1.msra.mxu0 0.0
        %528 = vmatprep.subr.mxu0 0.0
        %529 = vmatpush1.msra.mxu0 0.0
        %530 = vmatprep.subr.mxu0 0.0
        %531 = vmatpush1.msra.mxu0 0.0
        %532 = vmatprep.subr.mxu0 0.0
        %533 = vmatpush1.msra.mxu0 0.0
        %534 = vmatprep.subr.mxu0 0.0
        %535 = vmatpush1.msra.mxu0 0.0
        %536 = vmatprep.subr.mxu0 0.0
        %537 = vmatpush1.msra.mxu0 0.0
        %538 = vmatprep.subr.mxu0 0.0
        %539 = vmatpush1.msra.mxu0 0.0
        %540 = vmatprep.subr.mxu0 0.0
        %541 = vmatpush1.msra.mxu0 0.0
        %542 = vmatprep.subr.mxu0 0.0
        %543 = vmatpush1.msra.mxu0 0.0
        %544 = vmatprep.subr.mxu0 0.0
        %545 = vmatpush1.msra.mxu0 0.0
        %546 = vmatprep.subr.mxu0 0.0
        %547 = vmatpush1.msra.mxu0 0.0
        %548 = vmatprep.subr.mxu0 0.0
        %549 = vmatpush1.msra.mxu0 0.0
        %550 = vmatprep.subr.mxu0 0.0
        %551 = vmatpush1.msra.mxu0 0.0
        %552 = vmatprep.subr.mxu0 0.0
        %553 = vmatpush1.msra.mxu0 0.0
        %554 = vmatprep.subr.mxu0 0.0
        %555 = vmatpush1.msra.mxu0 0.0
        %556 = vmatprep.subr.mxu0 0.0
        %557 = vmatpush1.msra.mxu0 0.0
        %558 = vmatprep.subr.mxu0 0.0
        %559 = vmatpush1.msra.mxu0 0.0
        %560 = vmatprep.subr.mxu0 0.0
        %561 = vmatpush1.msra.mxu0 0.0
        %562 = vmatprep.subr.mxu0 0.0
        %563 = vmatpush1.msra.mxu0 0.0
        %564 = vmatprep.subr.mxu0 0.0
        %565 = vmatpush1.msra.mxu0 0.0
        %566 = vmatprep.subr.mxu0 0.0
        %567 = vmatpush1.msra.mxu0 0.0
        %568 = vmatprep.subr.mxu0 0.0
        %569 = vmatpush1.msra.mxu0 0.0
        %570 = vmatprep.subr.mxu0 0.0
        %571 = vmatpush1.msra.mxu0 0.0
        %572 = vmatprep.subr.mxu0 0.0
        %573 = vmatpush1.msra.mxu0 0.0
        %574 = vmatprep.subr.mxu0 0.0
        %575 = vmatpush1.msra.mxu0 0.0
        %576 = vmatprep.subr.mxu0 0.0
        %577 = vmatpush1.msra.mxu0 0.0
        %578 = vmatprep.subr.mxu0 0.0
        %579 = vmatpush1.msra.mxu0 0.0
        %580 = vmatprep.subr.mxu0 0.0
        %581 = vmatpush1.msra.mxu0 0.0
        %582 = vmatprep.subr.mxu0 0.0
        %583 = vmatpush1.msra.mxu0 0.0
        %584 = vmatprep.mubr.f32.mxu0 0.0
        %585 = vmatmul.mubr.f32.gmra.mrb[0].mxu0 %v518
        %v586 = vpop.f32.mrb[0].mxu0
        %v587 = vadd.f32 0.0, %v586
        %v588 = vpop.f32.mrb[0].mxu0
        %589 = vdwg.mxu0
        %591 = vrot.lane.b32.xlu0 %v333, 64
        %v592 = vpop.permute.xlu0 %591
        %v595 = vsel %vm337, %v512, 0
        %597 = vmatprep.subr.mxu0 0.0
        %598 = vmatpush1.msra.mxu0 %v592
        %599 = vmatprep.subr.mxu0 0.0
        %600 = vmatpush1.msra.mxu0 0.0
        %601 = vmatprep.subr.mxu0 0.0
        %602 = vmatpush1.msra.mxu0 0.0
        %603 = vmatprep.subr.mxu0 0.0
        %604 = vmatpush1.msra.mxu0 0.0
        %605 = vmatprep.subr.mxu0 0.0
        %606 = vmatpush1.msra.mxu0 0.0
        %607 = vmatprep.subr.mxu0 0.0
        %608 = vmatpush1.msra.mxu0 0.0
        %609 = vmatprep.subr.mxu0 0.0
        %610 = vmatpush1.msra.mxu0 0.0
        %611 = vmatprep.subr.mxu0 0.0
        %612 = vmatpush1.msra.mxu0 0.0
        %613 = vmatprep.subr.mxu0 0.0
        %614 = vmatpush1.msra.mxu0 0.0
        %615 = vmatprep.subr.mxu0 0.0
        %616 = vmatpush1.msra.mxu0 0.0
        %617 = vmatprep.subr.mxu0 0.0
        %618 = vmatpush1.msra.mxu0 0.0
        %619 = vmatprep.subr.mxu0 0.0
        %620 = vmatpush1.msra.mxu0 0.0
        %621 = vmatprep.subr.mxu0 0.0
        %622 = vmatpush1.msra.mxu0 0.0
        %623 = vmatprep.subr.mxu0 0.0
        %624 = vmatpush1.msra.mxu0 0.0
        %625 = vmatprep.subr.mxu0 0.0
        %626 = vmatpush1.msra.mxu0 0.0
        %627 = vmatprep.subr.mxu0 0.0
        %628 = vmatpush1.msra.mxu0 0.0
        %629 = vmatprep.subr.mxu0 0.0
        %630 = vmatpush1.msra.mxu0 0.0
        %631 = vmatprep.subr.mxu0 0.0
        %632 = vmatpush1.msra.mxu0 0.0
        %633 = vmatprep.subr.mxu0 0.0
        %634 = vmatpush1.msra.mxu0 0.0
        %635 = vmatprep.subr.mxu0 0.0
        %636 = vmatpush1.msra.mxu0 0.0
        %637 = vmatprep.subr.mxu0 0.0
        %638 = vmatpush1.msra.mxu0 0.0
        %639 = vmatprep.subr.mxu0 0.0
        %640 = vmatpush1.msra.mxu0 0.0
        %641 = vmatprep.subr.mxu0 0.0
        %642 = vmatpush1.msra.mxu0 0.0
        %643 = vmatprep.subr.mxu0 0.0
        %644 = vmatpush1.msra.mxu0 0.0
        %645 = vmatprep.subr.mxu0 0.0
        %646 = vmatpush1.msra.mxu0 0.0
        %647 = vmatprep.subr.mxu0 0.0
        %648 = vmatpush1.msra.mxu0 0.0
        %649 = vmatprep.subr.mxu0 0.0
        %650 = vmatpush1.msra.mxu0 0.0
        %651 = vmatprep.subr.mxu0 0.0
        %652 = vmatpush1.msra.mxu0 0.0
        %653 = vmatprep.subr.mxu0 0.0
        %654 = vmatpush1.msra.mxu0 0.0
        %655 = vmatprep.subr.mxu0 0.0
        %656 = vmatpush1.msra.mxu0 0.0
        %657 = vmatprep.subr.mxu0 0.0
        %658 = vmatpush1.msra.mxu0 0.0
        %659 = vmatprep.subr.mxu0 0.0
        %660 = vmatpush1.msra.mxu0 0.0
        %661 = vmatprep.mubr.f32.mxu0 0.0
        %662 = vmatmul.mubr.f32.gmra.mrb[0].mxu0 %v595
        %v663 = vpop.f32.mrb[0].mxu0
        %v664 = vadd.f32 0.0, %v663
        %v665 = vpop.f32.mrb[0].mxu0
        %666 = vdwg.mxu0
        %667 = vrot.lane.b32.xlu0 %v310, 120
        %v668 = vpop.permute.xlu0 %667
        %669 = vrot.lane.b32.xlu0 %v321, 88
        %v670 = vpop.permute.xlu0 %669
        %v671 = vsel %vm337, %v668, 0
        %v673 = vsel %vm337, %v670, 0
        %675 = vmatprep.subr.mxu0 0.0
        %676 = vmatpush1.xpose.msra.mxu0 %v673
        %677 = vmatprep.subr.mxu0 0.0
        %678 = vmatpush1.xpose.msra.mxu0 0.0
        %679 = vmatprep.subr.mxu0 0.0
        %680 = vmatpush1.xpose.msra.mxu0 0.0
        %681 = vmatprep.subr.mxu0 0.0
        %682 = vmatpush1.xpose.msra.mxu0 0.0
        %683 = vmatprep.subr.mxu0 0.0
        %684 = vmatpush1.xpose.msra.mxu0 0.0
        %685 = vmatprep.subr.mxu0 0.0
        %686 = vmatpush1.xpose.msra.mxu0 0.0
        %687 = vmatprep.subr.mxu0 0.0
        %688 = vmatpush1.xpose.msra.mxu0 0.0
        %689 = vmatprep.subr.mxu0 0.0
        %690 = vmatpush1.xpose.msra.mxu0 0.0
        %691 = vmatprep.subr.mxu0 0.0
        %692 = vmatpush1.xpose.msra.mxu0 0.0
        %693 = vmatprep.subr.mxu0 0.0
        %694 = vmatpush1.xpose.msra.mxu0 0.0
        %695 = vmatprep.subr.mxu0 0.0
        %696 = vmatpush1.xpose.msra.mxu0 0.0
        %697 = vmatprep.subr.mxu0 0.0
        %698 = vmatpush1.xpose.msra.mxu0 0.0
        %699 = vmatprep.subr.mxu0 0.0
        %700 = vmatpush1.xpose.msra.mxu0 0.0
        %701 = vmatprep.subr.mxu0 0.0
        %702 = vmatpush1.xpose.msra.mxu0 0.0
        %703 = vmatprep.subr.mxu0 0.0
        %704 = vmatpush1.xpose.msra.mxu0 0.0
        %705 = vmatprep.subr.mxu0 0.0
        %706 = vmatpush1.xpose.msra.mxu0 0.0
        %707 = vmatprep.subr.mxu0 0.0
        %708 = vmatpush1.xpose.msra.mxu0 0.0
        %709 = vmatprep.subr.mxu0 0.0
        %710 = vmatpush1.xpose.msra.mxu0 0.0
        %711 = vmatprep.subr.mxu0 0.0
        %712 = vmatpush1.xpose.msra.mxu0 0.0
        %713 = vmatprep.subr.mxu0 0.0
        %714 = vmatpush1.xpose.msra.mxu0 0.0
        %715 = vmatprep.subr.mxu0 0.0
        %716 = vmatpush1.xpose.msra.mxu0 0.0
        %717 = vmatprep.subr.mxu0 0.0
        %718 = vmatpush1.xpose.msra.mxu0 0.0
        %719 = vmatprep.subr.mxu0 0.0
        %720 = vmatpush1.xpose.msra.mxu0 0.0
        %721 = vmatprep.subr.mxu0 0.0
        %722 = vmatpush1.xpose.msra.mxu0 0.0
        %723 = vmatprep.subr.mxu0 0.0
        %724 = vmatpush1.xpose.msra.mxu0 0.0
        %725 = vmatprep.subr.mxu0 0.0
        %726 = vmatpush1.xpose.msra.mxu0 0.0
        %727 = vmatprep.subr.mxu0 0.0
        %728 = vmatpush1.xpose.msra.mxu0 0.0
        %729 = vmatprep.subr.mxu0 0.0
        %730 = vmatpush1.xpose.msra.mxu0 0.0
        %731 = vmatprep.subr.mxu0 0.0
        %732 = vmatpush1.xpose.msra.mxu0 0.0
        %733 = vmatprep.subr.mxu0 0.0
        %734 = vmatpush1.xpose.msra.mxu0 0.0
        %735 = vmatprep.subr.mxu0 0.0
        %736 = vmatpush1.xpose.msra.mxu0 0.0
        %737 = vmatprep.subr.mxu0 0.0
        %738 = vmatpush1.xpose.msra.mxu0 0.0
        %739 = vmatprep.mubr.f32.mxu0 0.0
        %740 = vmatmul.mubr.f32.gmra.mrb[0].mxu0 %v671
        %v741 = vpop.f32.mrb[0].mxu0
        %v742 = vadd.f32 0.0, %v741
        %v743 = vpop.f32.mrb[0].mxu0
        %744 = vdwg.mxu0
        %745 = vrot.lane.b32.xlu0 %v311, 120
        %v746 = vpop.permute.xlu0 %745
        %747 = vrot.lane.b32.xlu0 %v322, 88
        %v748 = vpop.permute.xlu0 %747
        %v749 = vsel %vm337, %v746, 0
        %v751 = vsel %vm337, %v748, 0
        %753 = vmatprep.subr.mxu0 0.0
        %754 = vmatpush1.xpose.msra.mxu0 %v751
        %755 = vmatprep.subr.mxu0 0.0
        %756 = vmatpush1.xpose.msra.mxu0 0.0
        %757 = vmatprep.subr.mxu0 0.0
        %758 = vmatpush1.xpose.msra.mxu0 0.0
        %759 = vmatprep.subr.mxu0 0.0
        %760 = vmatpush1.xpose.msra.mxu0 0.0
        %761 = vmatprep.subr.mxu0 0.0
        %762 = vmatpush1.xpose.msra.mxu0 0.0
        %763 = vmatprep.subr.mxu0 0.0
        %764 = vmatpush1.xpose.msra.mxu0 0.0
        %765 = vmatprep.subr.mxu0 0.0
        %766 = vmatpush1.xpose.msra.mxu0 0.0
        %767 = vmatprep.subr.mxu0 0.0
        %768 = vmatpush1.xpose.msra.mxu0 0.0
        %769 = vmatprep.subr.mxu0 0.0
        %770 = vmatpush1.xpose.msra.mxu0 0.0
        %771 = vmatprep.subr.mxu0 0.0
        %772 = vmatpush1.xpose.msra.mxu0 0.0
        %773 = vmatprep.subr.mxu0 0.0
        %774 = vmatpush1.xpose.msra.mxu0 0.0
        %775 = vmatprep.subr.mxu0 0.0
        %776 = vmatpush1.xpose.msra.mxu0 0.0
        %777 = vmatprep.subr.mxu0 0.0
        %778 = vmatpush1.xpose.msra.mxu0 0.0
        %779 = vmatprep.subr.mxu0 0.0
        %780 = vmatpush1.xpose.msra.mxu0 0.0
        %781 = vmatprep.subr.mxu0 0.0
        %782 = vmatpush1.xpose.msra.mxu0 0.0
        %783 = vmatprep.subr.mxu0 0.0
        %784 = vmatpush1.xpose.msra.mxu0 0.0
        %785 = vmatprep.subr.mxu0 0.0
        %786 = vmatpush1.xpose.msra.mxu0 0.0
        %787 = vmatprep.subr.mxu0 0.0
        %788 = vmatpush1.xpose.msra.mxu0 0.0
        %789 = vmatprep.subr.mxu0 0.0
        %790 = vmatpush1.xpose.msra.mxu0 0.0
        %791 = vmatprep.subr.mxu0 0.0
        %792 = vmatpush1.xpose.msra.mxu0 0.0
        %793 = vmatprep.subr.mxu0 0.0
        %794 = vmatpush1.xpose.msra.mxu0 0.0
        %795 = vmatprep.subr.mxu0 0.0
        %796 = vmatpush1.xpose.msra.mxu0 0.0
        %797 = vmatprep.subr.mxu0 0.0
        %798 = vmatpush1.xpose.msra.mxu0 0.0
        %799 = vmatprep.subr.mxu0 0.0
        %800 = vmatpush1.xpose.msra.mxu0 0.0
        %801 = vmatprep.subr.mxu0 0.0
        %802 = vmatpush1.xpose.msra.mxu0 0.0
        %803 = vmatprep.subr.mxu0 0.0
        %804 = vmatpush1.xpose.msra.mxu0 0.0
        %805 = vmatprep.subr.mxu0 0.0
        %806 = vmatpush1.xpose.msra.mxu0 0.0
        %807 = vmatprep.subr.mxu0 0.0
        %808 = vmatpush1.xpose.msra.mxu0 0.0
        %809 = vmatprep.subr.mxu0 0.0
        %810 = vmatpush1.xpose.msra.mxu0 0.0
        %811 = vmatprep.subr.mxu0 0.0
        %812 = vmatpush1.xpose.msra.mxu0 0.0
        %813 = vmatprep.subr.mxu0 0.0
        %814 = vmatpush1.xpose.msra.mxu0 0.0
        %815 = vmatprep.subr.mxu0 0.0
        %816 = vmatpush1.xpose.msra.mxu0 0.0
        %817 = vmatprep.mubr.f32.mxu0 0.0
        %818 = vmatmul.mubr.f32.gmra.mrb[0].mxu0 %v749
        %v819 = vpop.f32.mrb[0].mxu0
        %v820 = vadd.f32 0.0, %v819
        %v821 = vpop.f32.mrb[0].mxu0
        %822 = vdwg.mxu0
        %v823 = vsel %vm337, %v742, -inf
        %824 = vmax.xlane.f32.xlu0 %v823
        %v825 = vpop.xlane.xlu0 %824
        %v826 = vsel %vm337, %v820, -inf
        %827 = vmax.xlane.f32.xlu0 %v826
        %v828 = vpop.xlane.xlu0 %827
        %v829 = vsub.f32 %v742, %v825
        %v830 = vsub.f32 %v820, %v828
        %v831 = vmul.f32 %v829, 1.442695
        %v832 = vpow.pop %v831
        %v833 = vmul.f32 %v830, 1.442695
        %v834 = vpow.pop %v833
        %v835 = vsel %vm337, %v832, 0.0
        %836 = vadd.xlane.f32.xlu0 %v835
        %v837 = vpop.xlane.xlu0 %836
        %v838 = vsel %vm337, %v834, 0.0
        %839 = vadd.xlane.f32.xlu0 %v838
        %v840 = vpop.xlane.xlu0 %839
        %v841 = vrcp.pop %v837
        %v842 = vmul.f32 %v832, %v841
        %v843 = vrcp.pop %v840
        %v844 = vmul.f32 %v834, %v843
        %845 = vrot.lane.b32.xlu0 %v332, 56
        %v846 = vpop.permute.xlu0 %845
        %v849 = vsel %vm337, %v842, 0
        %851 = vmatprep.subr.mxu0 0.0
        %852 = vmatpush1.msra.mxu0 %v846
        %853 = vmatprep.subr.mxu0 0.0
        %854 = vmatpush1.msra.mxu0 0.0
        %855 = vmatprep.subr.mxu0 0.0
        %856 = vmatpush1.msra.mxu0 0.0
        %857 = vmatprep.subr.mxu0 0.0
        %858 = vmatpush1.msra.mxu0 0.0
        %859 = vmatprep.subr.mxu0 0.0
        %860 = vmatpush1.msra.mxu0 0.0
        %861 = vmatprep.subr.mxu0 0.0
        %862 = vmatpush1.msra.mxu0 0.0
        %863 = vmatprep.subr.mxu0 0.0
        %864 = vmatpush1.msra.mxu0 0.0
        %865 = vmatprep.subr.mxu0 0.0
        %866 = vmatpush1.msra.mxu0 0.0
        %867 = vmatprep.subr.mxu0 0.0
        %868 = vmatpush1.msra.mxu0 0.0
        %869 = vmatprep.subr.mxu0 0.0
        %870 = vmatpush1.msra.mxu0 0.0
        %871 = vmatprep.subr.mxu0 0.0
        %872 = vmatpush1.msra.mxu0 0.0
        %873 = vmatprep.subr.mxu0 0.0
        %874 = vmatpush1.msra.mxu0 0.0
        %875 = vmatprep.subr.mxu0 0.0
        %876 = vmatpush1.msra.mxu0 0.0
        %877 = vmatprep.subr.mxu0 0.0
        %878 = vmatpush1.msra.mxu0 0.0
        %879 = vmatprep.subr.mxu0 0.0
        %880 = vmatpush1.msra.mxu0 0.0
        %881 = vmatprep.subr.mxu0 0.0
        %882 = vmatpush1.msra.mxu0 0.0
        %883 = vmatprep.subr.mxu0 0.0
        %884 = vmatpush1.msra.mxu0 0.0
        %885 = vmatprep.subr.mxu0 0.0
        %886 = vmatpush1.msra.mxu0 0.0
        %887 = vmatprep.subr.mxu0 0.0
        %888 = vmatpush1.msra.mxu0 0.0
        %889 = vmatprep.subr.mxu0 0.0
        %890 = vmatpush1.msra.mxu0 0.0
        %891 = vmatprep.subr.mxu0 0.0
        %892 = vmatpush1.msra.mxu0 0.0
        %893 = vmatprep.subr.mxu0 0.0
        %894 = vmatpush1.msra.mxu0 0.0
        %895 = vmatprep.subr.mxu0 0.0
        %896 = vmatpush1.msra.mxu0 0.0
        %897 = vmatprep.subr.mxu0 0.0
        %898 = vmatpush1.msra.mxu0 0.0
        %899 = vmatprep.subr.mxu0 0.0
        %900 = vmatpush1.msra.mxu0 0.0
        %901 = vmatprep.subr.mxu0 0.0
        %902 = vmatpush1.msra.mxu0 0.0
        %903 = vmatprep.subr.mxu0 0.0
        %904 = vmatpush1.msra.mxu0 0.0
        %905 = vmatprep.subr.mxu0 0.0
        %906 = vmatpush1.msra.mxu0 0.0
        %907 = vmatprep.subr.mxu0 0.0
        %908 = vmatpush1.msra.mxu0 0.0
        %909 = vmatprep.subr.mxu0 0.0
        %910 = vmatpush1.msra.mxu0 0.0
        %911 = vmatprep.subr.mxu0 0.0
        %912 = vmatpush1.msra.mxu0 0.0
        %913 = vmatprep.subr.mxu0 0.0
        %914 = vmatpush1.msra.mxu0 0.0
        %915 = vmatprep.mubr.f32.mxu0 0.0
        %916 = vmatmul.mubr.f32.gmra.mrb[0].mxu0 %v849
        %v917 = vpop.f32.mrb[0].mxu0
        %v918 = vadd.f32 0.0, %v917
        %v919 = vpop.f32.mrb[0].mxu0
        %920 = vdwg.mxu0
        %921 = vrot.lane.b32.xlu0 %v333, 56
        %v922 = vpop.permute.xlu0 %921
        %v925 = vsel %vm337, %v844, 0
        %927 = vmatprep.subr.mxu0 0.0
        %928 = vmatpush1.msra.mxu0 %v922
        %929 = vmatprep.subr.mxu0 0.0
        %930 = vmatpush1.msra.mxu0 0.0
        %931 = vmatprep.subr.mxu0 0.0
        %932 = vmatpush1.msra.mxu0 0.0
        %933 = vmatprep.subr.mxu0 0.0
        %934 = vmatpush1.msra.mxu0 0.0
        %935 = vmatprep.subr.mxu0 0.0
        %936 = vmatpush1.msra.mxu0 0.0
        %937 = vmatprep.subr.mxu0 0.0
        %938 = vmatpush1.msra.mxu0 0.0
        %939 = vmatprep.subr.mxu0 0.0
        %940 = vmatpush1.msra.mxu0 0.0
        %941 = vmatprep.subr.mxu0 0.0
        %942 = vmatpush1.msra.mxu0 0.0
        %943 = vmatprep.subr.mxu0 0.0
        %944 = vmatpush1.msra.mxu0 0.0
        %945 = vmatprep.subr.mxu0 0.0
        %946 = vmatpush1.msra.mxu0 0.0
        %947 = vmatprep.subr.mxu0 0.0
        %948 = vmatpush1.msra.mxu0 0.0
        %949 = vmatprep.subr.mxu0 0.0
        %950 = vmatpush1.msra.mxu0 0.0
        %951 = vmatprep.subr.mxu0 0.0
        %952 = vmatpush1.msra.mxu0 0.0
        %953 = vmatprep.subr.mxu0 0.0
        %954 = vmatpush1.msra.mxu0 0.0
        %955 = vmatprep.subr.mxu0 0.0
        %956 = vmatpush1.msra.mxu0 0.0
        %957 = vmatprep.subr.mxu0 0.0
        %958 = vmatpush1.msra.mxu0 0.0
        %959 = vmatprep.subr.mxu0 0.0
        %960 = vmatpush1.msra.mxu0 0.0
        %961 = vmatprep.subr.mxu0 0.0
        %962 = vmatpush1.msra.mxu0 0.0
        %963 = vmatprep.subr.mxu0 0.0
        %964 = vmatpush1.msra.mxu0 0.0
        %965 = vmatprep.subr.mxu0 0.0
        %966 = vmatpush1.msra.mxu0 0.0
        %967 = vmatprep.subr.mxu0 0.0
        %968 = vmatpush1.msra.mxu0 0.0
        %969 = vmatprep.subr.mxu0 0.0
        %970 = vmatpush1.msra.mxu0 0.0
        %971 = vmatprep.subr.mxu0 0.0
        %972 = vmatpush1.msra.mxu0 0.0
        %973 = vmatprep.subr.mxu0 0.0
        %974 = vmatpush1.msra.mxu0 0.0
        %975 = vmatprep.subr.mxu0 0.0
        %976 = vmatpush1.msra.mxu0 0.0
        %977 = vmatprep.subr.mxu0 0.0
        %978 = vmatpush1.msra.mxu0 0.0
        %979 = vmatprep.subr.mxu0 0.0
        %980 = vmatpush1.msra.mxu0 0.0
        %981 = vmatprep.subr.mxu0 0.0
        %982 = vmatpush1.msra.mxu0 0.0
        %983 = vmatprep.subr.mxu0 0.0
        %984 = vmatpush1.msra.mxu0 0.0
        %985 = vmatprep.subr.mxu0 0.0
        %986 = vmatpush1.msra.mxu0 0.0
        %987 = vmatprep.subr.mxu0 0.0
        %988 = vmatpush1.msra.mxu0 0.0
        %989 = vmatprep.subr.mxu0 0.0
        %990 = vmatpush1.msra.mxu0 0.0
        %991 = vmatprep.mubr.f32.mxu0 0.0
        %992 = vmatmul.mubr.f32.gmra.mrb[0].mxu0 %v925
        %v993 = vpop.f32.mrb[0].mxu0
        %v994 = vadd.f32 0.0, %v993
        %v995 = vpop.f32.mrb[0].mxu0
        %996 = vdwg.mxu0
        %997 = vrot.lane.b32.xlu0 %v310, 112
        %v998 = vpop.permute.xlu0 %997
        %999 = vrot.lane.b32.xlu0 %v321, 80
        %v1000 = vpop.permute.xlu0 %999
        %v1001 = vsel %vm337, %v998, 0
        %v1003 = vsel %vm337, %v1000, 0
        %1005 = vmatprep.subr.mxu0 0.0
        %1006 = vmatpush1.xpose.msra.mxu0 %v1003
        %1007 = vmatprep.subr.mxu0 0.0
        %1008 = vmatpush1.xpose.msra.mxu0 0.0
        %1009 = vmatprep.subr.mxu0 0.0
        %1010 = vmatpush1.xpose.msra.mxu0 0.0
        %1011 = vmatprep.subr.mxu0 0.0
        %1012 = vmatpush1.xpose.msra.mxu0 0.0
        %1013 = vmatprep.subr.mxu0 0.0
        %1014 = vmatpush1.xpose.msra.mxu0 0.0
        %1015 = vmatprep.subr.mxu0 0.0
        %1016 = vmatpush1.xpose.msra.mxu0 0.0
        %1017 = vmatprep.subr.mxu0 0.0
        %1018 = vmatpush1.xpose.msra.mxu0 0.0
        %1019 = vmatprep.subr.mxu0 0.0
        %1020 = vmatpush1.xpose.msra.mxu0 0.0
        %1021 = vmatprep.subr.mxu0 0.0
        %1022 = vmatpush1.xpose.msra.mxu0 0.0
        %1023 = vmatprep.subr.mxu0 0.0
        %1024 = vmatpush1.xpose.msra.mxu0 0.0
        %1025 = vmatprep.subr.mxu0 0.0
        %1026 = vmatpush1.xpose.msra.mxu0 0.0
        %1027 = vmatprep.subr.mxu0 0.0
        %1028 = vmatpush1.xpose.msra.mxu0 0.0
        %1029 = vmatprep.subr.mxu0 0.0
        %1030 = vmatpush1.xpose.msra.mxu0 0.0
        %1031 = vmatprep.subr.mxu0 0.0
        %1032 = vmatpush1.xpose.msra.mxu0 0.0
        %1033 = vmatprep.subr.mxu0 0.0
        %1034 = vmatpush1.xpose.msra.mxu0 0.0
        %1035 = vmatprep.subr.mxu0 0.0
        %1036 = vmatpush1.xpose.msra.mxu0 0.0
        %1037 = vmatprep.subr.mxu0 0.0
        %1038 = vmatpush1.xpose.msra.mxu0 0.0
        %1039 = vmatprep.subr.mxu0 0.0
        %1040 = vmatpush1.xpose.msra.mxu0 0.0
        %1041 = vmatprep.subr.mxu0 0.0
        %1042 = vmatpush1.xpose.msra.mxu0 0.0
        %1043 = vmatprep.subr.mxu0 0.0
        %1044 = vmatpush1.xpose.msra.mxu0 0.0
        %1045 = vmatprep.subr.mxu0 0.0
        %1046 = vmatpush1.xpose.msra.mxu0 0.0
        %1047 = vmatprep.subr.mxu0 0.0
        %1048 = vmatpush1.xpose.msra.mxu0 0.0
        %1049 = vmatprep.subr.mxu0 0.0
        %1050 = vmatpush1.xpose.msra.mxu0 0.0
        %1051 = vmatprep.subr.mxu0 0.0
        %1052 = vmatpush1.xpose.msra.mxu0 0.0
        %1053 = vmatprep.subr.mxu0 0.0
        %1054 = vmatpush1.xpose.msra.mxu0 0.0
        %1055 = vmatprep.subr.mxu0 0.0
        %1056 = vmatpush1.xpose.msra.mxu0 0.0
        %1057 = vmatprep.subr.mxu0 0.0
        %1058 = vmatpush1.xpose.msra.mxu0 0.0
        %1059 = vmatprep.subr.mxu0 0.0
        %1060 = vmatpush1.xpose.msra.mxu0 0.0
        %1061 = vmatprep.subr.mxu0 0.0
        %1062 = vmatpush1.xpose.msra.mxu0 0.0
        %1063 = vmatprep.subr.mxu0 0.0
        %1064 = vmatpush1.xpose.msra.mxu0 0.0
        %1065 = vmatprep.subr.mxu0 0.0
        %1066 = vmatpush1.xpose.msra.mxu0 0.0
        %1067 = vmatprep.subr.mxu0 0.0
        %1068 = vmatpush1.xpose.msra.mxu0 0.0
        %1069 = vmatprep.mubr.f32.mxu0 0.0
        %1070 = vmatmul.mubr.f32.gmra.mrb[0].mxu0 %v1001
        %v1071 = vpop.f32.mrb[0].mxu0
        %v1072 = vadd.f32 0.0, %v1071
        %v1073 = vpop.f32.mrb[0].mxu0
        %1074 = vdwg.mxu0
        %1075 = vrot.lane.b32.xlu0 %v311, 112
        %v1076 = vpop.permute.xlu0 %1075
        %1077 = vrot.lane.b32.xlu0 %v322, 80
        %v1078 = vpop.permute.xlu0 %1077
        %v1079 = vsel %vm337, %v1076, 0
        %v1081 = vsel %vm337, %v1078, 0
        %1083 = vmatprep.subr.mxu0 0.0
        %1084 = vmatpush1.xpose.msra.mxu0 %v1081
        %1085 = vmatprep.subr.mxu0 0.0
        %1086 = vmatpush1.xpose.msra.mxu0 0.0
        %1087 = vmatprep.subr.mxu0 0.0
        %1088 = vmatpush1.xpose.msra.mxu0 0.0
        %1089 = vmatprep.subr.mxu0 0.0
        %1090 = vmatpush1.xpose.msra.mxu0 0.0
        %1091 = vmatprep.subr.mxu0 0.0
        %1092 = vmatpush1.xpose.msra.mxu0 0.0
        %1093 = vmatprep.subr.mxu0 0.0
        %1094 = vmatpush1.xpose.msra.mxu0 0.0
        %1095 = vmatprep.subr.mxu0 0.0
        %1096 = vmatpush1.xpose.msra.mxu0 0.0
        %1097 = vmatprep.subr.mxu0 0.0
        %1098 = vmatpush1.xpose.msra.mxu0 0.0
        %1099 = vmatprep.subr.mxu0 0.0
        %1100 = vmatpush1.xpose.msra.mxu0 0.0
        %1101 = vmatprep.subr.mxu0 0.0
        %1102 = vmatpush1.xpose.msra.mxu0 0.0
        %1103 = vmatprep.subr.mxu0 0.0
        %1104 = vmatpush1.xpose.msra.mxu0 0.0
        %1105 = vmatprep.subr.mxu0 0.0
        %1106 = vmatpush1.xpose.msra.mxu0 0.0
        %1107 = vmatprep.subr.mxu0 0.0
        %1108 = vmatpush1.xpose.msra.mxu0 0.0
        %1109 = vmatprep.subr.mxu0 0.0
        %1110 = vmatpush1.xpose.msra.mxu0 0.0
        %1111 = vmatprep.subr.mxu0 0.0
        %1112 = vmatpush1.xpose.msra.mxu0 0.0
        %1113 = vmatprep.subr.mxu0 0.0
        %1114 = vmatpush1.xpose.msra.mxu0 0.0
        %1115 = vmatprep.subr.mxu0 0.0
        %1116 = vmatpush1.xpose.msra.mxu0 0.0
        %1117 = vmatprep.subr.mxu0 0.0
        %1118 = vmatpush1.xpose.msra.mxu0 0.0
        %1119 = vmatprep.subr.mxu0 0.0
        %1120 = vmatpush1.xpose.msra.mxu0 0.0
        %1121 = vmatprep.subr.mxu0 0.0
        %1122 = vmatpush1.xpose.msra.mxu0 0.0
        %1123 = vmatprep.subr.mxu0 0.0
        %1124 = vmatpush1.xpose.msra.mxu0 0.0
        %1125 = vmatprep.subr.mxu0 0.0
        %1126 = vmatpush1.xpose.msra.mxu0 0.0
        %1127 = vmatprep.subr.mxu0 0.0
        %1128 = vmatpush1.xpose.msra.mxu0 0.0
        %1129 = vmatprep.subr.mxu0 0.0
        %1130 = vmatpush1.xpose.msra.mxu0 0.0
        %1131 = vmatprep.subr.mxu0 0.0
        %1132 = vmatpush1.xpose.msra.mxu0 0.0
        %1133 = vmatprep.subr.mxu0 0.0
        %1134 = vmatpush1.xpose.msra.mxu0 0.0
        %1135 = vmatprep.subr.mxu0 0.0
        %1136 = vmatpush1.xpose.msra.mxu0 0.0
        %1137 = vmatprep.subr.mxu0 0.0
        %1138 = vmatpush1.xpose.msra.mxu0 0.0
        %1139 = vmatprep.subr.mxu0 0.0
        %1140 = vmatpush1.xpose.msra.mxu0 0.0
        %1141 = vmatprep.subr.mxu0 0.0
        %1142 = vmatpush1.xpose.msra.mxu0 0.0
        %1143 = vmatprep.subr.mxu0 0.0
        %1144 = vmatpush1.xpose.msra.mxu0 0.0
        %1145 = vmatprep.subr.mxu0 0.0
        %1146 = vmatpush1.xpose.msra.mxu0 0.0
        %1147 = vmatprep.mubr.f32.mxu0 0.0
        %1148 = vmatmul.mubr.f32.gmra.mrb[0].mxu0 %v1079
        %v1149 = vpop.f32.mrb[0].mxu0
        %v1150 = vadd.f32 0.0, %v1149
        %v1151 = vpop.f32.mrb[0].mxu0
        %1152 = vdwg.mxu0
        %v1153 = vsel %vm337, %v1072, -inf
        %1154 = vmax.xlane.f32.xlu0 %v1153
        %v1155 = vpop.xlane.xlu0 %1154
        %v1156 = vsel %vm337, %v1150, -inf
        %1157 = vmax.xlane.f32.xlu0 %v1156
        %v1158 = vpop.xlane.xlu0 %1157
        %v1159 = vsub.f32 %v1072, %v1155
        %v1160 = vsub.f32 %v1150, %v1158
        %v1161 = vmul.f32 %v1159, 1.442695
        %v1162 = vpow.pop %v1161
        %v1163 = vmul.f32 %v1160, 1.442695
        %v1164 = vpow.pop %v1163
        %v1165 = vsel %vm337, %v1162, 0.0
        %1166 = vadd.xlane.f32.xlu0 %v1165
        %v1167 = vpop.xlane.xlu0 %1166
        %v1168 = vsel %vm337, %v1164, 0.0
        %1169 = vadd.xlane.f32.xlu0 %v1168
        %v1170 = vpop.xlane.xlu0 %1169
        %v1171 = vrcp.pop %v1167
        %v1172 = vmul.f32 %v1162, %v1171
        %v1173 = vrcp.pop %v1170
        %v1174 = vmul.f32 %v1164, %v1173
        %1175 = vrot.lane.b32.xlu0 %v332, 48
        %v1176 = vpop.permute.xlu0 %1175
        %v1179 = vsel %vm337, %v1172, 0
        %1181 = vmatprep.subr.mxu0 0.0
        %1182 = vmatpush1.msra.mxu0 %v1176
        %1183 = vmatprep.subr.mxu0 0.0
        %1184 = vmatpush1.msra.mxu0 0.0
        %1185 = vmatprep.subr.mxu0 0.0
        %1186 = vmatpush1.msra.mxu0 0.0
        %1187 = vmatprep.subr.mxu0 0.0
        %1188 = vmatpush1.msra.mxu0 0.0
        %1189 = vmatprep.subr.mxu0 0.0
        %1190 = vmatpush1.msra.mxu0 0.0
        %1191 = vmatprep.subr.mxu0 0.0
        %1192 = vmatpush1.msra.mxu0 0.0
        %1193 = vmatprep.subr.mxu0 0.0
        %1194 = vmatpush1.msra.mxu0 0.0
        %1195 = vmatprep.subr.mxu0 0.0
        %1196 = vmatpush1.msra.mxu0 0.0
        %1197 = vmatprep.subr.mxu0 0.0
        %1198 = vmatpush1.msra.mxu0 0.0
        %1199 = vmatprep.subr.mxu0 0.0
        %1200 = vmatpush1.msra.mxu0 0.0
        %1201 = vmatprep.subr.mxu0 0.0
        %1202 = vmatpush1.msra.mxu0 0.0
        %1203 = vmatprep.subr.mxu0 0.0
        %1204 = vmatpush1.msra.mxu0 0.0
        %1205 = vmatprep.subr.mxu0 0.0
        %1206 = vmatpush1.msra.mxu0 0.0
        %1207 = vmatprep.subr.mxu0 0.0
        %1208 = vmatpush1.msra.mxu0 0.0
        %1209 = vmatprep.subr.mxu0 0.0
        %1210 = vmatpush1.msra.mxu0 0.0
        %1211 = vmatprep.subr.mxu0 0.0
        %1212 = vmatpush1.msra.mxu0 0.0
        %1213 = vmatprep.subr.mxu0 0.0
        %1214 = vmatpush1.msra.mxu0 0.0
        %1215 = vmatprep.subr.mxu0 0.0
        %1216 = vmatpush1.msra.mxu0 0.0
        %1217 = vmatprep.subr.mxu0 0.0
        %1218 = vmatpush1.msra.mxu0 0.0
        %1219 = vmatprep.subr.mxu0 0.0
        %1220 = vmatpush1.msra.mxu0 0.0
        %1221 = vmatprep.subr.mxu0 0.0
        %1222 = vmatpush1.msra.mxu0 0.0
        %1223 = vmatprep.subr.mxu0 0.0
        %1224 = vmatpush1.msra.mxu0 0.0
        %1225 = vmatprep.subr.mxu0 0.0
        %1226 = vmatpush1.msra.mxu0 0.0
        %1227 = vmatprep.subr.mxu0 0.0
        %1228 = vmatpush1.msra.mxu0 0.0
        %1229 = vmatprep.subr.mxu0 0.0
        %1230 = vmatpush1.msra.mxu0 0.0
        %1231 = vmatprep.subr.mxu0 0.0
        %1232 = vmatpush1.msra.mxu0 0.0
        %1233 = vmatprep.subr.mxu0 0.0
        %1234 = vmatpush1.msra.mxu0 0.0
        %1235 = vmatprep.subr.mxu0 0.0
        %1236 = vmatpush1.msra.mxu0 0.0
        %1237 = vmatprep.subr.mxu0 0.0
        %1238 = vmatpush1.msra.mxu0 0.0
        %1239 = vmatprep.subr.mxu0 0.0
        %1240 = vmatpush1.msra.mxu0 0.0
        %1241 = vmatprep.subr.mxu0 0.0
        %1242 = vmatpush1.msra.mxu0 0.0
        %1243 = vmatprep.subr.mxu0 0.0
        %1244 = vmatpush1.msra.mxu0 0.0
        %1245 = vmatprep.mubr.f32.mxu0 0.0
        %1246 = vmatmul.mubr.f32.gmra.mrb[0].mxu0 %v1179
        %v1247 = vpop.f32.mrb[0].mxu0
        %v1248 = vadd.f32 0.0, %v1247
        %v1249 = vpop.f32.mrb[0].mxu0
        %1250 = vdwg.mxu0
        %1251 = vrot.lane.b32.xlu0 %v333, 48
        %v1252 = vpop.permute.xlu0 %1251
        %v1255 = vsel %vm337, %v1174, 0
        %1257 = vmatprep.subr.mxu0 0.0
        %1258 = vmatpush1.msra.mxu0 %v1252
        %1259 = vmatprep.subr.mxu0 0.0
        %1260 = vmatpush1.msra.mxu0 0.0
        %1261 = vmatprep.subr.mxu0 0.0
        %1262 = vmatpush1.msra.mxu0 0.0
        %1263 = vmatprep.subr.mxu0 0.0
        %1264 = vmatpush1.msra.mxu0 0.0
        %1265 = vmatprep.subr.mxu0 0.0
        %1266 = vmatpush1.msra.mxu0 0.0
        %1267 = vmatprep.subr.mxu0 0.0
        %1268 = vmatpush1.msra.mxu0 0.0
        %1269 = vmatprep.subr.mxu0 0.0
        %1270 = vmatpush1.msra.mxu0 0.0
        %1271 = vmatprep.subr.mxu0 0.0
        %1272 = vmatpush1.msra.mxu0 0.0
        %1273 = vmatprep.subr.mxu0 0.0
        %1274 = vmatpush1.msra.mxu0 0.0
        %1275 = vmatprep.subr.mxu0 0.0
        %1276 = vmatpush1.msra.mxu0 0.0
        %1277 = vmatprep.subr.mxu0 0.0
        %1278 = vmatpush1.msra.mxu0 0.0
        %1279 = vmatprep.subr.mxu0 0.0
        %1280 = vmatpush1.msra.mxu0 0.0
        %1281 = vmatprep.subr.mxu0 0.0
        %1282 = vmatpush1.msra.mxu0 0.0
        %1283 = vmatprep.subr.mxu0 0.0
        %1284 = vmatpush1.msra.mxu0 0.0
        %1285 = vmatprep.subr.mxu0 0.0
        %1286 = vmatpush1.msra.mxu0 0.0
        %1287 = vmatprep.subr.mxu0 0.0
        %1288 = vmatpush1.msra.mxu0 0.0
        %1289 = vmatprep.subr.mxu0 0.0
        %1290 = vmatpush1.msra.mxu0 0.0
        %1291 = vmatprep.subr.mxu0 0.0
        %1292 = vmatpush1.msra.mxu0 0.0
        %1293 = vmatprep.subr.mxu0 0.0
        %1294 = vmatpush1.msra.mxu0 0.0
        %1295 = vmatprep.subr.mxu0 0.0
        %1296 = vmatpush1.msra.mxu0 0.0
        %1297 = vmatprep.subr.mxu0 0.0
        %1298 = vmatpush1.msra.mxu0 0.0
        %1299 = vmatprep.subr.mxu0 0.0
        %1300 = vmatpush1.msra.mxu0 0.0
        %1301 = vmatprep.subr.mxu0 0.0
        %1302 = vmatpush1.msra.mxu0 0.0
        %1303 = vmatprep.subr.mxu0 0.0
        %1304 = vmatpush1.msra.mxu0 0.0
        %1305 = vmatprep.subr.mxu0 0.0
        %1306 = vmatpush1.msra.mxu0 0.0
        %1307 = vmatprep.subr.mxu0 0.0
        %1308 = vmatpush1.msra.mxu0 0.0
        %1309 = vmatprep.subr.mxu0 0.0
        %1310 = vmatpush1.msra.mxu0 0.0
        %1311 = vmatprep.subr.mxu0 0.0
        %1312 = vmatpush1.msra.mxu0 0.0
        %1313 = vmatprep.subr.mxu0 0.0
        %1314 = vmatpush1.msra.mxu0 0.0
        %1315 = vmatprep.subr.mxu0 0.0
        %1316 = vmatpush1.msra.mxu0 0.0
        %1317 = vmatprep.subr.mxu0 0.0
        %1318 = vmatpush1.msra.mxu0 0.0
        %1319 = vmatprep.subr.mxu0 0.0
        %1320 = vmatpush1.msra.mxu0 0.0
        %1321 = vmatprep.mubr.f32.mxu0 0.0
        %1322 = vmatmul.mubr.f32.gmra.mrb[0].mxu0 %v1255
        %v1323 = vpop.f32.mrb[0].mxu0
        %v1324 = vadd.f32 0.0, %v1323
        %v1325 = vpop.f32.mrb[0].mxu0
        %1326 = vdwg.mxu0
        %1327 = vrot.lane.b32.xlu0 %v310, 104
        %v1328 = vpop.permute.xlu0 %1327
        %1329 = vrot.lane.b32.xlu0 %v321, 72
        %v1330 = vpop.permute.xlu0 %1329
        %v1331 = vsel %vm337, %v1328, 0
        %v1333 = vsel %vm337, %v1330, 0
        %1335 = vmatprep.subr.mxu0 0.0
        %1336 = vmatpush1.xpose.msra.mxu0 %v1333
        %1337 = vmatprep.subr.mxu0 0.0
        %1338 = vmatpush1.xpose.msra.mxu0 0.0
        %1339 = vmatprep.subr.mxu0 0.0
        %1340 = vmatpush1.xpose.msra.mxu0 0.0
        %1341 = vmatprep.subr.mxu0 0.0
        %1342 = vmatpush1.xpose.msra.mxu0 0.0
        %1343 = vmatprep.subr.mxu0 0.0
        %1344 = vmatpush1.xpose.msra.mxu0 0.0
        %1345 = vmatprep.subr.mxu0 0.0
        %1346 = vmatpush1.xpose.msra.mxu0 0.0
        %1347 = vmatprep.subr.mxu0 0.0
        %1348 = vmatpush1.xpose.msra.mxu0 0.0
        %1349 = vmatprep.subr.mxu0 0.0
        %1350 = vmatpush1.xpose.msra.mxu0 0.0
        %1351 = vmatprep.subr.mxu0 0.0
        %1352 = vmatpush1.xpose.msra.mxu0 0.0
        %1353 = vmatprep.subr.mxu0 0.0
        %1354 = vmatpush1.xpose.msra.mxu0 0.0
        %1355 = vmatprep.subr.mxu0 0.0
        %1356 = vmatpush1.xpose.msra.mxu0 0.0
        %1357 = vmatprep.subr.mxu0 0.0
        %1358 = vmatpush1.xpose.msra.mxu0 0.0
        %1359 = vmatprep.subr.mxu0 0.0
        %1360 = vmatpush1.xpose.msra.mxu0 0.0
        %1361 = vmatprep.subr.mxu0 0.0
        %1362 = vmatpush1.xpose.msra.mxu0 0.0
        %1363 = vmatprep.subr.mxu0 0.0
        %1364 = vmatpush1.xpose.msra.mxu0 0.0
        %1365 = vmatprep.subr.mxu0 0.0
        %1366 = vmatpush1.xpose.msra.mxu0 0.0
        %1367 = vmatprep.subr.mxu0 0.0
        %1368 = vmatpush1.xpose.msra.mxu0 0.0
        %1369 = vmatprep.subr.mxu0 0.0
        %1370 = vmatpush1.xpose.msra.mxu0 0.0
        %1371 = vmatprep.subr.mxu0 0.0
        %1372 = vmatpush1.xpose.msra.mxu0 0.0
        %1373 = vmatprep.subr.mxu0 0.0
        %1374 = vmatpush1.xpose.msra.mxu0 0.0
        %1375 = vmatprep.subr.mxu0 0.0
        %1376 = vmatpush1.xpose.msra.mxu0 0.0
        %1377 = vmatprep.subr.mxu0 0.0
        %1378 = vmatpush1.xpose.msra.mxu0 0.0
        %1379 = vmatprep.subr.mxu0 0.0
        %1380 = vmatpush1.xpose.msra.mxu0 0.0
        %1381 = vmatprep.subr.mxu0 0.0
        %1382 = vmatpush1.xpose.msra.mxu0 0.0
        %1383 = vmatprep.subr.mxu0 0.0
        %1384 = vmatpush1.xpose.msra.mxu0 0.0
        %1385 = vmatprep.subr.mxu0 0.0
        %1386 = vmatpush1.xpose.msra.mxu0 0.0
        %1387 = vmatprep.subr.mxu0 0.0
        %1388 = vmatpush1.xpose.msra.mxu0 0.0
        %1389 = vmatprep.subr.mxu0 0.0
        %1390 = vmatpush1.xpose.msra.mxu0 0.0
        %1391 = vmatprep.subr.mxu0 0.0
        %1392 = vmatpush1.xpose.msra.mxu0 0.0
        %1393 = vmatprep.subr.mxu0 0.0
        %1394 = vmatpush1.xpose.msra.mxu0 0.0
        %1395 = vmatprep.subr.mxu0 0.0
        %1396 = vmatpush1.xpose.msra.mxu0 0.0
        %1397 = vmatprep.subr.mxu0 0.0
        %1398 = vmatpush1.xpose.msra.mxu0 0.0
        %1399 = vmatprep.mubr.f32.mxu0 0.0
        %1400 = vmatmul.mubr.f32.gmra.mrb[0].mxu0 %v1331
        %v1401 = vpop.f32.mrb[0].mxu0
        %v1402 = vadd.f32 0.0, %v1401
        %v1403 = vpop.f32.mrb[0].mxu0
        %1404 = vdwg.mxu0
        %1405 = vrot.lane.b32.xlu0 %v311, 104
        %v1406 = vpop.permute.xlu0 %1405
        %1407 = vrot.lane.b32.xlu0 %v322, 72
        %v1408 = vpop.permute.xlu0 %1407
        %v1409 = vsel %vm337, %v1406, 0
        %v1411 = vsel %vm337, %v1408, 0
        %1413 = vmatprep.subr.mxu0 0.0
        %1414 = vmatpush1.xpose.msra.mxu0 %v1411
        %1415 = vmatprep.subr.mxu0 0.0
        %1416 = vmatpush1.xpose.msra.mxu0 0.0
        %1417 = vmatprep.subr.mxu0 0.0
        %1418 = vmatpush1.xpose.msra.mxu0 0.0
        %1419 = vmatprep.subr.mxu0 0.0
        %1420 = vmatpush1.xpose.msra.mxu0 0.0
        %1421 = vmatprep.subr.mxu0 0.0
        %1422 = vmatpush1.xpose.msra.mxu0 0.0
        %1423 = vmatprep.subr.mxu0 0.0
        %1424 = vmatpush1.xpose.msra.mxu0 0.0
        %1425 = vmatprep.subr.mxu0 0.0
        %1426 = vmatpush1.xpose.msra.mxu0 0.0
        %1427 = vmatprep.subr.mxu0 0.0
        %1428 = vmatpush1.xpose.msra.mxu0 0.0
        %1429 = vmatprep.subr.mxu0 0.0
        %1430 = vmatpush1.xpose.msra.mxu0 0.0
        %1431 = vmatprep.subr.mxu0 0.0
        %1432 = vmatpush1.xpose.msra.mxu0 0.0
        %1433 = vmatprep.subr.mxu0 0.0
        %1434 = vmatpush1.xpose.msra.mxu0 0.0
        %1435 = vmatprep.subr.mxu0 0.0
        %1436 = vmatpush1.xpose.msra.mxu0 0.0
        %1437 = vmatprep.subr.mxu0 0.0
        %1438 = vmatpush1.xpose.msra.mxu0 0.0
        %1439 = vmatprep.subr.mxu0 0.0
        %1440 = vmatpush1.xpose.msra.mxu0 0.0
        %1441 = vmatprep.subr.mxu0 0.0
        %1442 = vmatpush1.xpose.msra.mxu0 0.0
        %1443 = vmatprep.subr.mxu0 0.0
        %1444 = vmatpush1.xpose.msra.mxu0 0.0
        %1445 = vmatprep.subr.mxu0 0.0
        %1446 = vmatpush1.xpose.msra.mxu0 0.0
        %1447 = vmatprep.subr.mxu0 0.0
        %1448 = vmatpush1.xpose.msra.mxu0 0.0
        %1449 = vmatprep.subr.mxu0 0.0
        %1450 = vmatpush1.xpose.msra.mxu0 0.0
        %1451 = vmatprep.subr.mxu0 0.0
        %1452 = vmatpush1.xpose.msra.mxu0 0.0
        %1453 = vmatprep.subr.mxu0 0.0
        %1454 = vmatpush1.xpose.msra.mxu0 0.0
        %1455 = vmatprep.subr.mxu0 0.0
        %1456 = vmatpush1.xpose.msra.mxu0 0.0
        %1457 = vmatprep.subr.mxu0 0.0
        %1458 = vmatpush1.xpose.msra.mxu0 0.0
        %1459 = vmatprep.subr.mxu0 0.0
        %1460 = vmatpush1.xpose.msra.mxu0 0.0
        %1461 = vmatprep.subr.mxu0 0.0
        %1462 = vmatpush1.xpose.msra.mxu0 0.0
        %1463 = vmatprep.subr.mxu0 0.0
        %1464 = vmatpush1.xpose.msra.mxu0 0.0
        %1465 = vmatprep.subr.mxu0 0.0
        %1466 = vmatpush1.xpose.msra.mxu0 0.0
        %1467 = vmatprep.subr.mxu0 0.0
        %1468 = vmatpush1.xpose.msra.mxu0 0.0
        %1469 = vmatprep.subr.mxu0 0.0
        %1470 = vmatpush1.xpose.msra.mxu0 0.0
        %1471 = vmatprep.subr.mxu0 0.0
        %1472 = vmatpush1.xpose.msra.mxu0 0.0
        %1473 = vmatprep.subr.mxu0 0.0
        %1474 = vmatpush1.xpose.msra.mxu0 0.0
        %1475 = vmatprep.subr.mxu0 0.0
        %1476 = vmatpush1.xpose.msra.mxu0 0.0
        %1477 = vmatprep.mubr.f32.mxu0 0.0
        %1478 = vmatmul.mubr.f32.gmra.mrb[0].mxu0 %v1409
        %v1479 = vpop.f32.mrb[0].mxu0
        %v1480 = vadd.f32 0.0, %v1479
        %v1481 = vpop.f32.mrb[0].mxu0
        %1482 = vdwg.mxu0
        %v1483 = vsel %vm337, %v1402, -inf
        %1484 = vmax.xlane.f32.xlu0 %v1483
        %v1485 = vpop.xlane.xlu0 %1484
        %v1486 = vsel %vm337, %v1480, -inf
        %1487 = vmax.xlane.f32.xlu0 %v1486
        %v1488 = vpop.xlane.xlu0 %1487
        %v1489 = vsub.f32 %v1402, %v1485
        %v1490 = vsub.f32 %v1480, %v1488
        %v1491 = vmul.f32 %v1489, 1.442695
        %v1492 = vpow.pop %v1491
        %v1493 = vmul.f32 %v1490, 1.442695
        %v1494 = vpow.pop %v1493
        %v1495 = vsel %vm337, %v1492, 0.0
        %1496 = vadd.xlane.f32.xlu0 %v1495
        %v1497 = vpop.xlane.xlu0 %1496
        %v1498 = vsel %vm337, %v1494, 0.0
        %1499 = vadd.xlane.f32.xlu0 %v1498
        %v1500 = vpop.xlane.xlu0 %1499
        %v1501 = vrcp.pop %v1497
        %v1502 = vmul.f32 %v1492, %v1501
        %v1503 = vrcp.pop %v1500
        %v1504 = vmul.f32 %v1494, %v1503
        %1505 = vrot.lane.b32.xlu0 %v332, 40
        %v1506 = vpop.permute.xlu0 %1505
        %v1509 = vsel %vm337, %v1502, 0
        %1511 = vmatprep.subr.mxu0 0.0
        %1512 = vmatpush1.msra.mxu0 %v1506
        %1513 = vmatprep.subr.mxu0 0.0
        %1514 = vmatpush1.msra.mxu0 0.0
        %1515 = vmatprep.subr.mxu0 0.0
        %1516 = vmatpush1.msra.mxu0 0.0
        %1517 = vmatprep.subr.mxu0 0.0
        %1518 = vmatpush1.msra.mxu0 0.0
        %1519 = vmatprep.subr.mxu0 0.0
        %1520 = vmatpush1.msra.mxu0 0.0
        %1521 = vmatprep.subr.mxu0 0.0
        %1522 = vmatpush1.msra.mxu0 0.0
        %1523 = vmatprep.subr.mxu0 0.0
        %1524 = vmatpush1.msra.mxu0 0.0
        %1525 = vmatprep.subr.mxu0 0.0
        %1526 = vmatpush1.msra.mxu0 0.0
        %1527 = vmatprep.subr.mxu0 0.0
        %1528 = vmatpush1.msra.mxu0 0.0
        %1529 = vmatprep.subr.mxu0 0.0
        %1530 = vmatpush1.msra.mxu0 0.0
        %1531 = vmatprep.subr.mxu0 0.0
        %1532 = vmatpush1.msra.mxu0 0.0
        %1533 = vmatprep.subr.mxu0 0.0
        %1534 = vmatpush1.msra.mxu0 0.0
        %1535 = vmatprep.subr.mxu0 0.0
        %1536 = vmatpush1.msra.mxu0 0.0
        %1537 = vmatprep.subr.mxu0 0.0
        %1538 = vmatpush1.msra.mxu0 0.0
        %1539 = vmatprep.subr.mxu0 0.0
        %1540 = vmatpush1.msra.mxu0 0.0
        %1541 = vmatprep.subr.mxu0 0.0
        %1542 = vmatpush1.msra.mxu0 0.0
        %1543 = vmatprep.subr.mxu0 0.0
        %1544 = vmatpush1.msra.mxu0 0.0
        %1545 = vmatprep.subr.mxu0 0.0
        %1546 = vmatpush1.msra.mxu0 0.0
        %1547 = vmatprep.subr.mxu0 0.0
        %1548 = vmatpush1.msra.mxu0 0.0
        %1549 = vmatprep.subr.mxu0 0.0
        %1550 = vmatpush1.msra.mxu0 0.0
        %1551 = vmatprep.subr.mxu0 0.0
        %1552 = vmatpush1.msra.mxu0 0.0
        %1553 = vmatprep.subr.mxu0 0.0
        %1554 = vmatpush1.msra.mxu0 0.0
        %1555 = vmatprep.subr.mxu0 0.0
        %1556 = vmatpush1.msra.mxu0 0.0
        %1557 = vmatprep.subr.mxu0 0.0
        %1558 = vmatpush1.msra.mxu0 0.0
        %1559 = vmatprep.subr.mxu0 0.0
        %1560 = vmatpush1.msra.mxu0 0.0
        %1561 = vmatprep.subr.mxu0 0.0
        %1562 = vmatpush1.msra.mxu0 0.0
        %1563 = vmatprep.subr.mxu0 0.0
        %1564 = vmatpush1.msra.mxu0 0.0
        %1565 = vmatprep.subr.mxu0 0.0
        %1566 = vmatpush1.msra.mxu0 0.0
        %1567 = vmatprep.subr.mxu0 0.0
        %1568 = vmatpush1.msra.mxu0 0.0
        %1569 = vmatprep.subr.mxu0 0.0
        %1570 = vmatpush1.msra.mxu0 0.0
        %1571 = vmatprep.subr.mxu0 0.0
        %1572 = vmatpush1.msra.mxu0 0.0
        %1573 = vmatprep.subr.mxu0 0.0
        %1574 = vmatpush1.msra.mxu0 0.0
        %1575 = vmatprep.mubr.f32.mxu0 0.0
        %1576 = vmatmul.mubr.f32.gmra.mrb[0].mxu0 %v1509
        %v1577 = vpop.f32.mrb[0].mxu0
        %v1578 = vadd.f32 0.0, %v1577
        %v1579 = vpop.f32.mrb[0].mxu0
        %1580 = vdwg.mxu0
        %1581 = vrot.lane.b32.xlu0 %v333, 40
        %v1582 = vpop.permute.xlu0 %1581
        %v1585 = vsel %vm337, %v1504, 0
        %1587 = vmatprep.subr.mxu0 0.0
        %1588 = vmatpush1.msra.mxu0 %v1582
        %1589 = vmatprep.subr.mxu0 0.0
        %1590 = vmatpush1.msra.mxu0 0.0
        %1591 = vmatprep.subr.mxu0 0.0
        %1592 = vmatpush1.msra.mxu0 0.0
        %1593 = vmatprep.subr.mxu0 0.0
        %1594 = vmatpush1.msra.mxu0 0.0
        %1595 = vmatprep.subr.mxu0 0.0
        %1596 = vmatpush1.msra.mxu0 0.0
        %1597 = vmatprep.subr.mxu0 0.0
        %1598 = vmatpush1.msra.mxu0 0.0
        %1599 = vmatprep.subr.mxu0 0.0
        %1600 = vmatpush1.msra.mxu0 0.0
        %1601 = vmatprep.subr.mxu0 0.0
        %1602 = vmatpush1.msra.mxu0 0.0
        %1603 = vmatprep.subr.mxu0 0.0
        %1604 = vmatpush1.msra.mxu0 0.0
        %1605 = vmatprep.subr.mxu0 0.0
        %1606 = vmatpush1.msra.mxu0 0.0
        %1607 = vmatprep.subr.mxu0 0.0
        %1608 = vmatpush1.msra.mxu0 0.0
        %1609 = vmatprep.subr.mxu0 0.0
        %1610 = vmatpush1.msra.mxu0 0.0
        %1611 = vmatprep.subr.mxu0 0.0
        %1612 = vmatpush1.msra.mxu0 0.0
        %1613 = vmatprep.subr.mxu0 0.0
        %1614 = vmatpush1.msra.mxu0 0.0
        %1615 = vmatprep.subr.mxu0 0.0
        %1616 = vmatpush1.msra.mxu0 0.0
        %1617 = vmatprep.subr.mxu0 0.0
        %1618 = vmatpush1.msra.mxu0 0.0
        %1619 = vmatprep.subr.mxu0 0.0
        %1620 = vmatpush1.msra.mxu0 0.0
        %1621 = vmatprep.subr.mxu0 0.0
        %1622 = vmatpush1.msra.mxu0 0.0
        %1623 = vmatprep.subr.mxu0 0.0
        %1624 = vmatpush1.msra.mxu0 0.0
        %1625 = vmatprep.subr.mxu0 0.0
        %1626 = vmatpush1.msra.mxu0 0.0
        %1627 = vmatprep.subr.mxu0 0.0
        %1628 = vmatpush1.msra.mxu0 0.0
        %1629 = vmatprep.subr.mxu0 0.0
        %1630 = vmatpush1.msra.mxu0 0.0
        %1631 = vmatprep.subr.mxu0 0.0
        %1632 = vmatpush1.msra.mxu0 0.0
        %1633 = vmatprep.subr.mxu0 0.0
        %1634 = vmatpush1.msra.mxu0 0.0
        %1635 = vmatprep.subr.mxu0 0.0
        %1636 = vmatpush1.msra.mxu0 0.0
        %1637 = vmatprep.subr.mxu0 0.0
        %1638 = vmatpush1.msra.mxu0 0.0
        %1639 = vmatprep.subr.mxu0 0.0
        %1640 = vmatpush1.msra.mxu0 0.0
        %1641 = vmatprep.subr.mxu0 0.0
        %1642 = vmatpush1.msra.mxu0 0.0
        %1643 = vmatprep.subr.mxu0 0.0
        %1644 = vmatpush1.msra.mxu0 0.0
        %1645 = vmatprep.subr.mxu0 0.0
        %1646 = vmatpush1.msra.mxu0 0.0
        %1647 = vmatprep.subr.mxu0 0.0
        %1648 = vmatpush1.msra.mxu0 0.0
        %1649 = vmatprep.subr.mxu0 0.0
        %1650 = vmatpush1.msra.mxu0 0.0
        %1651 = vmatprep.mubr.f32.mxu0 0.0
        %1652 = vmatmul.mubr.f32.gmra.mrb[0].mxu0 %v1585
        %v1653 = vpop.f32.mrb[0].mxu0
        %v1654 = vadd.f32 0.0, %v1653
        %v1655 = vpop.f32.mrb[0].mxu0
        %1656 = vdwg.mxu0
        %1659 = vrot.lane.b32.xlu0 %v918, 8
        %v1660 = vpop.permute.xlu0 %1659
        %1661 = vrot.lane.b32.xlu0 %v994, 8
        %v1662 = vpop.permute.xlu0 %1661
        %1667 = vrot.lane.b32.xlu0 %v1248, 16
        %v1668 = vpop.permute.xlu0 %1667
        %1669 = vrot.lane.b32.xlu0 %v1324, 16
        %v1670 = vpop.permute.xlu0 %1669
        %1675 = vrot.lane.b32.xlu0 %v1578, 24
        %v1676 = vpop.permute.xlu0 %1675
        %1677 = vrot.lane.b32.xlu0 %v1654, 24
        %v1678 = vpop.permute.xlu0 %1677
        %v1681 = vsel %vm337, %v587, %v1660
        %v1682 = vsel %vm337, %v664, %v1662
        %vm1683 = vcmask 130048
        %v1684 = vsel %vm1683, %v1681, %v1668
        %v1685 = vsel %vm1683, %v1682, %v1670
        %vm1686 = vcmask 195584
        %v1687 = vsel %vm1686, %v1684, %v1676
        %v1688 = vsel %vm1686, %v1685, %v1678
        %v1689 = vld [vmem:[%s186 + $0x40] sm:$0xff]
        %v1690 = vld [vmem:[%s186 + $0x48] sm:$0xff]
        %v1691 = vld [vmem:[%s186 + $0x50] sm:$0xff]
        %v1692 = vld [vmem:[%s186 + $0x58] sm:$0xff]
        %v1693 = vld [vmem:[%s186 + $0xd6] sm:$0x1]
        %v1694 = vlaneseq
        %v1695 = vshrl.u32 %v1694, 7
        %v1696 = vsub.s32 0, %v1695
        %v1697 = vrot.slane %v1693, %v1696
        %v1699 = vsel %vm223, %v1687, 0
        %v1702 = vsel %vm223, %v1688, 0
        %1704 = vmatprep.subr.mxu0 0.0
        %1705 = vmatpush1.msra.mxu0 %v1689
        %1706 = vmatprep.subr.mxu0 0.0
        %1707 = vmatpush1.msra.mxu0 %v1690
        %1708 = vmatprep.subr.mxu0 0.0
        %1709 = vmatpush1.msra.mxu0 %v1691
        %1710 = vmatprep.subr.mxu0 0.0
        %1711 = vmatpush1.msra.mxu0 %v1692
        %1712 = vmatprep.subr.mxu0 0.0
        %1713 = vmatpush1.msra.mxu0 0.0
        %1714 = vmatprep.subr.mxu0 0.0
        %1715 = vmatpush1.msra.mxu0 0.0
        %1716 = vmatprep.subr.mxu0 0.0
        %1717 = vmatpush1.msra.mxu0 0.0
        %1718 = vmatprep.subr.mxu0 0.0
        %1719 = vmatpush1.msra.mxu0 0.0
        %1720 = vmatprep.subr.mxu0 0.0
        %1721 = vmatpush1.msra.mxu0 0.0
        %1722 = vmatprep.subr.mxu0 0.0
        %1723 = vmatpush1.msra.mxu0 0.0
        %1724 = vmatprep.subr.mxu0 0.0
        %1725 = vmatpush1.msra.mxu0 0.0
        %1726 = vmatprep.subr.mxu0 0.0
        %1727 = vmatpush1.msra.mxu0 0.0
        %1728 = vmatprep.subr.mxu0 0.0
        %1729 = vmatpush1.msra.mxu0 0.0
        %1730 = vmatprep.subr.mxu0 0.0
        %1731 = vmatpush1.msra.mxu0 0.0
        %1732 = vmatprep.subr.mxu0 0.0
        %1733 = vmatpush1.msra.mxu0 0.0
        %1734 = vmatprep.subr.mxu0 0.0
        %1735 = vmatpush1.msra.mxu0 0.0
        %1736 = vmatprep.subr.mxu0 0.0
        %1737 = vmatpush1.msra.mxu0 0.0
        %1738 = vmatprep.subr.mxu0 0.0
        %1739 = vmatpush1.msra.mxu0 0.0
        %1740 = vmatprep.subr.mxu0 0.0
        %1741 = vmatpush1.msra.mxu0 0.0
        %1742 = vmatprep.subr.mxu0 0.0
        %1743 = vmatpush1.msra.mxu0 0.0
        %1744 = vmatprep.subr.mxu0 0.0
        %1745 = vmatpush1.msra.mxu0 0.0
        %1746 = vmatprep.subr.mxu0 0.0
        %1747 = vmatpush1.msra.mxu0 0.0
        %1748 = vmatprep.subr.mxu0 0.0
        %1749 = vmatpush1.msra.mxu0 0.0
        %1750 = vmatprep.subr.mxu0 0.0
        %1751 = vmatpush1.msra.mxu0 0.0
        %1752 = vmatprep.subr.mxu0 0.0
        %1753 = vmatpush1.msra.mxu0 0.0
        %1754 = vmatprep.subr.mxu0 0.0
        %1755 = vmatpush1.msra.mxu0 0.0
        %1756 = vmatprep.subr.mxu0 0.0
        %1757 = vmatpush1.msra.mxu0 0.0
        %1758 = vmatprep.subr.mxu0 0.0
        %1759 = vmatpush1.msra.mxu0 0.0
        %1760 = vmatprep.subr.mxu0 0.0
        %1761 = vmatpush1.msra.mxu0 0.0
        %1762 = vmatprep.subr.mxu0 0.0
        %1763 = vmatpush1.msra.mxu0 0.0
        %1764 = vmatprep.subr.mxu0 0.0
        %1765 = vmatpush1.msra.mxu0 0.0
        %1766 = vmatprep.subr.mxu0 0.0
        %1767 = vmatpush1.msra.mxu0 0.0
        %1768 = vmatprep.mubr.f32.mxu0 0.0
        %1769 = vmatmul.mubr.f32.gmra.mrb[0].mxu0 %v1699
        %v1770 = vpop.f32.mrb[0].mxu0
        %v1771 = vadd.f32 %v1697, %v1770
        %v1772 = vpop.f32.mrb[0].mxu0
        %1773 = vmatprep.mubr.f32.mxu0 0.0
        %1774 = vmatmul.mubr.f32.gmra.mrb[0].mxu0 %v1702
        %v1775 = vpop.f32.mrb[0].mxu0
        %v1776 = vadd.f32 %v1697, %v1775
        %v1777 = vpop.f32.mrb[0].mxu0
        %1778 = vdwg.mxu0
        %v1779 = vadd.f32 %v213, %v1771
        %v1780 = vadd.f32 %v214, %v1776
        %v1781 = vld [vmem:[%s186 + $0xd9] sm:$0x1]
        %v1782 = vld [vmem:[%s186 + $0xda] sm:$0x1]
        %v1783 = vsel %vm223, %v1779, 0.0
        %1784 = vadd.xlane.f32.xlu0 %v1783
        %v1785 = vpop.xlane.xlu0 %1784
        %v1786 = vsel %vm223, %v1780, 0.0
        %1787 = vadd.xlane.f32.xlu0 %v1786
        %v1788 = vpop.xlane.xlu0 %1787
        %v1789 = vrcp.pop 32.0
        %v1790 = vmul.f32 %v1785, %v1789
        %v1791 = vmul.f32 %v1788, %v1789
        %v1792 = vsub.f32 %v1779, %v1790
        %v1793 = vsub.f32 %v1780, %v1791
        %v1794 = vmul.f32 %v1792, %v1792
        %v1795 = vmul.f32 %v1793, %v1793
        %v1796 = vsel %vm223, %v1794, 0.0
        %1797 = vadd.xlane.f32.xlu0 %v1796
        %v1798 = vpop.xlane.xlu0 %1797
        %v1799 = vsel %vm223, %v1795, 0.0
        %1800 = vadd.xlane.f32.xlu0 %v1799
        %v1801 = vpop.xlane.xlu0 %1800
        %v1802 = vmul.f32 %v1798, %v1789
        %v1803 = vmul.f32 %v1801, %v1789
        %v1804 = vadd.f32 %v1802, 1e-05
        %v1805 = vadd.f32 %v1803, 1e-05
        %v1806 = vrsqrt.pop %v1804
        %v1807 = vrsqrt.pop %v1805
        %v1808 = vmul.f32 %v1792, %v1806
        %v1809 = vmul.f32 %v1793, %v1807
        %v1810 = vlaneseq
        %v1811 = vshrl.u32 %v1810, 7
        %v1812 = vsub.s32 0, %v1811
        %v1813 = vrot.slane %v1781, %v1812
        %v1814 = vmul.f32 %v1808, %v1813
        %v1815 = vmul.f32 %v1809, %v1813
        %v1816 = vlaneseq
        %v1817 = vshrl.u32 %v1816, 7
        %v1818 = vsub.s32 0, %v1817
        %v1819 = vrot.slane %v1782, %v1818
        %v1820 = vadd.f32 %v1814, %v1819
        %v1821 = vadd.f32 %v1815, %v1819
        %v1822 = vld [vmem:[%s186 + $0x60] sm:$0xff]
        %v1823 = vld [vmem:[%s186 + $0x68] sm:$0xff]
        %v1824 = vld [vmem:[%s186 + $0x70] sm:$0xff]
        %v1825 = vld [vmem:[%s186 + $0x78] sm:$0xff]
        %v1827 = vsel %vm223, %v215, 0
        %v1830 = vsel %vm223, %v216, 0
        %v1833 = vsel %vm223, %v217, 0
        %v1836 = vsel %vm223, %v218, 0
        %1838 = vmatprep.subr.mxu0 0.0
        %1839 = vmatpush1.msra.mxu0 %v1822
        %1840 = vmatprep.subr.mxu0 0.0
        %1841 = vmatpush1.msra.mxu0 %v1823
        %1842 = vmatprep.subr.mxu0 0.0
        %1843 = vmatpush1.msra.mxu0 %v1824
        %1844 = vmatprep.subr.mxu0 0.0
        %1845 = vmatpush1.msra.mxu0 %v1825
        %1846 = vmatprep.subr.mxu0 0.0
        %1847 = vmatpush1.msra.mxu0 0.0
        %1848 = vmatprep.subr.mxu0 0.0
        %1849 = vmatpush1.msra.mxu0 0.0
        %1850 = vmatprep.subr.mxu0 0.0
        %1851 = vmatpush1.msra.mxu0 0.0
        %1852 = vmatprep.subr.mxu0 0.0
        %1853 = vmatpush1.msra.mxu0 0.0
        %1854 = vmatprep.subr.mxu0 0.0
        %1855 = vmatpush1.msra.mxu0 0.0
        %1856 = vmatprep.subr.mxu0 0.0
        %1857 = vmatpush1.msra.mxu0 0.0
        %1858 = vmatprep.subr.mxu0 0.0
        %1859 = vmatpush1.msra.mxu0 0.0
        %1860 = vmatprep.subr.mxu0 0.0
        %1861 = vmatpush1.msra.mxu0 0.0
        %1862 = vmatprep.subr.mxu0 0.0
        %1863 = vmatpush1.msra.mxu0 0.0
        %1864 = vmatprep.subr.mxu0 0.0
        %1865 = vmatpush1.msra.mxu0 0.0
        %1866 = vmatprep.subr.mxu0 0.0
        %1867 = vmatpush1.msra.mxu0 0.0
        %1868 = vmatprep.subr.mxu0 0.0
        %1869 = vmatpush1.msra.mxu0 0.0
        %1870 = vmatprep.subr.mxu0 0.0
        %1871 = vmatpush1.msra.mxu0 0.0
        %1872 = vmatprep.subr.mxu0 0.0
        %1873 = vmatpush1.msra.mxu0 0.0
        %1874 = vmatprep.subr.mxu0 0.0
        %1875 = vmatpush1.msra.mxu0 0.0
        %1876 = vmatprep.subr.mxu0 0.0
        %1877 = vmatpush1.msra.mxu0 0.0
        %1878 = vmatprep.subr.mxu0 0.0
        %1879 = vmatpush1.msra.mxu0 0.0
        %1880 = vmatprep.subr.mxu0 0.0
        %1881 = vmatpush1.msra.mxu0 0.0
        %1882 = vmatprep.subr.mxu0 0.0
        %1883 = vmatpush1.msra.mxu0 0.0
        %1884 = vmatprep.subr.mxu0 0.0
        %1885 = vmatpush1.msra.mxu0 0.0
        %1886 = vmatprep.subr.mxu0 0.0
        %1887 = vmatpush1.msra.mxu0 0.0
        %1888 = vmatprep.subr.mxu0 0.0
        %1889 = vmatpush1.msra.mxu0 0.0
        %1890 = vmatprep.subr.mxu0 0.0
        %1891 = vmatpush1.msra.mxu0 0.0
        %1892 = vmatprep.subr.mxu0 0.0
        %1893 = vmatpush1.msra.mxu0 0.0
        %1894 = vmatprep.subr.mxu0 0.0
        %1895 = vmatpush1.msra.mxu0 0.0
        %1896 = vmatprep.subr.mxu0 0.0
        %1897 = vmatpush1.msra.mxu0 0.0
        %1898 = vmatprep.subr.mxu0 0.0
        %1899 = vmatpush1.msra.mxu0 0.0
        %1900 = vmatprep.subr.mxu0 0.0
        %1901 = vmatpush1.msra.mxu0 0.0
        %1902 = vmatprep.mubr.f32.mxu0 0.0
        %1903 = vmatmul.mubr.f32.gmra.mrb[0].mxu0 %v1827
        %v1904 = vpop.f32.mrb[0].mxu0
        %v1905 = vadd.f32 0.0, %v1904
        %v1906 = vpop.f32.mrb[0].mxu0
        %1907 = vmatprep.mubr.f32.mxu0 0.0
        %1908 = vmatmul.mubr.f32.gmra.mrb[0].mxu0 %v1830
        %v1909 = vpop.f32.mrb[0].mxu0
        %v1910 = vadd.f32 0.0, %v1909
        %v1911 = vpop.f32.mrb[0].mxu0
        %1912 = vmatprep.mubr.f32.mxu0 0.0
        %1913 = vmatmul.mubr.f32.gmra.mrb[0].mxu0 %v1833
        %v1914 = vpop.f32.mrb[0].mxu0
        %v1915 = vadd.f32 0.0, %v1914
        %v1916 = vpop.f32.mrb[0].mxu0
        %1917 = vmatprep.mubr.f32.mxu0 0.0
        %1918 = vmatmul.mubr.f32.gmra.mrb[0].mxu0 %v1836
        %v1919 = vpop.f32.mrb[0].mxu0
        %v1920 = vadd.f32 0.0, %v1919
        %v1921 = vpop.f32.mrb[0].mxu0
        %1922 = vdwg.mxu0
        %v1923 = vmax.f32 %v1905, 0.0
        %v1924 = vmax.f32 %v1910, 0.0
        %v1925 = vmax.f32 %v1915, 0.0
        %v1926 = vmax.f32 %v1920, 0.0
        %v1927 = vld [vmem:[%s186 + $0x80] sm:$0xff]
        %v1928 = vld [vmem:[%s186 + $0x88] sm:$0xff]
        %v1930 = vsel %vm1683, %v1923, 0
        %v1933 = vsel %vm1683, %v1924, 0
        %v1936 = vsel %vm1683, %v1925, 0
        %v1939 = vsel %vm1683, %v1926, 0
        %1941 = vmatprep.subr.mxu0 0.0
        %1942 = vmatpush1.msra.mxu0 %v1927
        %1943 = vmatprep.subr.mxu0 0.0
        %1944 = vmatpush1.msra.mxu0 %v1928
        %1945 = vmatprep.subr.mxu0 0.0
        %1946 = vmatpush1.msra.mxu0 0.0
        %1947 = vmatprep.subr.mxu0 0.0
        %1948 = vmatpush1.msra.mxu0 0.0
        %1949 = vmatprep.subr.mxu0 0.0
        %1950 = vmatpush1.msra.mxu0 0.0
        %1951 = vmatprep.subr.mxu0 0.0
        %1952 = vmatpush1.msra.mxu0 0.0
        %1953 = vmatprep.subr.mxu0 0.0
        %1954 = vmatpush1.msra.mxu0 0.0
        %1955 = vmatprep.subr.mxu0 0.0
        %1956 = vmatpush1.msra.mxu0 0.0
        %1957 = vmatprep.subr.mxu0 0.0
        %1958 = vmatpush1.msra.mxu0 0.0
        %1959 = vmatprep.subr.mxu0 0.0
        %1960 = vmatpush1.msra.mxu0 0.0
        %1961 = vmatprep.subr.mxu0 0.0
        %1962 = vmatpush1.msra.mxu0 0.0
        %1963 = vmatprep.subr.mxu0 0.0
        %1964 = vmatpush1.msra.mxu0 0.0
        %1965 = vmatprep.subr.mxu0 0.0
        %1966 = vmatpush1.msra.mxu0 0.0
        %1967 = vmatprep.subr.mxu0 0.0
        %1968 = vmatpush1.msra.mxu0 0.0
        %1969 = vmatprep.subr.mxu0 0.0
        %1970 = vmatpush1.msra.mxu0 0.0
        %1971 = vmatprep.subr.mxu0 0.0
        %1972 = vmatpush1.msra.mxu0 0.0
        %1973 = vmatprep.subr.mxu0 0.0
        %1974 = vmatpush1.msra.mxu0 0.0
        %1975 = vmatprep.subr.mxu0 0.0
        %1976 = vmatpush1.msra.mxu0 0.0
        %1977 = vmatprep.subr.mxu0 0.0
        %1978 = vmatpush1.msra.mxu0 0.0
        %1979 = vmatprep.subr.mxu0 0.0
        %1980 = vmatpush1.msra.mxu0 0.0
        %1981 = vmatprep.subr.mxu0 0.0
        %1982 = vmatpush1.msra.mxu0 0.0
        %1983 = vmatprep.subr.mxu0 0.0
        %1984 = vmatpush1.msra.mxu0 0.0
        %1985 = vmatprep.subr.mxu0 0.0
        %1986 = vmatpush1.msra.mxu0 0.0
        %1987 = vmatprep.subr.mxu0 0.0
        %1988 = vmatpush1.msra.mxu0 0.0
        %1989 = vmatprep.subr.mxu0 0.0
        %1990 = vmatpush1.msra.mxu0 0.0
        %1991 = vmatprep.subr.mxu0 0.0
        %1992 = vmatpush1.msra.mxu0 0.0
        %1993 = vmatprep.subr.mxu0 0.0
        %1994 = vmatpush1.msra.mxu0 0.0
        %1995 = vmatprep.subr.mxu0 0.0
        %1996 = vmatpush1.msra.mxu0 0.0
        %1997 = vmatprep.subr.mxu0 0.0
        %1998 = vmatpush1.msra.mxu0 0.0
        %1999 = vmatprep.subr.mxu0 0.0
        %2000 = vmatpush1.msra.mxu0 0.0
        %2001 = vmatprep.subr.mxu0 0.0
        %2002 = vmatpush1.msra.mxu0 0.0
        %2003 = vmatprep.subr.mxu0 0.0
        %2004 = vmatpush1.msra.mxu0 0.0
        %2005 = vmatprep.mubr.f32.mxu0 0.0
        %2006 = vmatmul.mubr.f32.gmra.mrb[0].mxu0 %v1930
        %v2007 = vpop.f32.mrb[0].mxu0
        %v2008 = vadd.f32 0.0, %v2007
        %v2009 = vpop.f32.mrb[0].mxu0
        %2010 = vmatprep.mubr.f32.mxu0 0.0
        %2011 = vmatmul.mubr.f32.gmra.mrb[0].mxu0 %v1933
        %v2012 = vpop.f32.mrb[0].mxu0
        %v2013 = vadd.f32 0.0, %v2012
        %v2014 = vpop.f32.mrb[0].mxu0
        %2015 = vmatprep.mubr.f32.mxu0 0.0
        %2016 = vmatmul.mubr.f32.gmra.mrb[0].mxu0 %v1936
        %v2017 = vpop.f32.mrb[0].mxu0
        %v2018 = vadd.f32 0.0, %v2017
        %v2019 = vpop.f32.mrb[0].mxu0
        %2020 = vmatprep.mubr.f32.mxu0 0.0
        %2021 = vmatmul.mubr.f32.gmra.mrb[0].mxu0 %v1939
        %v2022 = vpop.f32.mrb[0].mxu0
        %v2023 = vadd.f32 0.0, %v2022
        %v2024 = vpop.f32.mrb[0].mxu0
        %2025 = vdwg.mxu0
        %v2026 = vand.u32 2147483647, %v2008
        %v2027 = vand.u32 2147483647, %v2013
        %v2028 = vand.u32 2147483647, %v2018
        %v2029 = vand.u32 2147483647, %v2023
        %v2030 = vsub.f32 0.0, %v2026
        %v2031 = vsub.f32 0.0, %v2027
        %v2032 = vsub.f32 0.0, %v2028
        %v2033 = vsub.f32 0.0, %v2029
        %v2034 = vmul.f32 %v2030, 1.442695
        %v2035 = vpow.pop %v2034
        %v2036 = vmul.f32 %v2031, 1.442695
        %v2037 = vpow.pop %v2036
        %v2038 = vmul.f32 %v2032, 1.442695
        %v2039 = vpow.pop %v2038
        %v2040 = vmul.f32 %v2033, 1.442695
        %v2041 = vpow.pop %v2040
        %vm2042 = vcmp.ge.f32.partialorder %v2008, 0.0
        %vm2043 = vcmp.ge.f32.partialorder %v2013, 0.0
        %vm2044 = vcmp.ge.f32.partialorder %v2018, 0.0
        %vm2045 = vcmp.ge.f32.partialorder %v2023, 0.0
        %v2046 = vadd.f32 %v2035, 1.0
        %v2047 = vadd.f32 %v2037, 1.0
        %v2048 = vadd.f32 %v2039, 1.0
        %v2049 = vadd.f32 %v2041, 1.0
        %v2050 = vrcp.pop %v2046
        %v2051 = vmul.f32 1.0, %v2050
        %v2052 = vrcp.pop %v2047
        %v2053 = vmul.f32 1.0, %v2052
        %v2054 = vrcp.pop %v2048
        %v2055 = vmul.f32 1.0, %v2054
        %v2056 = vrcp.pop %v2049
        %v2057 = vmul.f32 1.0, %v2056
        %v2058 = vmul.f32 %v2035, %v2050
        %v2059 = vmul.f32 %v2037, %v2052
        %v2060 = vmul.f32 %v2039, %v2054
        %v2061 = vmul.f32 %v2041, %v2056
        %v2062 = vsel %vm2042, %v2051, %v2058
        %v2063 = vsel %vm2043, %v2053, %v2059
        %v2064 = vsel %vm2044, %v2055, %v2060
        %v2065 = vsel %vm2045, %v2057, %v2061
        %v2066 = vmul.f32 %v215, %v2062
        %v2067 = vmul.f32 %v216, %v2063
        %v2068 = vmul.f32 %v217, %v2064
        %v2069 = vmul.f32 %v218, %v2065
        %v2070 = vld [vmem:[%s186 + $0x20] sm:$0xff]
        %v2071 = vld [vmem:[%s186 + $0x28] sm:$0xff]
        %v2072 = vld [vmem:[%s186 + $0x30] sm:$0xff]
        %v2073 = vld [vmem:[%s186 + $0x38] sm:$0xff]
        %v2074 = vld [vmem:[%s186 + $0xd3] sm:$0x1]
        %v2075 = vlaneseq
        %v2076 = vshrl.u32 %v2075, 7
        %v2077 = vsub.s32 0, %v2076
        %v2078 = vrot.slane %v2074, %v2077
        %v2080 = vsel %vm223, %v1820, 0
        %v2083 = vsel %vm223, %v1821, 0
        %2085 = vmatprep.subr.mxu0 0.0
        %2086 = vmatpush1.msra.mxu0 %v2070
        %2087 = vmatprep.subr.mxu0 0.0
        %2088 = vmatpush1.msra.mxu0 %v2071
        %2089 = vmatprep.subr.mxu0 0.0
        %2090 = vmatpush1.msra.mxu0 %v2072
        %2091 = vmatprep.subr.mxu0 0.0
        %2092 = vmatpush1.msra.mxu0 %v2073
        %2093 = vmatprep.subr.mxu0 0.0
        %2094 = vmatpush1.msra.mxu0 0.0
        %2095 = vmatprep.subr.mxu0 0.0
        %2096 = vmatpush1.msra.mxu0 0.0
        %2097 = vmatprep.subr.mxu0 0.0
        %2098 = vmatpush1.msra.mxu0 0.0
        %2099 = vmatprep.subr.mxu0 0.0
        %2100 = vmatpush1.msra.mxu0 0.0
        %2101 = vmatprep.subr.mxu0 0.0
        %2102 = vmatpush1.msra.mxu0 0.0
        %2103 = vmatprep.subr.mxu0 0.0
        %2104 = vmatpush1.msra.mxu0 0.0
        %2105 = vmatprep.subr.mxu0 0.0
        %2106 = vmatpush1.msra.mxu0 0.0
        %2107 = vmatprep.subr.mxu0 0.0
        %2108 = vmatpush1.msra.mxu0 0.0
        %2109 = vmatprep.subr.mxu0 0.0
        %2110 = vmatpush1.msra.mxu0 0.0
        %2111 = vmatprep.subr.mxu0 0.0
        %2112 = vmatpush1.msra.mxu0 0.0
        %2113 = vmatprep.subr.mxu0 0.0
        %2114 = vmatpush1.msra.mxu0 0.0
        %2115 = vmatprep.subr.mxu0 0.0
        %2116 = vmatpush1.msra.mxu0 0.0
        %2117 = vmatprep.subr.mxu0 0.0
        %2118 = vmatpush1.msra.mxu0 0.0
        %2119 = vmatprep.subr.mxu0 0.0
        %2120 = vmatpush1.msra.mxu0 0.0
        %2121 = vmatprep.subr.mxu0 0.0
        %2122 = vmatpush1.msra.mxu0 0.0
        %2123 = vmatprep.subr.mxu0 0.0
        %2124 = vmatpush1.msra.mxu0 0.0
        %2125 = vmatprep.subr.mxu0 0.0
        %2126 = vmatpush1.msra.mxu0 0.0
        %2127 = vmatprep.subr.mxu0 0.0
        %2128 = vmatpush1.msra.mxu0 0.0
        %2129 = vmatprep.subr.mxu0 0.0
        %2130 = vmatpush1.msra.mxu0 0.0
        %2131 = vmatprep.subr.mxu0 0.0
        %2132 = vmatpush1.msra.mxu0 0.0
        %2133 = vmatprep.subr.mxu0 0.0
        %2134 = vmatpush1.msra.mxu0 0.0
        %2135 = vmatprep.subr.mxu0 0.0
        %2136 = vmatpush1.msra.mxu0 0.0
        %2137 = vmatprep.subr.mxu0 0.0
        %2138 = vmatpush1.msra.mxu0 0.0
        %2139 = vmatprep.subr.mxu0 0.0
        %2140 = vmatpush1.msra.mxu0 0.0
        %2141 = vmatprep.subr.mxu0 0.0
        %2142 = vmatpush1.msra.mxu0 0.0
        %2143 = vmatprep.subr.mxu0 0.0
        %2144 = vmatpush1.msra.mxu0 0.0
        %2145 = vmatprep.subr.mxu0 0.0
        %2146 = vmatpush1.msra.mxu0 0.0
        %2147 = vmatprep.subr.mxu0 0.0
        %2148 = vmatpush1.msra.mxu0 0.0
        %2149 = vmatprep.mubr.f32.mxu0 0.0
        %2150 = vmatmul.mubr.f32.gmra.mrb[0].mxu0 %v2080
        %v2151 = vpop.f32.mrb[0].mxu0
        %v2152 = vadd.f32 %v2078, %v2151
        %v2153 = vpop.f32.mrb[0].mxu0
        %2154 = vmatprep.mubr.f32.mxu0 0.0
        %2155 = vmatmul.mubr.f32.gmra.mrb[0].mxu0 %v2083
        %v2156 = vpop.f32.mrb[0].mxu0
        %v2157 = vadd.f32 %v2078, %v2156
        %v2158 = vpop.f32.mrb[0].mxu0
        %2159 = vdwg.mxu0
        %2164 = vrot.lane.b32.xlu0 %v2070, 96
        %v2165 = vpop.permute.xlu0 %2164
        %2166 = vrot.lane.b32.xlu0 %v2071, 96
        %v2167 = vpop.permute.xlu0 %2166
        %2168 = vrot.lane.b32.xlu0 %v2072, 96
        %v2169 = vpop.permute.xlu0 %2168
        %2170 = vrot.lane.b32.xlu0 %v2073, 96
        %v2171 = vpop.permute.xlu0 %2170
        %v2177 = vsel %vm223, %v2066, 0
        %v2180 = vsel %vm223, %v2067, 0
        %v2183 = vsel %vm223, %v2068, 0
        %v2186 = vsel %vm223, %v2069, 0
        %2188 = vmatprep.subr.mxu0 0.0
        %2189 = vmatpush1.msra.mxu0 %v2165
        %2190 = vmatprep.subr.mxu0 0.0
        %2191 = vmatpush1.msra.mxu0 %v2167
        %2192 = vmatprep.subr.mxu0 0.0
        %2193 = vmatpush1.msra.mxu0 %v2169
        %2194 = vmatprep.subr.mxu0 0.0
        %2195 = vmatpush1.msra.mxu0 %v2171
        %2196 = vmatprep.subr.mxu0 0.0
        %2197 = vmatpush1.msra.mxu0 0.0
        %2198 = vmatprep.subr.mxu0 0.0
        %2199 = vmatpush1.msra.mxu0 0.0
        %2200 = vmatprep.subr.mxu0 0.0
        %2201 = vmatpush1.msra.mxu0 0.0
        %2202 = vmatprep.subr.mxu0 0.0
        %2203 = vmatpush1.msra.mxu0 0.0
        %2204 = vmatprep.subr.mxu0 0.0
        %2205 = vmatpush1.msra.mxu0 0.0
        %2206 = vmatprep.subr.mxu0 0.0
        %2207 = vmatpush1.msra.mxu0 0.0
        %2208 = vmatprep.subr.mxu0 0.0
        %2209 = vmatpush1.msra.mxu0 0.0
        %2210 = vmatprep.subr.mxu0 0.0
        %2211 = vmatpush1.msra.mxu0 0.0
        %2212 = vmatprep.subr.mxu0 0.0
        %2213 = vmatpush1.msra.mxu0 0.0
        %2214 = vmatprep.subr.mxu0 0.0
        %2215 = vmatpush1.msra.mxu0 0.0
        %2216 = vmatprep.subr.mxu0 0.0
        %2217 = vmatpush1.msra.mxu0 0.0
        %2218 = vmatprep.subr.mxu0 0.0
        %2219 = vmatpush1.msra.mxu0 0.0
        %2220 = vmatprep.subr.mxu0 0.0
        %2221 = vmatpush1.msra.mxu0 0.0
        %2222 = vmatprep.subr.mxu0 0.0
        %2223 = vmatpush1.msra.mxu0 0.0
        %2224 = vmatprep.subr.mxu0 0.0
        %2225 = vmatpush1.msra.mxu0 0.0
        %2226 = vmatprep.subr.mxu0 0.0
        %2227 = vmatpush1.msra.mxu0 0.0
        %2228 = vmatprep.subr.mxu0 0.0
        %2229 = vmatpush1.msra.mxu0 0.0
        %2230 = vmatprep.subr.mxu0 0.0
        %2231 = vmatpush1.msra.mxu0 0.0
        %2232 = vmatprep.subr.mxu0 0.0
        %2233 = vmatpush1.msra.mxu0 0.0
        %2234 = vmatprep.subr.mxu0 0.0
        %2235 = vmatpush1.msra.mxu0 0.0
        %2236 = vmatprep.subr.mxu0 0.0
        %2237 = vmatpush1.msra.mxu0 0.0
        %2238 = vmatprep.subr.mxu0 0.0
        %2239 = vmatpush1.msra.mxu0 0.0
        %2240 = vmatprep.subr.mxu0 0.0
        %2241 = vmatpush1.msra.mxu0 0.0
        %2242 = vmatprep.subr.mxu0 0.0
        %2243 = vmatpush1.msra.mxu0 0.0
        %2244 = vmatprep.subr.mxu0 0.0
        %2245 = vmatpush1.msra.mxu0 0.0
        %2246 = vmatprep.subr.mxu0 0.0
        %2247 = vmatpush1.msra.mxu0 0.0
        %2248 = vmatprep.subr.mxu0 0.0
        %2249 = vmatpush1.msra.mxu0 0.0
        %2250 = vmatprep.subr.mxu0 0.0
        %2251 = vmatpush1.msra.mxu0 0.0
        %2252 = vmatprep.mubr.f32.mxu0 0.0
        %2253 = vmatmul.mubr.f32.gmra.mrb[0].mxu0 %v2177
        %v2254 = vpop.f32.mrb[0].mxu0
        %v2255 = vadd.f32 0.0, %v2254
        %v2256 = vpop.f32.mrb[0].mxu0
        %2257 = vmatprep.mubr.f32.mxu0 0.0
        %2258 = vmatmul.mubr.f32.gmra.mrb[0].mxu0 %v2180
        %v2259 = vpop.f32.mrb[0].mxu0
        %v2260 = vadd.f32 0.0, %v2259
        %v2261 = vpop.f32.mrb[0].mxu0
        %2262 = vmatprep.mubr.f32.mxu0 0.0
        %2263 = vmatmul.mubr.f32.gmra.mrb[0].mxu0 %v2183
        %v2264 = vpop.f32.mrb[0].mxu0
        %v2265 = vadd.f32 0.0, %v2264
        %v2266 = vpop.f32.mrb[0].mxu0
        %2267 = vmatprep.mubr.f32.mxu0 0.0
        %2268 = vmatmul.mubr.f32.gmra.mrb[0].mxu0 %v2186
        %v2269 = vpop.f32.mrb[0].mxu0
        %v2270 = vadd.f32 0.0, %v2269
        %v2271 = vpop.f32.mrb[0].mxu0
        %2272 = vdwg.mxu0
        %v2273 = vld [vmem:[%s186 + $0xd4] sm:$0x1]
        %v2274 = vlaneseq
        %v2275 = vshrl.u32 %v2274, 7
        %v2276 = vsub.s32 0, %v2275
        %v2277 = vrot.slane %v2273, %v2276
        %v2278 = vadd.f32 %v2255, %v2277
        %v2279 = vadd.f32 %v2260, %v2277
        %v2280 = vadd.f32 %v2265, %v2277
        %v2281 = vadd.f32 %v2270, %v2277
        %v2282 = vld [vmem:[%s186 + $0xd5] sm:$0x1]
        %v2283 = vlaneseq
        %v2284 = vshrl.u32 %v2283, 7
        %v2285 = vsub.s32 0, %v2284
        %v2286 = vrot.slane %v2282, %v2285
        %2288 = vrot.lane.b32.xlu0 %v2286, 32
        %v2289 = vpop.permute.xlu0 %2288
        %v2291 = vadd.f32 %v2255, %v2289
        %v2292 = vadd.f32 %v2260, %v2289
        %v2293 = vadd.f32 %v2265, %v2289
        %v2294 = vadd.f32 %v2270, %v2289
        %v2296 = vsel %vm337, %v2152, 0
        %v2299 = vsel %vm337, %v2278, 0
        %v2302 = vsel %vm337, %v2279, 0
        %2304 = vmatprep.subr.mxu0 0.0
        %2305 = vmatpush1.xpose.msra.mxu0 %v2299
        %2306 = vmatprep.subr.mxu0 0.0
        %2307 = vmatpush1.xpose.msra.mxu0 %v2302
        %2308 = vmatprep.subr.mxu0 0.0
        %2309 = vmatpush1.xpose.msra.mxu0 0.0
        %2310 = vmatprep.subr.mxu0 0.0
        %2311 = vmatpush1.xpose.msra.mxu0 0.0
        %2312 = vmatprep.subr.mxu0 0.0
        %2313 = vmatpush1.xpose.msra.mxu0 0.0
        %2314 = vmatprep.subr.mxu0 0.0
        %2315 = vmatpush1.xpose.msra.mxu0 0.0
        %2316 = vmatprep.subr.mxu0 0.0
        %2317 = vmatpush1.xpose.msra.mxu0 0.0
        %2318 = vmatprep.subr.mxu0 0.0
        %2319 = vmatpush1.xpose.msra.mxu0 0.0
        %2320 = vmatprep.subr.mxu0 0.0
        %2321 = vmatpush1.xpose.msra.mxu0 0.0
        %2322 = vmatprep.subr.mxu0 0.0
        %2323 = vmatpush1.xpose.msra.mxu0 0.0
        %2324 = vmatprep.subr.mxu0 0.0
        %2325 = vmatpush1.xpose.msra.mxu0 0.0
        %2326 = vmatprep.subr.mxu0 0.0
        %2327 = vmatpush1.xpose.msra.mxu0 0.0
        %2328 = vmatprep.subr.mxu0 0.0
        %2329 = vmatpush1.xpose.msra.mxu0 0.0
        %2330 = vmatprep.subr.mxu0 0.0
        %2331 = vmatpush1.xpose.msra.mxu0 0.0
        %2332 = vmatprep.subr.mxu0 0.0
        %2333 = vmatpush1.xpose.msra.mxu0 0.0
        %2334 = vmatprep.subr.mxu0 0.0
        %2335 = vmatpush1.xpose.msra.mxu0 0.0
        %2336 = vmatprep.subr.mxu0 0.0
        %2337 = vmatpush1.xpose.msra.mxu0 0.0
        %2338 = vmatprep.subr.mxu0 0.0
        %2339 = vmatpush1.xpose.msra.mxu0 0.0
        %2340 = vmatprep.subr.mxu0 0.0
        %2341 = vmatpush1.xpose.msra.mxu0 0.0
        %2342 = vmatprep.subr.mxu0 0.0
        %2343 = vmatpush1.xpose.msra.mxu0 0.0
        %2344 = vmatprep.subr.mxu0 0.0
        %2345 = vmatpush1.xpose.msra.mxu0 0.0
        %2346 = vmatprep.subr.mxu0 0.0
        %2347 = vmatpush1.xpose.msra.mxu0 0.0
        %2348 = vmatprep.subr.mxu0 0.0
        %2349 = vmatpush1.xpose.msra.mxu0 0.0
        %2350 = vmatprep.subr.mxu0 0.0
        %2351 = vmatpush1.xpose.msra.mxu0 0.0
        %2352 = vmatprep.subr.mxu0 0.0
        %2353 = vmatpush1.xpose.msra.mxu0 0.0
        %2354 = vmatprep.subr.mxu0 0.0
        %2355 = vmatpush1.xpose.msra.mxu0 0.0
        %2356 = vmatprep.subr.mxu0 0.0
        %2357 = vmatpush1.xpose.msra.mxu0 0.0
        %2358 = vmatprep.subr.mxu0 0.0
        %2359 = vmatpush1.xpose.msra.mxu0 0.0
        %2360 = vmatprep.subr.mxu0 0.0
        %2361 = vmatpush1.xpose.msra.mxu0 0.0
        %2362 = vmatprep.subr.mxu0 0.0
        %2363 = vmatpush1.xpose.msra.mxu0 0.0
        %2364 = vmatprep.subr.mxu0 0.0
        %2365 = vmatpush1.xpose.msra.mxu0 0.0
        %2366 = vmatprep.subr.mxu0 0.0
        %2367 = vmatpush1.xpose.msra.mxu0 0.0
        %2368 = vmatprep.mubr.f32.mxu0 0.0
        %2369 = vmatmul.mubr.f32.gmra.mrb[0].mxu0 %v2296
        %v2370 = vpop.f32.mrb[0].mxu0
        %v2371 = vadd.f32 0.0, %v2370
        %v2372 = vpop.f32.mrb[0].mxu0
        %2373 = vdwg.mxu0
        %v2375 = vsel %vm337, %v2157, 0
        %v2378 = vsel %vm337, %v2280, 0
        %v2381 = vsel %vm337, %v2281, 0
        %2383 = vmatprep.subr.mxu0 0.0
        %2384 = vmatpush1.xpose.msra.mxu0 %v2378
        %2385 = vmatprep.subr.mxu0 0.0
        %2386 = vmatpush1.xpose.msra.mxu0 %v2381
        %2387 = vmatprep.subr.mxu0 0.0
        %2388 = vmatpush1.xpose.msra.mxu0 0.0
        %2389 = vmatprep.subr.mxu0 0.0
        %2390 = vmatpush1.xpose.msra.mxu0 0.0
        %2391 = vmatprep.subr.mxu0 0.0
        %2392 = vmatpush1.xpose.msra.mxu0 0.0
        %2393 = vmatprep.subr.mxu0 0.0
        %2394 = vmatpush1.xpose.msra.mxu0 0.0
        %2395 = vmatprep.subr.mxu0 0.0
        %2396 = vmatpush1.xpose.msra.mxu0 0.0
        %2397 = vmatprep.subr.mxu0 0.0
        %2398 = vmatpush1.xpose.msra.mxu0 0.0
        %2399 = vmatprep.subr.mxu0 0.0
        %2400 = vmatpush1.xpose.msra.mxu0 0.0
        %2401 = vmatprep.subr.mxu0 0.0
        %2402 = vmatpush1.xpose.msra.mxu0 0.0
        %2403 = vmatprep.subr.mxu0 0.0
        %2404 = vmatpush1.xpose.msra.mxu0 0.0
        %2405 = vmatprep.subr.mxu0 0.0
        %2406 = vmatpush1.xpose.msra.mxu0 0.0
        %2407 = vmatprep.subr.mxu0 0.0
        %2408 = vmatpush1.xpose.msra.mxu0 0.0
        %2409 = vmatprep.subr.mxu0 0.0
        %2410 = vmatpush1.xpose.msra.mxu0 0.0
        %2411 = vmatprep.subr.mxu0 0.0
        %2412 = vmatpush1.xpose.msra.mxu0 0.0
        %2413 = vmatprep.subr.mxu0 0.0
        %2414 = vmatpush1.xpose.msra.mxu0 0.0
        %2415 = vmatprep.subr.mxu0 0.0
        %2416 = vmatpush1.xpose.msra.mxu0 0.0
        %2417 = vmatprep.subr.mxu0 0.0
        %2418 = vmatpush1.xpose.msra.mxu0 0.0
        %2419 = vmatprep.subr.mxu0 0.0
        %2420 = vmatpush1.xpose.msra.mxu0 0.0
        %2421 = vmatprep.subr.mxu0 0.0
        %2422 = vmatpush1.xpose.msra.mxu0 0.0
        %2423 = vmatprep.subr.mxu0 0.0
        %2424 = vmatpush1.xpose.msra.mxu0 0.0
        %2425 = vmatprep.subr.mxu0 0.0
        %2426 = vmatpush1.xpose.msra.mxu0 0.0
        %2427 = vmatprep.subr.mxu0 0.0
        %2428 = vmatpush1.xpose.msra.mxu0 0.0
        %2429 = vmatprep.subr.mxu0 0.0
        %2430 = vmatpush1.xpose.msra.mxu0 0.0
        %2431 = vmatprep.subr.mxu0 0.0
        %2432 = vmatpush1.xpose.msra.mxu0 0.0
        %2433 = vmatprep.subr.mxu0 0.0
        %2434 = vmatpush1.xpose.msra.mxu0 0.0
        %2435 = vmatprep.subr.mxu0 0.0
        %2436 = vmatpush1.xpose.msra.mxu0 0.0
        %2437 = vmatprep.subr.mxu0 0.0
        %2438 = vmatpush1.xpose.msra.mxu0 0.0
        %2439 = vmatprep.subr.mxu0 0.0
        %2440 = vmatpush1.xpose.msra.mxu0 0.0
        %2441 = vmatprep.subr.mxu0 0.0
        %2442 = vmatpush1.xpose.msra.mxu0 0.0
        %2443 = vmatprep.subr.mxu0 0.0
        %2444 = vmatpush1.xpose.msra.mxu0 0.0
        %2445 = vmatprep.subr.mxu0 0.0
        %2446 = vmatpush1.xpose.msra.mxu0 0.0
        %2447 = vmatprep.mubr.f32.mxu0 0.0
        %2448 = vmatmul.mubr.f32.gmra.mrb[0].mxu0 %v2375
        %v2449 = vpop.f32.mrb[0].mxu0
        %v2450 = vadd.f32 0.0, %v2449
        %v2451 = vpop.f32.mrb[0].mxu0
        %2452 = vdwg.mxu0
        %v2453 = vsel %vm1683, %v2371, -inf
        %2454 = vmax.xlane.f32.xlu0 %v2453
        %v2455 = vpop.xlane.xlu0 %2454
        %v2456 = vsel %vm1683, %v2450, -inf
        %2457 = vmax.xlane.f32.xlu0 %v2456
        %v2458 = vpop.xlane.xlu0 %2457
        %v2459 = vsub.f32 %v2371, %v2455
        %v2460 = vsub.f32 %v2450, %v2458
        %v2461 = vmul.f32 %v2459, 1.442695
        %v2462 = vpow.pop %v2461
        %v2463 = vmul.f32 %v2460, 1.442695
        %v2464 = vpow.pop %v2463
        %v2465 = vsel %vm1683, %v2462, 0.0
        %2466 = vadd.xlane.f32.xlu0 %v2465
        %v2467 = vpop.xlane.xlu0 %2466
        %v2468 = vsel %vm1683, %v2464, 0.0
        %2469 = vadd.xlane.f32.xlu0 %v2468
        %v2470 = vpop.xlane.xlu0 %2469
        %v2471 = vrcp.pop %v2467
        %v2472 = vmul.f32 %v2462, %v2471
        %v2473 = vrcp.pop %v2470
        %v2474 = vmul.f32 %v2464, %v2473
        %2477 = vrot.lane.b32.xlu0 %v2291, 96
        %v2478 = vpop.permute.xlu0 %2477
        %2479 = vrot.lane.b32.xlu0 %v2292, 96
        %v2480 = vpop.permute.xlu0 %2479
        %v2484 = vsel %vm1683, %v2472, 0
        %2486 = vmatprep.subr.mxu0 0.0
        %2487 = vmatpush1.msra.mxu0 %v2478
        %2488 = vmatprep.subr.mxu0 0.0
        %2489 = vmatpush1.msra.mxu0 %v2480
        %2490 = vmatprep.subr.mxu0 0.0
        %2491 = vmatpush1.msra.mxu0 0.0
        %2492 = vmatprep.subr.mxu0 0.0
        %2493 = vmatpush1.msra.mxu0 0.0
        %2494 = vmatprep.subr.mxu0 0.0
        %2495 = vmatpush1.msra.mxu0 0.0
        %2496 = vmatprep.subr.mxu0 0.0
        %2497 = vmatpush1.msra.mxu0 0.0
        %2498 = vmatprep.subr.mxu0 0.0
        %2499 = vmatpush1.msra.mxu0 0.0
        %2500 = vmatprep.subr.mxu0 0.0
        %2501 = vmatpush1.msra.mxu0 0.0
        %2502 = vmatprep.subr.mxu0 0.0
        %2503 = vmatpush1.msra.mxu0 0.0
        %2504 = vmatprep.subr.mxu0 0.0
        %2505 = vmatpush1.msra.mxu0 0.0
        %2506 = vmatprep.subr.mxu0 0.0
        %2507 = vmatpush1.msra.mxu0 0.0
        %2508 = vmatprep.subr.mxu0 0.0
        %2509 = vmatpush1.msra.mxu0 0.0
        %2510 = vmatprep.subr.mxu0 0.0
        %2511 = vmatpush1.msra.mxu0 0.0
        %2512 = vmatprep.subr.mxu0 0.0
        %2513 = vmatpush1.msra.mxu0 0.0
        %2514 = vmatprep.subr.mxu0 0.0
        %2515 = vmatpush1.msra.mxu0 0.0
        %2516 = vmatprep.subr.mxu0 0.0
        %2517 = vmatpush1.msra.mxu0 0.0
        %2518 = vmatprep.subr.mxu0 0.0
        %2519 = vmatpush1.msra.mxu0 0.0
        %2520 = vmatprep.subr.mxu0 0.0
        %2521 = vmatpush1.msra.mxu0 0.0
        %2522 = vmatprep.subr.mxu0 0.0
        %2523 = vmatpush1.msra.mxu0 0.0
        %2524 = vmatprep.subr.mxu0 0.0
        %2525 = vmatpush1.msra.mxu0 0.0
        %2526 = vmatprep.subr.mxu0 0.0
        %2527 = vmatpush1.msra.mxu0 0.0
        %2528 = vmatprep.subr.mxu0 0.0
        %2529 = vmatpush1.msra.mxu0 0.0
        %2530 = vmatprep.subr.mxu0 0.0
        %2531 = vmatpush1.msra.mxu0 0.0
        %2532 = vmatprep.subr.mxu0 0.0
        %2533 = vmatpush1.msra.mxu0 0.0
        %2534 = vmatprep.subr.mxu0 0.0
        %2535 = vmatpush1.msra.mxu0 0.0
        %2536 = vmatprep.subr.mxu0 0.0
        %2537 = vmatpush1.msra.mxu0 0.0
        %2538 = vmatprep.subr.mxu0 0.0
        %2539 = vmatpush1.msra.mxu0 0.0
        %2540 = vmatprep.subr.mxu0 0.0
        %2541 = vmatpush1.msra.mxu0 0.0
        %2542 = vmatprep.subr.mxu0 0.0
        %2543 = vmatpush1.msra.mxu0 0.0
        %2544 = vmatprep.subr.mxu0 0.0
        %2545 = vmatpush1.msra.mxu0 0.0
        %2546 = vmatprep.subr.mxu0 0.0
        %2547 = vmatpush1.msra.mxu0 0.0
        %2548 = vmatprep.subr.mxu0 0.0
        %2549 = vmatpush1.msra.mxu0 0.0
        %2550 = vmatprep.mubr.f32.mxu0 0.0
        %2551 = vmatmul.mubr.f32.gmra.mrb[0].mxu0 %v2484
        %v2552 = vpop.f32.mrb[0].mxu0
        %v2553 = vadd.f32 0.0, %v2552
        %v2554 = vpop.f32.mrb[0].mxu0
        %2555 = vdwg.mxu0
        %2558 = vrot.lane.b32.xlu0 %v2293, 96
        %v2559 = vpop.permute.xlu0 %2558
        %2560 = vrot.lane.b32.xlu0 %v2294, 96
        %v2561 = vpop.permute.xlu0 %2560
        %v2565 = vsel %vm1683, %v2474, 0
        %2567 = vmatprep.subr.mxu0 0.0
        %2568 = vmatpush1.msra.mxu0 %v2559
        %2569 = vmatprep.subr.mxu0 0.0
        %2570 = vmatpush1.msra.mxu0 %v2561
        %2571 = vmatprep.subr.mxu0 0.0
        %2572 = vmatpush1.msra.mxu0 0.0
        %2573 = vmatprep.subr.mxu0 0.0
        %2574 = vmatpush1.msra.mxu0 0.0
        %2575 = vmatprep.subr.mxu0 0.0
        %2576 = vmatpush1.msra.mxu0 0.0
        %2577 = vmatprep.subr.mxu0 0.0
        %2578 = vmatpush1.msra.mxu0 0.0
        %2579 = vmatprep.subr.mxu0 0.0
        %2580 = vmatpush1.msra.mxu0 0.0
        %2581 = vmatprep.subr.mxu0 0.0
        %2582 = vmatpush1.msra.mxu0 0.0
        %2583 = vmatprep.subr.mxu0 0.0
        %2584 = vmatpush1.msra.mxu0 0.0
        %2585 = vmatprep.subr.mxu0 0.0
        %2586 = vmatpush1.msra.mxu0 0.0
        %2587 = vmatprep.subr.mxu0 0.0
        %2588 = vmatpush1.msra.mxu0 0.0
        %2589 = vmatprep.subr.mxu0 0.0
        %2590 = vmatpush1.msra.mxu0 0.0
        %2591 = vmatprep.subr.mxu0 0.0
        %2592 = vmatpush1.msra.mxu0 0.0
        %2593 = vmatprep.subr.mxu0 0.0
        %2594 = vmatpush1.msra.mxu0 0.0
        %2595 = vmatprep.subr.mxu0 0.0
        %2596 = vmatpush1.msra.mxu0 0.0
        %2597 = vmatprep.subr.mxu0 0.0
        %2598 = vmatpush1.msra.mxu0 0.0
        %2599 = vmatprep.subr.mxu0 0.0
        %2600 = vmatpush1.msra.mxu0 0.0
        %2601 = vmatprep.subr.mxu0 0.0
        %2602 = vmatpush1.msra.mxu0 0.0
        %2603 = vmatprep.subr.mxu0 0.0
        %2604 = vmatpush1.msra.mxu0 0.0
        %2605 = vmatprep.subr.mxu0 0.0
        %2606 = vmatpush1.msra.mxu0 0.0
        %2607 = vmatprep.subr.mxu0 0.0
        %2608 = vmatpush1.msra.mxu0 0.0
        %2609 = vmatprep.subr.mxu0 0.0
        %2610 = vmatpush1.msra.mxu0 0.0
        %2611 = vmatprep.subr.mxu0 0.0
        %2612 = vmatpush1.msra.mxu0 0.0
        %2613 = vmatprep.subr.mxu0 0.0
        %2614 = vmatpush1.msra.mxu0 0.0
        %2615 = vmatprep.subr.mxu0 0.0
        %2616 = vmatpush1.msra.mxu0 0.0
        %2617 = vmatprep.subr.mxu0 0.0
        %2618 = vmatpush1.msra.mxu0 0.0
        %2619 = vmatprep.subr.mxu0 0.0
        %2620 = vmatpush1.msra.mxu0 0.0
        %2621 = vmatprep.subr.mxu0 0.0
        %2622 = vmatpush1.msra.mxu0 0.0
        %2623 = vmatprep.subr.mxu0 0.0
        %2624 = vmatpush1.msra.mxu0 0.0
        %2625 = vmatprep.subr.mxu0 0.0
        %2626 = vmatpush1.msra.mxu0 0.0
        %2627 = vmatprep.subr.mxu0 0.0
        %2628 = vmatpush1.msra.mxu0 0.0
        %2629 = vmatprep.subr.mxu0 0.0
        %2630 = vmatpush1.msra.mxu0 0.0
        %2631 = vmatprep.mubr.f32.mxu0 0.0
        %2632 = vmatmul.mubr.f32.gmra.mrb[0].mxu0 %v2565
        %v2633 = vpop.f32.mrb[0].mxu0
        %v2634 = vadd.f32 0.0, %v2633
        %v2635 = vpop.f32.mrb[0].mxu0
        %2636 = vdwg.mxu0
        %2637 = vrot.lane.b32.xlu0 %v2152, 120
        %v2638 = vpop.permute.xlu0 %2637
        %2639 = vrot.lane.b32.xlu0 %v2278, 120
        %v2640 = vpop.permute.xlu0 %2639
        %2641 = vrot.lane.b32.xlu0 %v2279, 120
        %v2642 = vpop.permute.xlu0 %2641
        %v2643 = vsel %vm337, %v2638, 0
        %v2645 = vsel %vm337, %v2640, 0
        %v2647 = vsel %vm337, %v2642, 0
        %2649 = vmatprep.subr.mxu0 0.0
        %2650 = vmatpush1.xpose.msra.mxu0 %v2645
        %2651 = vmatprep.subr.mxu0 0.0
        %2652 = vmatpush1.xpose.msra.mxu0 %v2647
        %2653 = vmatprep.subr.mxu0 0.0
        %2654 = vmatpush1.xpose.msra.mxu0 0.0
        %2655 = vmatprep.subr.mxu0 0.0
        %2656 = vmatpush1.xpose.msra.mxu0 0.0
        %2657 = vmatprep.subr.mxu0 0.0
        %2658 = vmatpush1.xpose.msra.mxu0 0.0
        %2659 = vmatprep.subr.mxu0 0.0
        %2660 = vmatpush1.xpose.msra.mxu0 0.0
        %2661 = vmatprep.subr.mxu0 0.0
        %2662 = vmatpush1.xpose.msra.mxu0 0.0
        %2663 = vmatprep.subr.mxu0 0.0
        %2664 = vmatpush1.xpose.msra.mxu0 0.0
        %2665 = vmatprep.subr.mxu0 0.0
        %2666 = vmatpush1.xpose.msra.mxu0 0.0
        %2667 = vmatprep.subr.mxu0 0.0
        %2668 = vmatpush1.xpose.msra.mxu0 0.0
        %2669 = vmatprep.subr.mxu0 0.0
        %2670 = vmatpush1.xpose.msra.mxu0 0.0
        %2671 = vmatprep.subr.mxu0 0.0
        %2672 = vmatpush1.xpose.msra.mxu0 0.0
        %2673 = vmatprep.subr.mxu0 0.0
        %2674 = vmatpush1.xpose.msra.mxu0 0.0
        %2675 = vmatprep.subr.mxu0 0.0
        %2676 = vmatpush1.xpose.msra.mxu0 0.0
        %2677 = vmatprep.subr.mxu0 0.0
        %2678 = vmatpush1.xpose.msra.mxu0 0.0
        %2679 = vmatprep.subr.mxu0 0.0
        %2680 = vmatpush1.xpose.msra.mxu0 0.0
        %2681 = vmatprep.subr.mxu0 0.0
        %2682 = vmatpush1.xpose.msra.mxu0 0.0
        %2683 = vmatprep.subr.mxu0 0.0
        %2684 = vmatpush1.xpose.msra.mxu0 0.0
        %2685 = vmatprep.subr.mxu0 0.0
        %2686 = vmatpush1.xpose.msra.mxu0 0.0
        %2687 = vmatprep.subr.mxu0 0.0
        %2688 = vmatpush1.xpose.msra.mxu0 0.0
        %2689 = vmatprep.subr.mxu0 0.0
        %2690 = vmatpush1.xpose.msra.mxu0 0.0
        %2691 = vmatprep.subr.mxu0 0.0
        %2692 = vmatpush1.xpose.msra.mxu0 0.0
        %2693 = vmatprep.subr.mxu0 0.0
        %2694 = vmatpush1.xpose.msra.mxu0 0.0
        %2695 = vmatprep.subr.mxu0 0.0
        %2696 = vmatpush1.xpose.msra.mxu0 0.0
        %2697 = vmatprep.subr.mxu0 0.0
        %2698 = vmatpush1.xpose.msra.mxu0 0.0
        %2699 = vmatprep.subr.mxu0 0.0
        %2700 = vmatpush1.xpose.msra.mxu0 0.0
        %2701 = vmatprep.subr.mxu0 0.0
        %2702 = vmatpush1.xpose.msra.mxu0 0.0
        %2703 = vmatprep.subr.mxu0 0.0
        %2704 = vmatpush1.xpose.msra.mxu0 0.0
        %2705 = vmatprep.subr.mxu0 0.0
        %2706 = vmatpush1.xpose.msra.mxu0 0.0
        %2707 = vmatprep.subr.mxu0 0.0
        %2708 = vmatpush1.xpose.msra.mxu0 0.0
        %2709 = vmatprep.subr.mxu0 0.0
        %2710 = vmatpush1.xpose.msra.mxu0 0.0
        %2711 = vmatprep.subr.mxu0 0.0
        %2712 = vmatpush1.xpose.msra.mxu0 0.0
        %2713 = vmatprep.mubr.f32.mxu0 0.0
        %2714 = vmatmul.mubr.f32.gmra.mrb[0].mxu0 %v2643
        %v2715 = vpop.f32.mrb[0].mxu0
        %v2716 = vadd.f32 0.0, %v2715
        %v2717 = vpop.f32.mrb[0].mxu0
        %2718 = vdwg.mxu0
        %2719 = vrot.lane.b32.xlu0 %v2157, 120
        %v2720 = vpop.permute.xlu0 %2719
        %2721 = vrot.lane.b32.xlu0 %v2280, 120
        %v2722 = vpop.permute.xlu0 %2721
        %2723 = vrot.lane.b32.xlu0 %v2281, 120
        %v2724 = vpop.permute.xlu0 %2723
        %v2725 = vsel %vm337, %v2720, 0
        %v2727 = vsel %vm337, %v2722, 0
        %v2729 = vsel %vm337, %v2724, 0
        %2731 = vmatprep.subr.mxu0 0.0
        %2732 = vmatpush1.xpose.msra.mxu0 %v2727
        %2733 = vmatprep.subr.mxu0 0.0
        %2734 = vmatpush1.xpose.msra.mxu0 %v2729
        %2735 = vmatprep.subr.mxu0 0.0
        %2736 = vmatpush1.xpose.msra.mxu0 0.0
        %2737 = vmatprep.subr.mxu0 0.0
        %2738 = vmatpush1.xpose.msra.mxu0 0.0
        %2739 = vmatprep.subr.mxu0 0.0
        %2740 = vmatpush1.xpose.msra.mxu0 0.0
        %2741 = vmatprep.subr.mxu0 0.0
        %2742 = vmatpush1.xpose.msra.mxu0 0.0
        %2743 = vmatprep.subr.mxu0 0.0
        %2744 = vmatpush1.xpose.msra.mxu0 0.0
        %2745 = vmatprep.subr.mxu0 0.0
        %2746 = vmatpush1.xpose.msra.mxu0 0.0
        %2747 = vmatprep.subr.mxu0 0.0
        %2748 = vmatpush1.xpose.msra.mxu0 0.0
        %2749 = vmatprep.subr.mxu0 0.0
        %2750 = vmatpush1.xpose.msra.mxu0 0.0
        %2751 = vmatprep.subr.mxu0 0.0
        %2752 = vmatpush1.xpose.msra.mxu0 0.0
        %2753 = vmatprep.subr.mxu0 0.0
        %2754 = vmatpush1.xpose.msra.mxu0 0.0
        %2755 = vmatprep.subr.mxu0 0.0
        %2756 = vmatpush1.xpose.msra.mxu0 0.0
        %2757 = vmatprep.subr.mxu0 0.0
        %2758 = vmatpush1.xpose.msra.mxu0 0.0
        %2759 = vmatprep.subr.mxu0 0.0
        %2760 = vmatpush1.xpose.msra.mxu0 0.0
        %2761 = vmatprep.subr.mxu0 0.0
        %2762 = vmatpush1.xpose.msra.mxu0 0.0
        %2763 = vmatprep.subr.mxu0 0.0
        %2764 = vmatpush1.xpose.msra.mxu0 0.0
        %2765 = vmatprep.subr.mxu0 0.0
        %2766 = vmatpush1.xpose.msra.mxu0 0.0
        %2767 = vmatprep.subr.mxu0 0.0
        %2768 = vmatpush1.xpose.msra.mxu0 0.0
        %2769 = vmatprep.subr.mxu0 0.0
        %2770 = vmatpush1.xpose.msra.mxu0 0.0
        %2771 = vmatprep.subr.mxu0 0.0
        %2772 = vmatpush1.xpose.msra.mxu0 0.0
        %2773 = vmatprep.subr.mxu0 0.0
        %2774 = vmatpush1.xpose.msra.mxu0 0.0
        %2775 = vmatprep.subr.mxu0 0.0
        %2776 = vmatpush1.xpose.msra.mxu0 0.0
        %2777 = vmatprep.subr.mxu0 0.0
        %2778 = vmatpush1.xpose.msra.mxu0 0.0
        %2779 = vmatprep.subr.mxu0 0.0
        %2780 = vmatpush1.xpose.msra.mxu0 0.0
        %2781 = vmatprep.subr.mxu0 0.0
        %2782 = vmatpush1.xpose.msra.mxu0 0.0
        %2783 = vmatprep.subr.mxu0 0.0
        %2784 = vmatpush1.xpose.msra.mxu0 0.0
        %2785 = vmatprep.subr.mxu0 0.0
        %2786 = vmatpush1.xpose.msra.mxu0 0.0
        %2787 = vmatprep.subr.mxu0 0.0
        %2788 = vmatpush1.xpose.msra.mxu0 0.0
        %2789 = vmatprep.subr.mxu0 0.0
        %2790 = vmatpush1.xpose.msra.mxu0 0.0
        %2791 = vmatprep.subr.mxu0 0.0
        %2792 = vmatpush1.xpose.msra.mxu0 0.0
        %2793 = vmatprep.subr.mxu0 0.0
        %2794 = vmatpush1.xpose.msra.mxu0 0.0
        %2795 = vmatprep.mubr.f32.mxu0 0.0
        %2796 = vmatmul.mubr.f32.gmra.mrb[0].mxu0 %v2725
        %v2797 = vpop.f32.mrb[0].mxu0
        %v2798 = vadd.f32 0.0, %v2797
        %v2799 = vpop.f32.mrb[0].mxu0
        %2800 = vdwg.mxu0
        %v2801 = vsel %vm1683, %v2716, -inf
        %2802 = vmax.xlane.f32.xlu0 %v2801
        %v2803 = vpop.xlane.xlu0 %2802
        %v2804 = vsel %vm1683, %v2798, -inf
        %2805 = vmax.xlane.f32.xlu0 %v2804
        %v2806 = vpop.xlane.xlu0 %2805
        %v2807 = vsub.f32 %v2716, %v2803
        %v2808 = vsub.f32 %v2798, %v2806
        %v2809 = vmul.f32 %v2807, 1.442695
        %v2810 = vpow.pop %v2809
        %v2811 = vmul.f32 %v2808, 1.442695
        %v2812 = vpow.pop %v2811
        %v2813 = vsel %vm1683, %v2810, 0.0
        %2814 = vadd.xlane.f32.xlu0 %v2813
        %v2815 = vpop.xlane.xlu0 %2814
        %v2816 = vsel %vm1683, %v2812, 0.0
        %2817 = vadd.xlane.f32.xlu0 %v2816
        %v2818 = vpop.xlane.xlu0 %2817
        %v2819 = vrcp.pop %v2815
        %v2820 = vmul.f32 %v2810, %v2819
        %v2821 = vrcp.pop %v2818
        %v2822 = vmul.f32 %v2812, %v2821
        %2823 = vrot.lane.b32.xlu0 %v2291, 88
        %v2824 = vpop.permute.xlu0 %2823
        %2825 = vrot.lane.b32.xlu0 %v2292, 88
        %v2826 = vpop.permute.xlu0 %2825
        %v2830 = vsel %vm1683, %v2820, 0
        %2832 = vmatprep.subr.mxu0 0.0
        %2833 = vmatpush1.msra.mxu0 %v2824
        %2834 = vmatprep.subr.mxu0 0.0
        %2835 = vmatpush1.msra.mxu0 %v2826
        %2836 = vmatprep.subr.mxu0 0.0
        %2837 = vmatpush1.msra.mxu0 0.0
        %2838 = vmatprep.subr.mxu0 0.0
        %2839 = vmatpush1.msra.mxu0 0.0
        %2840 = vmatprep.subr.mxu0 0.0
        %2841 = vmatpush1.msra.mxu0 0.0
        %2842 = vmatprep.subr.mxu0 0.0
        %2843 = vmatpush1.msra.mxu0 0.0
        %2844 = vmatprep.subr.mxu0 0.0
        %2845 = vmatpush1.msra.mxu0 0.0
        %2846 = vmatprep.subr.mxu0 0.0
        %2847 = vmatpush1.msra.mxu0 0.0
        %2848 = vmatprep.subr.mxu0 0.0
        %2849 = vmatpush1.msra.mxu0 0.0
        %2850 = vmatprep.subr.mxu0 0.0
        %2851 = vmatpush1.msra.mxu0 0.0
        %2852 = vmatprep.subr.mxu0 0.0
        %2853 = vmatpush1.msra.mxu0 0.0
        %2854 = vmatprep.subr.mxu0 0.0
        %2855 = vmatpush1.msra.mxu0 0.0
        %2856 = vmatprep.subr.mxu0 0.0
        %2857 = vmatpush1.msra.mxu0 0.0
        %2858 = vmatprep.subr.mxu0 0.0
        %2859 = vmatpush1.msra.mxu0 0.0
        %2860 = vmatprep.subr.mxu0 0.0
        %2861 = vmatpush1.msra.mxu0 0.0
        %2862 = vmatprep.subr.mxu0 0.0
        %2863 = vmatpush1.msra.mxu0 0.0
        %2864 = vmatprep.subr.mxu0 0.0
        %2865 = vmatpush1.msra.mxu0 0.0
        %2866 = vmatprep.subr.mxu0 0.0
        %2867 = vmatpush1.msra.mxu0 0.0
        %2868 = vmatprep.subr.mxu0 0.0
        %2869 = vmatpush1.msra.mxu0 0.0
        %2870 = vmatprep.subr.mxu0 0.0
        %2871 = vmatpush1.msra.mxu0 0.0
        %2872 = vmatprep.subr.mxu0 0.0
        %2873 = vmatpush1.msra.mxu0 0.0
        %2874 = vmatprep.subr.mxu0 0.0
        %2875 = vmatpush1.msra.mxu0 0.0
        %2876 = vmatprep.subr.mxu0 0.0
        %2877 = vmatpush1.msra.mxu0 0.0
        %2878 = vmatprep.subr.mxu0 0.0
        %2879 = vmatpush1.msra.mxu0 0.0
        %2880 = vmatprep.subr.mxu0 0.0
        %2881 = vmatpush1.msra.mxu0 0.0
        %2882 = vmatprep.subr.mxu0 0.0
        %2883 = vmatpush1.msra.mxu0 0.0
        %2884 = vmatprep.subr.mxu0 0.0
        %2885 = vmatpush1.msra.mxu0 0.0
        %2886 = vmatprep.subr.mxu0 0.0
        %2887 = vmatpush1.msra.mxu0 0.0
        %2888 = vmatprep.subr.mxu0 0.0
        %2889 = vmatpush1.msra.mxu0 0.0
        %2890 = vmatprep.subr.mxu0 0.0
        %2891 = vmatpush1.msra.mxu0 0.0
        %2892 = vmatprep.subr.mxu0 0.0
        %2893 = vmatpush1.msra.mxu0 0.0
        %2894 = vmatprep.subr.mxu0 0.0
        %2895 = vmatpush1.msra.mxu0 0.0
        %2896 = vmatprep.mubr.f32.mxu0 0.0
        %2897 = vmatmul.mubr.f32.gmra.mrb[0].mxu0 %v2830
        %v2898 = vpop.f32.mrb[0].mxu0
        %v2899 = vadd.f32 0.0, %v2898
        %v2900 = vpop.f32.mrb[0].mxu0
        %2901 = vdwg.mxu0
        %2902 = vrot.lane.b32.xlu0 %v2293, 88
        %v2903 = vpop.permute.xlu0 %2902
        %2904 = vrot.lane.b32.xlu0 %v2294, 88
        %v2905 = vpop.permute.xlu0 %2904
        %v2909 = vsel %vm1683, %v2822, 0
        %2911 = vmatprep.subr.mxu0 0.0
        %2912 = vmatpush1.msra.mxu0 %v2903
        %2913 = vmatprep.subr.mxu0 0.0
        %2914 = vmatpush1.msra.mxu0 %v2905
        %2915 = vmatprep.subr.mxu0 0.0
        %2916 = vmatpush1.msra.mxu0 0.0
        %2917 = vmatprep.subr.mxu0 0.0
        %2918 = vmatpush1.msra.mxu0 0.0
        %2919 = vmatprep.subr.mxu0 0.0
        %2920 = vmatpush1.msra.mxu0 0.0
        %2921 = vmatprep.subr.mxu0 0.0
        %2922 = vmatpush1.msra.mxu0 0.0
        %2923 = vmatprep.subr.mxu0 0.0
        %2924 = vmatpush1.msra.mxu0 0.0
        %2925 = vmatprep.subr.mxu0 0.0
        %2926 = vmatpush1.msra.mxu0 0.0
        %2927 = vmatprep.subr.mxu0 0.0
        %2928 = vmatpush1.msra.mxu0 0.0
        %2929 = vmatprep.subr.mxu0 0.0
        %2930 = vmatpush1.msra.mxu0 0.0
        %2931 = vmatprep.subr.mxu0 0.0
        %2932 = vmatpush1.msra.mxu0 0.0
        %2933 = vmatprep.subr.mxu0 0.0
        %2934 = vmatpush1.msra.mxu0 0.0
        %2935 = vmatprep.subr.mxu0 0.0
        %2936 = vmatpush1.msra.mxu0 0.0
        %2937 = vmatprep.subr.mxu0 0.0
        %2938 = vmatpush1.msra.mxu0 0.0
        %2939 = vmatprep.subr.mxu0 0.0
        %2940 = vmatpush1.msra.mxu0 0.0
        %2941 = vmatprep.subr.mxu0 0.0
        %2942 = vmatpush1.msra.mxu0 0.0
        %2943 = vmatprep.subr.mxu0 0.0
        %2944 = vmatpush1.msra.mxu0 0.0
        %2945 = vmatprep.subr.mxu0 0.0
        %2946 = vmatpush1.msra.mxu0 0.0
        %2947 = vmatprep.subr.mxu0 0.0
        %2948 = vmatpush1.msra.mxu0 0.0
        %2949 = vmatprep.subr.mxu0 0.0
        %2950 = vmatpush1.msra.mxu0 0.0
        %2951 = vmatprep.subr.mxu0 0.0
        %2952 = vmatpush1.msra.mxu0 0.0
        %2953 = vmatprep.subr.mxu0 0.0
        %2954 = vmatpush1.msra.mxu0 0.0
        %2955 = vmatprep.subr.mxu0 0.0
        %2956 = vmatpush1.msra.mxu0 0.0
        %2957 = vmatprep.subr.mxu0 0.0
        %2958 = vmatpush1.msra.mxu0 0.0
        %2959 = vmatprep.subr.mxu0 0.0
        %2960 = vmatpush1.msra.mxu0 0.0
        %2961 = vmatprep.subr.mxu0 0.0
        %2962 = vmatpush1.msra.mxu0 0.0
        %2963 = vmatprep.subr.mxu0 0.0
        %2964 = vmatpush1.msra.mxu0 0.0
        %2965 = vmatprep.subr.mxu0 0.0
        %2966 = vmatpush1.msra.mxu0 0.0
        %2967 = vmatprep.subr.mxu0 0.0
        %2968 = vmatpush1.msra.mxu0 0.0
        %2969 = vmatprep.subr.mxu0 0.0
        %2970 = vmatpush1.msra.mxu0 0.0
        %2971 = vmatprep.subr.mxu0 0.0
        %2972 = vmatpush1.msra.mxu0 0.0
        %2973 = vmatprep.subr.mxu0 0.0
        %2974 = vmatpush1.msra.mxu0 0.0
        %2975 = vmatprep.mubr.f32.mxu0 0.0
        %2976 = vmatmul.mubr.f32.gmra.mrb[0].mxu0 %v2909
        %v2977 = vpop.f32.mrb[0].mxu0
        %v2978 = vadd.f32 0.0, %v2977
        %v2979 = vpop.f32.mrb[0].mxu0
        %2980 = vdwg.mxu0
        %2981 = vrot.lane.b32.xlu0 %v2152, 112
        %v2982 = vpop.permute.xlu0 %2981
        %2983 = vrot.lane.b32.xlu0 %v2278, 112
        %v2984 = vpop.permute.xlu0 %2983
        %2985 = vrot.lane.b32.xlu0 %v2279, 112
        %v2986 = vpop.permute.xlu0 %2985
        %v2987 = vsel %vm337, %v2982, 0
        %v2989 = vsel %vm337, %v2984, 0
        %v2991 = vsel %vm337, %v2986, 0
        %2993 = vmatprep.subr.mxu0 0.0
        %2994 = vmatpush1.xpose.msra.mxu0 %v2989
        %2995 = vmatprep.subr.mxu0 0.0
        %2996 = vmatpush1.xpose.msra.mxu0 %v2991
        %2997 = vmatprep.subr.mxu0 0.0
        %2998 = vmatpush1.xpose.msra.mxu0 0.0
        %2999 = vmatprep.subr.mxu0 0.0
        %3000 = vmatpush1.xpose.msra.mxu0 0.0
        %3001 = vmatprep.subr.mxu0 0.0
        %3002 = vmatpush1.xpose.msra.mxu0 0.0
        %3003 = vmatprep.subr.mxu0 0.0
        %3004 = vmatpush1.xpose.msra.mxu0 0.0
        %3005 = vmatprep.subr.mxu0 0.0
        %3006 = vmatpush1.xpose.msra.mxu0 0.0
        %3007 = vmatprep.subr.mxu0 0.0
        %3008 = vmatpush1.xpose.msra.mxu0 0.0
        %3009 = vmatprep.subr.mxu0 0.0
        %3010 = vmatpush1.xpose.msra.mxu0 0.0
        %3011 = vmatprep.subr.mxu0 0.0
        %3012 = vmatpush1.xpose.msra.mxu0 0.0
        %3013 = vmatprep.subr.mxu0 0.0
        %3014 = vmatpush1.xpose.msra.mxu0 0.0
        %3015 = vmatprep.subr.mxu0 0.0
        %3016 = vmatpush1.xpose.msra.mxu0 0.0
        %3017 = vmatprep.subr.mxu0 0.0
        %3018 = vmatpush1.xpose.msra.mxu0 0.0
        %3019 = vmatprep.subr.mxu0 0.0
        %3020 = vmatpush1.xpose.msra.mxu0 0.0
        %3021 = vmatprep.subr.mxu0 0.0
        %3022 = vmatpush1.xpose.msra.mxu0 0.0
        %3023 = vmatprep.subr.mxu0 0.0
        %3024 = vmatpush1.xpose.msra.mxu0 0.0
        %3025 = vmatprep.subr.mxu0 0.0
        %3026 = vmatpush1.xpose.msra.mxu0 0.0
        %3027 = vmatprep.subr.mxu0 0.0
        %3028 = vmatpush1.xpose.msra.mxu0 0.0
        %3029 = vmatprep.subr.mxu0 0.0
        %3030 = vmatpush1.xpose.msra.mxu0 0.0
        %3031 = vmatprep.subr.mxu0 0.0
        %3032 = vmatpush1.xpose.msra.mxu0 0.0
        %3033 = vmatprep.subr.mxu0 0.0
        %3034 = vmatpush1.xpose.msra.mxu0 0.0
        %3035 = vmatprep.subr.mxu0 0.0
        %3036 = vmatpush1.xpose.msra.mxu0 0.0
        %3037 = vmatprep.subr.mxu0 0.0
        %3038 = vmatpush1.xpose.msra.mxu0 0.0
        %3039 = vmatprep.subr.mxu0 0.0
        %3040 = vmatpush1.xpose.msra.mxu0 0.0
        %3041 = vmatprep.subr.mxu0 0.0
        %3042 = vmatpush1.xpose.msra.mxu0 0.0
        %3043 = vmatprep.subr.mxu0 0.0
        %3044 = vmatpush1.xpose.msra.mxu0 0.0
        %3045 = vmatprep.subr.mxu0 0.0
        %3046 = vmatpush1.xpose.msra.mxu0 0.0
        %3047 = vmatprep.subr.mxu0 0.0
        %3048 = vmatpush1.xpose.msra.mxu0 0.0
        %3049 = vmatprep.subr.mxu0 0.0
        %3050 = vmatpush1.xpose.msra.mxu0 0.0
        %3051 = vmatprep.subr.mxu0 0.0
        %3052 = vmatpush1.xpose.msra.mxu0 0.0
        %3053 = vmatprep.subr.mxu0 0.0
        %3054 = vmatpush1.xpose.msra.mxu0 0.0
        %3055 = vmatprep.subr.mxu0 0.0
        %3056 = vmatpush1.xpose.msra.mxu0 0.0
        %3057 = vmatprep.mubr.f32.mxu0 0.0
        %3058 = vmatmul.mubr.f32.gmra.mrb[0].mxu0 %v2987
        %v3059 = vpop.f32.mrb[0].mxu0
        %v3060 = vadd.f32 0.0, %v3059
        %v3061 = vpop.f32.mrb[0].mxu0
        %3062 = vdwg.mxu0
        %3063 = vrot.lane.b32.xlu0 %v2157, 112
        %v3064 = vpop.permute.xlu0 %3063
        %3065 = vrot.lane.b32.xlu0 %v2280, 112
        %v3066 = vpop.permute.xlu0 %3065
        %3067 = vrot.lane.b32.xlu0 %v2281, 112
        %v3068 = vpop.permute.xlu0 %3067
        %v3069 = vsel %vm337, %v3064, 0
        %v3071 = vsel %vm337, %v3066, 0
        %v3073 = vsel %vm337, %v3068, 0
        %3075 = vmatprep.subr.mxu0 0.0
        %3076 = vmatpush1.xpose.msra.mxu0 %v3071
        %3077 = vmatprep.subr.mxu0 0.0
        %3078 = vmatpush1.xpose.msra.mxu0 %v3073
        %3079 = vmatprep.subr.mxu0 0.0
        %3080 = vmatpush1.xpose.msra.mxu0 0.0
        %3081 = vmatprep.subr.mxu0 0.0
        %3082 = vmatpush1.xpose.msra.mxu0 0.0
        %3083 = vmatprep.subr.mxu0 0.0
        %3084 = vmatpush1.xpose.msra.mxu0 0.0
        %3085 = vmatprep.subr.mxu0 0.0
        %3086 = vmatpush1.xpose.msra.mxu0 0.0
        %3087 = vmatprep.subr.mxu0 0.0
        %3088 = vmatpush1.xpose.msra.mxu0 0.0
        %3089 = vmatprep.subr.mxu0 0.0
        %3090 = vmatpush1.xpose.msra.mxu0 0.0
        %3091 = vmatprep.subr.mxu0 0.0
        %3092 = vmatpush1.xpose.msra.mxu0 0.0
        %3093 = vmatprep.subr.mxu0 0.0
        %3094 = vmatpush1.xpose.msra.mxu0 0.0
        %3095 = vmatprep.subr.mxu0 0.0
        %3096 = vmatpush1.xpose.msra.mxu0 0.0
        %3097 = vmatprep.subr.mxu0 0.0
        %3098 = vmatpush1.xpose.msra.mxu0 0.0
        %3099 = vmatprep.subr.mxu0 0.0
        %3100 = vmatpush1.xpose.msra.mxu0 0.0
        %3101 = vmatprep.subr.mxu0 0.0
        %3102 = vmatpush1.xpose.msra.mxu0 0.0
        %3103 = vmatprep.subr.mxu0 0.0
        %3104 = vmatpush1.xpose.msra.mxu0 0.0
        %3105 = vmatprep.subr.mxu0 0.0
        %3106 = vmatpush1.xpose.msra.mxu0 0.0
        %3107 = vmatprep.subr.mxu0 0.0
        %3108 = vmatpush1.xpose.msra.mxu0 0.0
        %3109 = vmatprep.subr.mxu0 0.0
        %3110 = vmatpush1.xpose.msra.mxu0 0.0
        %3111 = vmatprep.subr.mxu0 0.0
        %3112 = vmatpush1.xpose.msra.mxu0 0.0
        %3113 = vmatprep.subr.mxu0 0.0
        %3114 = vmatpush1.xpose.msra.mxu0 0.0
        %3115 = vmatprep.subr.mxu0 0.0
        %3116 = vmatpush1.xpose.msra.mxu0 0.0
        %3117 = vmatprep.subr.mxu0 0.0
        %3118 = vmatpush1.xpose.msra.mxu0 0.0
        %3119 = vmatprep.subr.mxu0 0.0
        %3120 = vmatpush1.xpose.msra.mxu0 0.0
        %3121 = vmatprep.subr.mxu0 0.0
        %3122 = vmatpush1.xpose.msra.mxu0 0.0
        %3123 = vmatprep.subr.mxu0 0.0
        %3124 = vmatpush1.xpose.msra.mxu0 0.0
        %3125 = vmatprep.subr.mxu0 0.0
        %3126 = vmatpush1.xpose.msra.mxu0 0.0
        %3127 = vmatprep.subr.mxu0 0.0
        %3128 = vmatpush1.xpose.msra.mxu0 0.0
        %3129 = vmatprep.subr.mxu0 0.0
        %3130 = vmatpush1.xpose.msra.mxu0 0.0
        %3131 = vmatprep.subr.mxu0 0.0
        %3132 = vmatpush1.xpose.msra.mxu0 0.0
        %3133 = vmatprep.subr.mxu0 0.0
        %3134 = vmatpush1.xpose.msra.mxu0 0.0
        %3135 = vmatprep.subr.mxu0 0.0
        %3136 = vmatpush1.xpose.msra.mxu0 0.0
        %3137 = vmatprep.subr.mxu0 0.0
        %3138 = vmatpush1.xpose.msra.mxu0 0.0
        %3139 = vmatprep.mubr.f32.mxu0 0.0
        %3140 = vmatmul.mubr.f32.gmra.mrb[0].mxu0 %v3069
        %v3141 = vpop.f32.mrb[0].mxu0
        %v3142 = vadd.f32 0.0, %v3141
        %v3143 = vpop.f32.mrb[0].mxu0
        %3144 = vdwg.mxu0
        %v3145 = vsel %vm1683, %v3060, -inf
        %3146 = vmax.xlane.f32.xlu0 %v3145
        %v3147 = vpop.xlane.xlu0 %3146
        %v3148 = vsel %vm1683, %v3142, -inf
        %3149 = vmax.xlane.f32.xlu0 %v3148
        %v3150 = vpop.xlane.xlu0 %3149
        %v3151 = vsub.f32 %v3060, %v3147
        %v3152 = vsub.f32 %v3142, %v3150
        %v3153 = vmul.f32 %v3151, 1.442695
        %v3154 = vpow.pop %v3153
        %v3155 = vmul.f32 %v3152, 1.442695
        %v3156 = vpow.pop %v3155
        %v3157 = vsel %vm1683, %v3154, 0.0
        %3158 = vadd.xlane.f32.xlu0 %v3157
        %v3159 = vpop.xlane.xlu0 %3158
        %v3160 = vsel %vm1683, %v3156, 0.0
        %3161 = vadd.xlane.f32.xlu0 %v3160
        %v3162 = vpop.xlane.xlu0 %3161
        %v3163 = vrcp.pop %v3159
        %v3164 = vmul.f32 %v3154, %v3163
        %v3165 = vrcp.pop %v3162
        %v3166 = vmul.f32 %v3156, %v3165
        %3167 = vrot.lane.b32.xlu0 %v2291, 80
        %v3168 = vpop.permute.xlu0 %3167
        %3169 = vrot.lane.b32.xlu0 %v2292, 80
        %v3170 = vpop.permute.xlu0 %3169
        %v3174 = vsel %vm1683, %v3164, 0
        %3176 = vmatprep.subr.mxu0 0.0
        %3177 = vmatpush1.msra.mxu0 %v3168
        %3178 = vmatprep.subr.mxu0 0.0
        %3179 = vmatpush1.msra.mxu0 %v3170
        %3180 = vmatprep.subr.mxu0 0.0
        %3181 = vmatpush1.msra.mxu0 0.0
        %3182 = vmatprep.subr.mxu0 0.0
        %3183 = vmatpush1.msra.mxu0 0.0
        %3184 = vmatprep.subr.mxu0 0.0
        %3185 = vmatpush1.msra.mxu0 0.0
        %3186 = vmatprep.subr.mxu0 0.0
        %3187 = vmatpush1.msra.mxu0 0.0
        %3188 = vmatprep.subr.mxu0 0.0
        %3189 = vmatpush1.msra.mxu0 0.0
        %3190 = vmatprep.subr.mxu0 0.0
        %3191 = vmatpush1.msra.mxu0 0.0
        %3192 = vmatprep.subr.mxu0 0.0
        %3193 = vmatpush1.msra.mxu0 0.0
        %3194 = vmatprep.subr.mxu0 0.0
        %3195 = vmatpush1.msra.mxu0 0.0
        %3196 = vmatprep.subr.mxu0 0.0
        %3197 = vmatpush1.msra.mxu0 0.0
        %3198 = vmatprep.subr.mxu0 0.0
        %3199 = vmatpush1.msra.mxu0 0.0
        %3200 = vmatprep.subr.mxu0 0.0
        %3201 = vmatpush1.msra.mxu0 0.0
        %3202 = vmatprep.subr.mxu0 0.0
        %3203 = vmatpush1.msra.mxu0 0.0
        %3204 = vmatprep.subr.mxu0 0.0
        %3205 = vmatpush1.msra.mxu0 0.0
        %3206 = vmatprep.subr.mxu0 0.0
        %3207 = vmatpush1.msra.mxu0 0.0
        %3208 = vmatprep.subr.mxu0 0.0
        %3209 = vmatpush1.msra.mxu0 0.0
        %3210 = vmatprep.subr.mxu0 0.0
        %3211 = vmatpush1.msra.mxu0 0.0
        %3212 = vmatprep.subr.mxu0 0.0
        %3213 = vmatpush1.msra.mxu0 0.0
        %3214 = vmatprep.subr.mxu0 0.0
        %3215 = vmatpush1.msra.mxu0 0.0
        %3216 = vmatprep.subr.mxu0 0.0
        %3217 = vmatpush1.msra.mxu0 0.0
        %3218 = vmatprep.subr.mxu0 0.0
        %3219 = vmatpush1.msra.mxu0 0.0
        %3220 = vmatprep.subr.mxu0 0.0
        %3221 = vmatpush1.msra.mxu0 0.0
        %3222 = vmatprep.subr.mxu0 0.0
        %3223 = vmatpush1.msra.mxu0 0.0
        %3224 = vmatprep.subr.mxu0 0.0
        %3225 = vmatpush1.msra.mxu0 0.0
        %3226 = vmatprep.subr.mxu0 0.0
        %3227 = vmatpush1.msra.mxu0 0.0
        %3228 = vmatprep.subr.mxu0 0.0
        %3229 = vmatpush1.msra.mxu0 0.0
        %3230 = vmatprep.subr.mxu0 0.0
        %3231 = vmatpush1.msra.mxu0 0.0
        %3232 = vmatprep.subr.mxu0 0.0
        %3233 = vmatpush1.msra.mxu0 0.0
        %3234 = vmatprep.subr.mxu0 0.0
        %3235 = vmatpush1.msra.mxu0 0.0
        %3236 = vmatprep.subr.mxu0 0.0
        %3237 = vmatpush1.msra.mxu0 0.0
        %3238 = vmatprep.subr.mxu0 0.0
        %3239 = vmatpush1.msra.mxu0 0.0
        %3240 = vmatprep.mubr.f32.mxu0 0.0
        %3241 = vmatmul.mubr.f32.gmra.mrb[0].mxu0 %v3174
        %v3242 = vpop.f32.mrb[0].mxu0
        %v3243 = vadd.f32 0.0, %v3242
        %v3244 = vpop.f32.mrb[0].mxu0
        %3245 = vdwg.mxu0
        %3246 = vrot.lane.b32.xlu0 %v2293, 80
        %v3247 = vpop.permute.xlu0 %3246
        %3248 = vrot.lane.b32.xlu0 %v2294, 80
        %v3249 = vpop.permute.xlu0 %3248
        %v3253 = vsel %vm1683, %v3166, 0
        %3255 = vmatprep.subr.mxu0 0.0
        %3256 = vmatpush1.msra.mxu0 %v3247
        %3257 = vmatprep.subr.mxu0 0.0
        %3258 = vmatpush1.msra.mxu0 %v3249
        %3259 = vmatprep.subr.mxu0 0.0
        %3260 = vmatpush1.msra.mxu0 0.0
        %3261 = vmatprep.subr.mxu0 0.0
        %3262 = vmatpush1.msra.mxu0 0.0
        %3263 = vmatprep.subr.mxu0 0.0
        %3264 = vmatpush1.msra.mxu0 0.0
        %3265 = vmatprep.subr.mxu0 0.0
        %3266 = vmatpush1.msra.mxu0 0.0
        %3267 = vmatprep.subr.mxu0 0.0
        %3268 = vmatpush1.msra.mxu0 0.0
        %3269 = vmatprep.subr.mxu0 0.0
        %3270 = vmatpush1.msra.mxu0 0.0
        %3271 = vmatprep.subr.mxu0 0.0
        %3272 = vmatpush1.msra.mxu0 0.0
        %3273 = vmatprep.subr.mxu0 0.0
        %3274 = vmatpush1.msra.mxu0 0.0
        %3275 = vmatprep.subr.mxu0 0.0
        %3276 = vmatpush1.msra.mxu0 0.0
        %3277 = vmatprep.subr.mxu0 0.0
        %3278 = vmatpush1.msra.mxu0 0.0
        %3279 = vmatprep.subr.mxu0 0.0
        %3280 = vmatpush1.msra.mxu0 0.0
        %3281 = vmatprep.subr.mxu0 0.0
        %3282 = vmatpush1.msra.mxu0 0.0
        %3283 = vmatprep.subr.mxu0 0.0
        %3284 = vmatpush1.msra.mxu0 0.0
        %3285 = vmatprep.subr.mxu0 0.0
        %3286 = vmatpush1.msra.mxu0 0.0
        %3287 = vmatprep.subr.mxu0 0.0
        %3288 = vmatpush1.msra.mxu0 0.0
        %3289 = vmatprep.subr.mxu0 0.0
        %3290 = vmatpush1.msra.mxu0 0.0
        %3291 = vmatprep.subr.mxu0 0.0
        %3292 = vmatpush1.msra.mxu0 0.0
        %3293 = vmatprep.subr.mxu0 0.0
        %3294 = vmatpush1.msra.mxu0 0.0
        %3295 = vmatprep.subr.mxu0 0.0
        %3296 = vmatpush1.msra.mxu0 0.0
        %3297 = vmatprep.subr.mxu0 0.0
        %3298 = vmatpush1.msra.mxu0 0.0
        %3299 = vmatprep.subr.mxu0 0.0
        %3300 = vmatpush1.msra.mxu0 0.0
        %3301 = vmatprep.subr.mxu0 0.0
        %3302 = vmatpush1.msra.mxu0 0.0
        %3303 = vmatprep.subr.mxu0 0.0
        %3304 = vmatpush1.msra.mxu0 0.0
        %3305 = vmatprep.subr.mxu0 0.0
        %3306 = vmatpush1.msra.mxu0 0.0
        %3307 = vmatprep.subr.mxu0 0.0
        %3308 = vmatpush1.msra.mxu0 0.0
        %3309 = vmatprep.subr.mxu0 0.0
        %3310 = vmatpush1.msra.mxu0 0.0
        %3311 = vmatprep.subr.mxu0 0.0
        %3312 = vmatpush1.msra.mxu0 0.0
        %3313 = vmatprep.subr.mxu0 0.0
        %3314 = vmatpush1.msra.mxu0 0.0
        %3315 = vmatprep.subr.mxu0 0.0
        %3316 = vmatpush1.msra.mxu0 0.0
        %3317 = vmatprep.subr.mxu0 0.0
        %3318 = vmatpush1.msra.mxu0 0.0
        %3319 = vmatprep.mubr.f32.mxu0 0.0
        %3320 = vmatmul.mubr.f32.gmra.mrb[0].mxu0 %v3253
        %v3321 = vpop.f32.mrb[0].mxu0
        %v3322 = vadd.f32 0.0, %v3321
        %v3323 = vpop.f32.mrb[0].mxu0
        %3324 = vdwg.mxu0
        %3325 = vrot.lane.b32.xlu0 %v2152, 104
        %v3326 = vpop.permute.xlu0 %3325
        %3327 = vrot.lane.b32.xlu0 %v2278, 104
        %v3328 = vpop.permute.xlu0 %3327
        %3329 = vrot.lane.b32.xlu0 %v2279, 104
        %v3330 = vpop.permute.xlu0 %3329
        %v3331 = vsel %vm337, %v3326, 0
        %v3333 = vsel %vm337, %v3328, 0
        %v3335 = vsel %vm337, %v3330, 0
        %3337 = vmatprep.subr.mxu0 0.0
        %3338 = vmatpush1.xpose.msra.mxu0 %v3333
        %3339 = vmatprep.subr.mxu0 0.0
        %3340 = vmatpush1.xpose.msra.mxu0 %v3335
        %3341 = vmatprep.subr.mxu0 0.0
        %3342 = vmatpush1.xpose.msra.mxu0 0.0
        %3343 = vmatprep.subr.mxu0 0.0
        %3344 = vmatpush1.xpose.msra.mxu0 0.0
        %3345 = vmatprep.subr.mxu0 0.0
        %3346 = vmatpush1.xpose.msra.mxu0 0.0
        %3347 = vmatprep.subr.mxu0 0.0
        %3348 = vmatpush1.xpose.msra.mxu0 0.0
        %3349 = vmatprep.subr.mxu0 0.0
        %3350 = vmatpush1.xpose.msra.mxu0 0.0
        %3351 = vmatprep.subr.mxu0 0.0
        %3352 = vmatpush1.xpose.msra.mxu0 0.0
        %3353 = vmatprep.subr.mxu0 0.0
        %3354 = vmatpush1.xpose.msra.mxu0 0.0
        %3355 = vmatprep.subr.mxu0 0.0
        %3356 = vmatpush1.xpose.msra.mxu0 0.0
        %3357 = vmatprep.subr.mxu0 0.0
        %3358 = vmatpush1.xpose.msra.mxu0 0.0
        %3359 = vmatprep.subr.mxu0 0.0
        %3360 = vmatpush1.xpose.msra.mxu0 0.0
        %3361 = vmatprep.subr.mxu0 0.0
        %3362 = vmatpush1.xpose.msra.mxu0 0.0
        %3363 = vmatprep.subr.mxu0 0.0
        %3364 = vmatpush1.xpose.msra.mxu0 0.0
        %3365 = vmatprep.subr.mxu0 0.0
        %3366 = vmatpush1.xpose.msra.mxu0 0.0
        %3367 = vmatprep.subr.mxu0 0.0
        %3368 = vmatpush1.xpose.msra.mxu0 0.0
        %3369 = vmatprep.subr.mxu0 0.0
        %3370 = vmatpush1.xpose.msra.mxu0 0.0
        %3371 = vmatprep.subr.mxu0 0.0
        %3372 = vmatpush1.xpose.msra.mxu0 0.0
        %3373 = vmatprep.subr.mxu0 0.0
        %3374 = vmatpush1.xpose.msra.mxu0 0.0
        %3375 = vmatprep.subr.mxu0 0.0
        %3376 = vmatpush1.xpose.msra.mxu0 0.0
        %3377 = vmatprep.subr.mxu0 0.0
        %3378 = vmatpush1.xpose.msra.mxu0 0.0
        %3379 = vmatprep.subr.mxu0 0.0
        %3380 = vmatpush1.xpose.msra.mxu0 0.0
        %3381 = vmatprep.subr.mxu0 0.0
        %3382 = vmatpush1.xpose.msra.mxu0 0.0
        %3383 = vmatprep.subr.mxu0 0.0
        %3384 = vmatpush1.xpose.msra.mxu0 0.0
        %3385 = vmatprep.subr.mxu0 0.0
        %3386 = vmatpush1.xpose.msra.mxu0 0.0
        %3387 = vmatprep.subr.mxu0 0.0
        %3388 = vmatpush1.xpose.msra.mxu0 0.0
        %3389 = vmatprep.subr.mxu0 0.0
        %3390 = vmatpush1.xpose.msra.mxu0 0.0
        %3391 = vmatprep.subr.mxu0 0.0
        %3392 = vmatpush1.xpose.msra.mxu0 0.0
        %3393 = vmatprep.subr.mxu0 0.0
        %3394 = vmatpush1.xpose.msra.mxu0 0.0
        %3395 = vmatprep.subr.mxu0 0.0
        %3396 = vmatpush1.xpose.msra.mxu0 0.0
        %3397 = vmatprep.subr.mxu0 0.0
        %3398 = vmatpush1.xpose.msra.mxu0 0.0
        %3399 = vmatprep.subr.mxu0 0.0
        %3400 = vmatpush1.xpose.msra.mxu0 0.0
        %3401 = vmatprep.mubr.f32.mxu0 0.0
        %3402 = vmatmul.mubr.f32.gmra.mrb[0].mxu0 %v3331
        %v3403 = vpop.f32.mrb[0].mxu0
        %v3404 = vadd.f32 0.0, %v3403
        %v3405 = vpop.f32.mrb[0].mxu0
        %3406 = vdwg.mxu0
        %3407 = vrot.lane.b32.xlu0 %v2157, 104
        %v3408 = vpop.permute.xlu0 %3407
        %3409 = vrot.lane.b32.xlu0 %v2280, 104
        %v3410 = vpop.permute.xlu0 %3409
        %3411 = vrot.lane.b32.xlu0 %v2281, 104
        %v3412 = vpop.permute.xlu0 %3411
        %v3413 = vsel %vm337, %v3408, 0
        %v3415 = vsel %vm337, %v3410, 0
        %v3417 = vsel %vm337, %v3412, 0
        %3419 = vmatprep.subr.mxu0 0.0
        %3420 = vmatpush1.xpose.msra.mxu0 %v3415
        %3421 = vmatprep.subr.mxu0 0.0
        %3422 = vmatpush1.xpose.msra.mxu0 %v3417
        %3423 = vmatprep.subr.mxu0 0.0
        %3424 = vmatpush1.xpose.msra.mxu0 0.0
        %3425 = vmatprep.subr.mxu0 0.0
        %3426 = vmatpush1.xpose.msra.mxu0 0.0
        %3427 = vmatprep.subr.mxu0 0.0
        %3428 = vmatpush1.xpose.msra.mxu0 0.0
        %3429 = vmatprep.subr.mxu0 0.0
        %3430 = vmatpush1.xpose.msra.mxu0 0.0
        %3431 = vmatprep.subr.mxu0 0.0
        %3432 = vmatpush1.xpose.msra.mxu0 0.0
        %3433 = vmatprep.subr.mxu0 0.0
        %3434 = vmatpush1.xpose.msra.mxu0 0.0
        %3435 = vmatprep.subr.mxu0 0.0
        %3436 = vmatpush1.xpose.msra.mxu0 0.0
        %3437 = vmatprep.subr.mxu0 0.0
        %3438 = vmatpush1.xpose.msra.mxu0 0.0
        %3439 = vmatprep.subr.mxu0 0.0
        %3440 = vmatpush1.xpose.msra.mxu0 0.0
        %3441 = vmatprep.subr.mxu0 0.0
        %3442 = vmatpush1.xpose.msra.mxu0 0.0
        %3443 = vmatprep.subr.mxu0 0.0
        %3444 = vmatpush1.xpose.msra.mxu0 0.0
        %3445 = vmatprep.subr.mxu0 0.0
        %3446 = vmatpush1.xpose.msra.mxu0 0.0
        %3447 = vmatprep.subr.mxu0 0.0
        %3448 = vmatpush1.xpose.msra.mxu0 0.0
        %3449 = vmatprep.subr.mxu0 0.0
        %3450 = vmatpush1.xpose.msra.mxu0 0.0
        %3451 = vmatprep.subr.mxu0 0.0
        %3452 = vmatpush1.xpose.msra.mxu0 0.0
        %3453 = vmatprep.subr.mxu0 0.0
        %3454 = vmatpush1.xpose.msra.mxu0 0.0
        %3455 = vmatprep.subr.mxu0 0.0
        %3456 = vmatpush1.xpose.msra.mxu0 0.0
        %3457 = vmatprep.subr.mxu0 0.0
        %3458 = vmatpush1.xpose.msra.mxu0 0.0
        %3459 = vmatprep.subr.mxu0 0.0
        %3460 = vmatpush1.xpose.msra.mxu0 0.0
        %3461 = vmatprep.subr.mxu0 0.0
        %3462 = vmatpush1.xpose.msra.mxu0 0.0
        %3463 = vmatprep.subr.mxu0 0.0
        %3464 = vmatpush1.xpose.msra.mxu0 0.0
        %3465 = vmatprep.subr.mxu0 0.0
        %3466 = vmatpush1.xpose.msra.mxu0 0.0
        %3467 = vmatprep.subr.mxu0 0.0
        %3468 = vmatpush1.xpose.msra.mxu0 0.0
        %3469 = vmatprep.subr.mxu0 0.0
        %3470 = vmatpush1.xpose.msra.mxu0 0.0
        %3471 = vmatprep.subr.mxu0 0.0
        %3472 = vmatpush1.xpose.msra.mxu0 0.0
        %3473 = vmatprep.subr.mxu0 0.0
        %3474 = vmatpush1.xpose.msra.mxu0 0.0
        %3475 = vmatprep.subr.mxu0 0.0
        %3476 = vmatpush1.xpose.msra.mxu0 0.0
        %3477 = vmatprep.subr.mxu0 0.0
        %3478 = vmatpush1.xpose.msra.mxu0 0.0
        %3479 = vmatprep.subr.mxu0 0.0
        %3480 = vmatpush1.xpose.msra.mxu0 0.0
        %3481 = vmatprep.subr.mxu0 0.0
        %3482 = vmatpush1.xpose.msra.mxu0 0.0
        %3483 = vmatprep.mubr.f32.mxu0 0.0
        %3484 = vmatmul.mubr.f32.gmra.mrb[0].mxu0 %v3413
        %v3485 = vpop.f32.mrb[0].mxu0
        %v3486 = vadd.f32 0.0, %v3485
        %v3487 = vpop.f32.mrb[0].mxu0
        %3488 = vdwg.mxu0
        %v3489 = vsel %vm1683, %v3404, -inf
        %3490 = vmax.xlane.f32.xlu0 %v3489
        %v3491 = vpop.xlane.xlu0 %3490
        %v3492 = vsel %vm1683, %v3486, -inf
        %3493 = vmax.xlane.f32.xlu0 %v3492
        %v3494 = vpop.xlane.xlu0 %3493
        %v3495 = vsub.f32 %v3404, %v3491
        %v3496 = vsub.f32 %v3486, %v3494
        %v3497 = vmul.f32 %v3495, 1.442695
        %v3498 = vpow.pop %v3497
        %v3499 = vmul.f32 %v3496, 1.442695
        %v3500 = vpow.pop %v3499
        %v3501 = vsel %vm1683, %v3498, 0.0
        %3502 = vadd.xlane.f32.xlu0 %v3501
        %v3503 = vpop.xlane.xlu0 %3502
        %v3504 = vsel %vm1683, %v3500, 0.0
        %3505 = vadd.xlane.f32.xlu0 %v3504
        %v3506 = vpop.xlane.xlu0 %3505
        %v3507 = vrcp.pop %v3503
        %v3508 = vmul.f32 %v3498, %v3507
        %v3509 = vrcp.pop %v3506
        %v3510 = vmul.f32 %v3500, %v3509
        %3511 = vrot.lane.b32.xlu0 %v2291, 72
        %v3512 = vpop.permute.xlu0 %3511
        %3513 = vrot.lane.b32.xlu0 %v2292, 72
        %v3514 = vpop.permute.xlu0 %3513
        %v3518 = vsel %vm1683, %v3508, 0
        %3520 = vmatprep.subr.mxu0 0.0
        %3521 = vmatpush1.msra.mxu0 %v3512
        %3522 = vmatprep.subr.mxu0 0.0
        %3523 = vmatpush1.msra.mxu0 %v3514
        %3524 = vmatprep.subr.mxu0 0.0
        %3525 = vmatpush1.msra.mxu0 0.0
        %3526 = vmatprep.subr.mxu0 0.0
        %3527 = vmatpush1.msra.mxu0 0.0
        %3528 = vmatprep.subr.mxu0 0.0
        %3529 = vmatpush1.msra.mxu0 0.0
        %3530 = vmatprep.subr.mxu0 0.0
        %3531 = vmatpush1.msra.mxu0 0.0
        %3532 = vmatprep.subr.mxu0 0.0
        %3533 = vmatpush1.msra.mxu0 0.0
        %3534 = vmatprep.subr.mxu0 0.0
        %3535 = vmatpush1.msra.mxu0 0.0
        %3536 = vmatprep.subr.mxu0 0.0
        %3537 = vmatpush1.msra.mxu0 0.0
        %3538 = vmatprep.subr.mxu0 0.0
        %3539 = vmatpush1.msra.mxu0 0.0
        %3540 = vmatprep.subr.mxu0 0.0
        %3541 = vmatpush1.msra.mxu0 0.0
        %3542 = vmatprep.subr.mxu0 0.0
        %3543 = vmatpush1.msra.mxu0 0.0
        %3544 = vmatprep.subr.mxu0 0.0
        %3545 = vmatpush1.msra.mxu0 0.0
        %3546 = vmatprep.subr.mxu0 0.0
        %3547 = vmatpush1.msra.mxu0 0.0
        %3548 = vmatprep.subr.mxu0 0.0
        %3549 = vmatpush1.msra.mxu0 0.0
        %3550 = vmatprep.subr.mxu0 0.0
        %3551 = vmatpush1.msra.mxu0 0.0
        %3552 = vmatprep.subr.mxu0 0.0
        %3553 = vmatpush1.msra.mxu0 0.0
        %3554 = vmatprep.subr.mxu0 0.0
        %3555 = vmatpush1.msra.mxu0 0.0
        %3556 = vmatprep.subr.mxu0 0.0
        %3557 = vmatpush1.msra.mxu0 0.0
        %3558 = vmatprep.subr.mxu0 0.0
        %3559 = vmatpush1.msra.mxu0 0.0
        %3560 = vmatprep.subr.mxu0 0.0
        %3561 = vmatpush1.msra.mxu0 0.0
        %3562 = vmatprep.subr.mxu0 0.0
        %3563 = vmatpush1.msra.mxu0 0.0
        %3564 = vmatprep.subr.mxu0 0.0
        %3565 = vmatpush1.msra.mxu0 0.0
        %3566 = vmatprep.subr.mxu0 0.0
        %3567 = vmatpush1.msra.mxu0 0.0
        %3568 = vmatprep.subr.mxu0 0.0
        %3569 = vmatpush1.msra.mxu0 0.0
        %3570 = vmatprep.subr.mxu0 0.0
        %3571 = vmatpush1.msra.mxu0 0.0
        %3572 = vmatprep.subr.mxu0 0.0
        %3573 = vmatpush1.msra.mxu0 0.0
        %3574 = vmatprep.subr.mxu0 0.0
        %3575 = vmatpush1.msra.mxu0 0.0
        %3576 = vmatprep.subr.mxu0 0.0
        %3577 = vmatpush1.msra.mxu0 0.0
        %3578 = vmatprep.subr.mxu0 0.0
        %3579 = vmatpush1.msra.mxu0 0.0
        %3580 = vmatprep.subr.mxu0 0.0
        %3581 = vmatpush1.msra.mxu0 0.0
        %3582 = vmatprep.subr.mxu0 0.0
        %3583 = vmatpush1.msra.mxu0 0.0
        %3584 = vmatprep.mubr.f32.mxu0 0.0
        %3585 = vmatmul.mubr.f32.gmra.mrb[0].mxu0 %v3518
        %v3586 = vpop.f32.mrb[0].mxu0
        %v3587 = vadd.f32 0.0, %v3586
        %v3588 = vpop.f32.mrb[0].mxu0
        %3589 = vdwg.mxu0
        %3590 = vrot.lane.b32.xlu0 %v2293, 72
        %v3591 = vpop.permute.xlu0 %3590
        %3592 = vrot.lane.b32.xlu0 %v2294, 72
        %v3593 = vpop.permute.xlu0 %3592
        %v3597 = vsel %vm1683, %v3510, 0
        %3599 = vmatprep.subr.mxu0 0.0
        %3600 = vmatpush1.msra.mxu0 %v3591
        %3601 = vmatprep.subr.mxu0 0.0
        %3602 = vmatpush1.msra.mxu0 %v3593
        %3603 = vmatprep.subr.mxu0 0.0
        %3604 = vmatpush1.msra.mxu0 0.0
        %3605 = vmatprep.subr.mxu0 0.0
        %3606 = vmatpush1.msra.mxu0 0.0
        %3607 = vmatprep.subr.mxu0 0.0
        %3608 = vmatpush1.msra.mxu0 0.0
        %3609 = vmatprep.subr.mxu0 0.0
        %3610 = vmatpush1.msra.mxu0 0.0
        %3611 = vmatprep.subr.mxu0 0.0
        %3612 = vmatpush1.msra.mxu0 0.0
        %3613 = vmatprep.subr.mxu0 0.0
        %3614 = vmatpush1.msra.mxu0 0.0
        %3615 = vmatprep.subr.mxu0 0.0
        %3616 = vmatpush1.msra.mxu0 0.0
        %3617 = vmatprep.subr.mxu0 0.0
        %3618 = vmatpush1.msra.mxu0 0.0
        %3619 = vmatprep.subr.mxu0 0.0
        %3620 = vmatpush1.msra.mxu0 0.0
        %3621 = vmatprep.subr.mxu0 0.0
        %3622 = vmatpush1.msra.mxu0 0.0
        %3623 = vmatprep.subr.mxu0 0.0
        %3624 = vmatpush1.msra.mxu0 0.0
        %3625 = vmatprep.subr.mxu0 0.0
        %3626 = vmatpush1.msra.mxu0 0.0
        %3627 = vmatprep.subr.mxu0 0.0
        %3628 = vmatpush1.msra.mxu0 0.0
        %3629 = vmatprep.subr.mxu0 0.0
        %3630 = vmatpush1.msra.mxu0 0.0
        %3631 = vmatprep.subr.mxu0 0.0
        %3632 = vmatpush1.msra.mxu0 0.0
        %3633 = vmatprep.subr.mxu0 0.0
        %3634 = vmatpush1.msra.mxu0 0.0
        %3635 = vmatprep.subr.mxu0 0.0
        %3636 = vmatpush1.msra.mxu0 0.0
        %3637 = vmatprep.subr.mxu0 0.0
        %3638 = vmatpush1.msra.mxu0 0.0
        %3639 = vmatprep.subr.mxu0 0.0
        %3640 = vmatpush1.msra.mxu0 0.0
        %3641 = vmatprep.subr.mxu0 0.0
        %3642 = vmatpush1.msra.mxu0 0.0
        %3643 = vmatprep.subr.mxu0 0.0
        %3644 = vmatpush1.msra.mxu0 0.0
        %3645 = vmatprep.subr.mxu0 0.0
        %3646 = vmatpush1.msra.mxu0 0.0
        %3647 = vmatprep.subr.mxu0 0.0
        %3648 = vmatpush1.msra.mxu0 0.0
        %3649 = vmatprep.subr.mxu0 0.0
        %3650 = vmatpush1.msra.mxu0 0.0
        %3651 = vmatprep.subr.mxu0 0.0
        %3652 = vmatpush1.msra.mxu0 0.0
        %3653 = vmatprep.subr.mxu0 0.0
        %3654 = vmatpush1.msra.mxu0 0.0
        %3655 = vmatprep.subr.mxu0 0.0
        %3656 = vmatpush1.msra.mxu0 0.0
        %3657 = vmatprep.subr.mxu0 0.0
        %3658 = vmatpush1.msra.mxu0 0.0
        %3659 = vmatprep.subr.mxu0 0.0
        %3660 = vmatpush1.msra.mxu0 0.0
        %3661 = vmatprep.subr.mxu0 0.0
        %3662 = vmatpush1.msra.mxu0 0.0
        %3663 = vmatprep.mubr.f32.mxu0 0.0
        %3664 = vmatmul.mubr.f32.gmra.mrb[0].mxu0 %v3597
        %v3665 = vpop.f32.mrb[0].mxu0
        %v3666 = vadd.f32 0.0, %v3665
        %v3667 = vpop.f32.mrb[0].mxu0
        %3668 = vdwg.mxu0
        %3671 = vrot.lane.b32.xlu0 %v2899, 8
        %v3672 = vpop.permute.xlu0 %3671
        %3673 = vrot.lane.b32.xlu0 %v2978, 8
        %v3674 = vpop.permute.xlu0 %3673
        %3679 = vrot.lane.b32.xlu0 %v3243, 16
        %v3680 = vpop.permute.xlu0 %3679
        %3681 = vrot.lane.b32.xlu0 %v3322, 16
        %v3682 = vpop.permute.xlu0 %3681
        %3687 = vrot.lane.b32.xlu0 %v3587, 24
        %v3688 = vpop.permute.xlu0 %3687
        %3689 = vrot.lane.b32.xlu0 %v3666, 24
        %v3690 = vpop.permute.xlu0 %3689
        %v3693 = vsel %vm337, %v2553, %v3672
        %v3694 = vsel %vm337, %v2634, %v3674
        %v3695 = vsel %vm1683, %v3693, %v3680
        %v3696 = vsel %vm1683, %v3694, %v3682
        %v3697 = vsel %vm1686, %v3695, %v3688
        %v3698 = vsel %vm1686, %v3696, %v3690
        %v3699 = vld [vmem:[%s186 + $0x40] sm:$0xff]
        %v3700 = vld [vmem:[%s186 + $0x48] sm:$0xff]
        %v3701 = vld [vmem:[%s186 + $0x50] sm:$0xff]
        %v3702 = vld [vmem:[%s186 + $0x58] sm:$0xff]
        %v3703 = vld [vmem:[%s186 + $0xd7] sm:$0x1]
        %v3704 = vlaneseq
        %v3705 = vshrl.u32 %v3704, 7
        %v3706 = vsub.s32 0, %v3705
        %v3707 = vrot.slane %v3703, %v3706
        %3712 = vrot.lane.b32.xlu0 %v3699, 96
        %v3713 = vpop.permute.xlu0 %3712
        %3714 = vrot.lane.b32.xlu0 %v3700, 96
        %v3715 = vpop.permute.xlu0 %3714
        %3716 = vrot.lane.b32.xlu0 %v3701, 96
        %v3717 = vpop.permute.xlu0 %3716
        %3718 = vrot.lane.b32.xlu0 %v3702, 96
        %v3719 = vpop.permute.xlu0 %3718
        %v3725 = vsel %vm223, %v3697, 0
        %v3728 = vsel %vm223, %v3698, 0
        %3730 = vmatprep.subr.mxu0 0.0
        %3731 = vmatpush1.msra.mxu0 %v3713
        %3732 = vmatprep.subr.mxu0 0.0
        %3733 = vmatpush1.msra.mxu0 %v3715
        %3734 = vmatprep.subr.mxu0 0.0
        %3735 = vmatpush1.msra.mxu0 %v3717
        %3736 = vmatprep.subr.mxu0 0.0
        %3737 = vmatpush1.msra.mxu0 %v3719
        %3738 = vmatprep.subr.mxu0 0.0
        %3739 = vmatpush1.msra.mxu0 0.0
        %3740 = vmatprep.subr.mxu0 0.0
        %3741 = vmatpush1.msra.mxu0 0.0
        %3742 = vmatprep.subr.mxu0 0.0
        %3743 = vmatpush1.msra.mxu0 0.0
        %3744 = vmatprep.subr.mxu0 0.0
        %3745 = vmatpush1.msra.mxu0 0.0
        %3746 = vmatprep.subr.mxu0 0.0
        %3747 = vmatpush1.msra.mxu0 0.0
        %3748 = vmatprep.subr.mxu0 0.0
        %3749 = vmatpush1.msra.mxu0 0.0
        %3750 = vmatprep.subr.mxu0 0.0
        %3751 = vmatpush1.msra.mxu0 0.0
        %3752 = vmatprep.subr.mxu0 0.0
        %3753 = vmatpush1.msra.mxu0 0.0
        %3754 = vmatprep.subr.mxu0 0.0
        %3755 = vmatpush1.msra.mxu0 0.0
        %3756 = vmatprep.subr.mxu0 0.0
        %3757 = vmatpush1.msra.mxu0 0.0
        %3758 = vmatprep.subr.mxu0 0.0
        %3759 = vmatpush1.msra.mxu0 0.0
        %3760 = vmatprep.subr.mxu0 0.0
        %3761 = vmatpush1.msra.mxu0 0.0
        %3762 = vmatprep.subr.mxu0 0.0
        %3763 = vmatpush1.msra.mxu0 0.0
        %3764 = vmatprep.subr.mxu0 0.0
        %3765 = vmatpush1.msra.mxu0 0.0
        %3766 = vmatprep.subr.mxu0 0.0
        %3767 = vmatpush1.msra.mxu0 0.0
        %3768 = vmatprep.subr.mxu0 0.0
        %3769 = vmatpush1.msra.mxu0 0.0
        %3770 = vmatprep.subr.mxu0 0.0
        %3771 = vmatpush1.msra.mxu0 0.0
        %3772 = vmatprep.subr.mxu0 0.0
        %3773 = vmatpush1.msra.mxu0 0.0
        %3774 = vmatprep.subr.mxu0 0.0
        %3775 = vmatpush1.msra.mxu0 0.0
        %3776 = vmatprep.subr.mxu0 0.0
        %3777 = vmatpush1.msra.mxu0 0.0
        %3778 = vmatprep.subr.mxu0 0.0
        %3779 = vmatpush1.msra.mxu0 0.0
        %3780 = vmatprep.subr.mxu0 0.0
        %3781 = vmatpush1.msra.mxu0 0.0
        %3782 = vmatprep.subr.mxu0 0.0
        %3783 = vmatpush1.msra.mxu0 0.0
        %3784 = vmatprep.subr.mxu0 0.0
        %3785 = vmatpush1.msra.mxu0 0.0
        %3786 = vmatprep.subr.mxu0 0.0
        %3787 = vmatpush1.msra.mxu0 0.0
        %3788 = vmatprep.subr.mxu0 0.0
        %3789 = vmatpush1.msra.mxu0 0.0
        %3790 = vmatprep.subr.mxu0 0.0
        %3791 = vmatpush1.msra.mxu0 0.0
        %3792 = vmatprep.subr.mxu0 0.0
        %3793 = vmatpush1.msra.mxu0 0.0
        %3794 = vmatprep.mubr.f32.mxu0 0.0
        %3795 = vmatmul.mubr.f32.gmra.mrb[0].mxu0 %v3725
        %v3796 = vpop.f32.mrb[0].mxu0
        %v3797 = vadd.f32 %v3707, %v3796
        %v3798 = vpop.f32.mrb[0].mxu0
        %3799 = vmatprep.mubr.f32.mxu0 0.0
        %3800 = vmatmul.mubr.f32.gmra.mrb[0].mxu0 %v3728
        %v3801 = vpop.f32.mrb[0].mxu0
        %v3802 = vadd.f32 %v3707, %v3801
        %v3803 = vpop.f32.mrb[0].mxu0
        %3804 = vdwg.mxu0
        %v3805 = vadd.f32 %v1820, %v3797
        %v3806 = vadd.f32 %v1821, %v3802
        %v3807 = vld [vmem:[%s186 + $0xdb] sm:$0x1]
        %v3808 = vld [vmem:[%s186 + $0xdc] sm:$0x1]
        %v3809 = vsel %vm223, %v3805, 0.0
        %3810 = vadd.xlane.f32.xlu0 %v3809
        %v3811 = vpop.xlane.xlu0 %3810
        %v3812 = vsel %vm223, %v3806, 0.0
        %3813 = vadd.xlane.f32.xlu0 %v3812
        %v3814 = vpop.xlane.xlu0 %3813
        %v3815 = vmul.f32 %v3811, %v1789
        %v3816 = vmul.f32 %v3814, %v1789
        %v3817 = vsub.f32 %v3805, %v3815
        %v3818 = vsub.f32 %v3806, %v3816
        %v3819 = vmul.f32 %v3817, %v3817
        %v3820 = vmul.f32 %v3818, %v3818
        %v3821 = vsel %vm223, %v3819, 0.0
        %3822 = vadd.xlane.f32.xlu0 %v3821
        %v3823 = vpop.xlane.xlu0 %3822
        %v3824 = vsel %vm223, %v3820, 0.0
        %3825 = vadd.xlane.f32.xlu0 %v3824
        %v3826 = vpop.xlane.xlu0 %3825
        %v3827 = vmul.f32 %v3823, %v1789
        %v3828 = vmul.f32 %v3826, %v1789
        %v3829 = vadd.f32 %v3827, 1e-05
        %v3830 = vadd.f32 %v3828, 1e-05
        %v3831 = vrsqrt.pop %v3829
        %v3832 = vrsqrt.pop %v3830
        %v3833 = vmul.f32 %v3817, %v3831
        %v3834 = vmul.f32 %v3818, %v3832
        %v3835 = vlaneseq
        %v3836 = vshrl.u32 %v3835, 7
        %v3837 = vsub.s32 0, %v3836
        %v3838 = vrot.slane %v3807, %v3837
        %v3839 = vmul.f32 %v3833, %v3838
        %v3840 = vmul.f32 %v3834, %v3838
        %v3841 = vlaneseq
        %v3842 = vshrl.u32 %v3841, 7
        %v3843 = vsub.s32 0, %v3842
        %v3844 = vrot.slane %v3808, %v3843
        %v3845 = vadd.f32 %v3839, %v3844
        %v3846 = vadd.f32 %v3840, %v3844
        %v3847 = vld [vmem:[%s186 + $0x90] sm:$0xff]
        %v3848 = vld [vmem:[%s186 + $0x98] sm:$0xff]
        %v3849 = vld [vmem:[%s186 + $0xa0] sm:$0xff]
        %v3850 = vld [vmem:[%s186 + $0xa8] sm:$0xff]
        %v3851 = vld [vmem:[%s186 + $0xdf] sm:$0x1]
        %v3852 = vlaneseq
        %v3853 = vshrl.u32 %v3852, 7
        %v3854 = vsub.s32 0, %v3853
        %v3855 = vrot.slane %v3851, %v3854
        %v3857 = vsel %vm223, %v3845, 0
        %v3860 = vsel %vm223, %v3846, 0
        %3862 = vmatprep.subr.mxu0 0.0
        %3863 = vmatpush1.msra.mxu0 %v3847
        %3864 = vmatprep.subr.mxu0 0.0
        %3865 = vmatpush1.msra.mxu0 %v3848
        %3866 = vmatprep.subr.mxu0 0.0
        %3867 = vmatpush1.msra.mxu0 %v3849
        %3868 = vmatprep.subr.mxu0 0.0
        %3869 = vmatpush1.msra.mxu0 %v3850
        %3870 = vmatprep.subr.mxu0 0.0
        %3871 = vmatpush1.msra.mxu0 0.0
        %3872 = vmatprep.subr.mxu0 0.0
        %3873 = vmatpush1.msra.mxu0 0.0
        %3874 = vmatprep.subr.mxu0 0.0
        %3875 = vmatpush1.msra.mxu0 0.0
        %3876 = vmatprep.subr.mxu0 0.0
        %3877 = vmatpush1.msra.mxu0 0.0
        %3878 = vmatprep.subr.mxu0 0.0
        %3879 = vmatpush1.msra.mxu0 0.0
        %3880 = vmatprep.subr.mxu0 0.0
        %3881 = vmatpush1.msra.mxu0 0.0
        %3882 = vmatprep.subr.mxu0 0.0
        %3883 = vmatpush1.msra.mxu0 0.0
        %3884 = vmatprep.subr.mxu0 0.0
        %3885 = vmatpush1.msra.mxu0 0.0
        %3886 = vmatprep.subr.mxu0 0.0
        %3887 = vmatpush1.msra.mxu0 0.0
        %3888 = vmatprep.subr.mxu0 0.0
        %3889 = vmatpush1.msra.mxu0 0.0
        %3890 = vmatprep.subr.mxu0 0.0
        %3891 = vmatpush1.msra.mxu0 0.0
        %3892 = vmatprep.subr.mxu0 0.0
        %3893 = vmatpush1.msra.mxu0 0.0
        %3894 = vmatprep.subr.mxu0 0.0
        %3895 = vmatpush1.msra.mxu0 0.0
        %3896 = vmatprep.subr.mxu0 0.0
        %3897 = vmatpush1.msra.mxu0 0.0
        %3898 = vmatprep.subr.mxu0 0.0
        %3899 = vmatpush1.msra.mxu0 0.0
        %3900 = vmatprep.subr.mxu0 0.0
        %3901 = vmatpush1.msra.mxu0 0.0
        %3902 = vmatprep.subr.mxu0 0.0
        %3903 = vmatpush1.msra.mxu0 0.0
        %3904 = vmatprep.subr.mxu0 0.0
        %3905 = vmatpush1.msra.mxu0 0.0
        %3906 = vmatprep.subr.mxu0 0.0
        %3907 = vmatpush1.msra.mxu0 0.0
        %3908 = vmatprep.subr.mxu0 0.0
        %3909 = vmatpush1.msra.mxu0 0.0
        %3910 = vmatprep.subr.mxu0 0.0
        %3911 = vmatpush1.msra.mxu0 0.0
        %3912 = vmatprep.subr.mxu0 0.0
        %3913 = vmatpush1.msra.mxu0 0.0
        %3914 = vmatprep.subr.mxu0 0.0
        %3915 = vmatpush1.msra.mxu0 0.0
        %3916 = vmatprep.subr.mxu0 0.0
        %3917 = vmatpush1.msra.mxu0 0.0
        %3918 = vmatprep.subr.mxu0 0.0
        %3919 = vmatpush1.msra.mxu0 0.0
        %3920 = vmatprep.subr.mxu0 0.0
        %3921 = vmatpush1.msra.mxu0 0.0
        %3922 = vmatprep.subr.mxu0 0.0
        %3923 = vmatpush1.msra.mxu0 0.0
        %3924 = vmatprep.subr.mxu0 0.0
        %3925 = vmatpush1.msra.mxu0 0.0
        %3926 = vmatprep.mubr.f32.mxu0 0.0
        %3927 = vmatmul.mubr.f32.gmra.mrb[0].mxu0 %v3857
        %v3928 = vpop.f32.mrb[0].mxu0
        %v3929 = vadd.f32 %v3855, %v3928
        %v3930 = vpop.f32.mrb[0].mxu0
        %3931 = vmatprep.mubr.f32.mxu0 0.0
        %3932 = vmatmul.mubr.f32.gmra.mrb[0].mxu0 %v3860
        %v3933 = vpop.f32.mrb[0].mxu0
        %v3934 = vadd.f32 %v3855, %v3933
        %v3935 = vpop.f32.mrb[0].mxu0
        %3936 = vdwg.mxu0
        %v3937 = vmax.f32 %v3929, 0.0
        %v3938 = vmax.f32 %v3934, 0.0
        %v3939 = vld [vmem:[%s186 + $0xb0] sm:$0xff]
        %v3940 = vld [vmem:[%s186 + $0xb8] sm:$0xff]
        %v3941 = vld [vmem:[%s186 + $0xc0] sm:$0xff]
        %v3942 = vld [vmem:[%s186 + $0xc8] sm:$0xff]
        %v3943 = vld [vmem:[%s186 + $0xd8] sm:$0x1]
        %v3944 = vlaneseq
        %v3945 = vshrl.u32 %v3944, 7
        %v3946 = vsub.s32 0, %v3945
        %v3947 = vrot.slane %v3943, %v3946
        %3948 = vmatprep.subr.mxu0 0.0
        %3949 = vmatpush1.xpose.msra.mxu0 %v3939
        %3950 = vmatprep.subr.mxu0 0.0
        %3951 = vmatpush1.xpose.msra.mxu0 %v3940
        %3952 = vmatprep.subr.mxu0 0.0
        %3953 = vmatpush1.xpose.msra.mxu0 %v3941
        %3954 = vmatprep.subr.mxu0 0.0
        %3955 = vmatpush1.xpose.msra.mxu0 %v3942
        %3956 = vmatprep.subr.mxu0 0.0
        %3957 = vmatpush1.xpose.msra.mxu0 0.0
        %3958 = vmatprep.subr.mxu0 0.0
        %3959 = vmatpush1.xpose.msra.mxu0 0.0
        %3960 = vmatprep.subr.mxu0 0.0
        %3961 = vmatpush1.xpose.msra.mxu0 0.0
        %3962 = vmatprep.subr.mxu0 0.0
        %3963 = vmatpush1.xpose.msra.mxu0 0.0
        %3964 = vmatprep.subr.mxu0 0.0
        %3965 = vmatpush1.xpose.msra.mxu0 0.0
        %3966 = vmatprep.subr.mxu0 0.0
        %3967 = vmatpush1.xpose.msra.mxu0 0.0
        %3968 = vmatprep.subr.mxu0 0.0
        %3969 = vmatpush1.xpose.msra.mxu0 0.0
        %3970 = vmatprep.subr.mxu0 0.0
        %3971 = vmatpush1.xpose.msra.mxu0 0.0
        %3972 = vmatprep.subr.mxu0 0.0
        %3973 = vmatpush1.xpose.msra.mxu0 0.0
        %3974 = vmatprep.subr.mxu0 0.0
        %3975 = vmatpush1.xpose.msra.mxu0 0.0
        %3976 = vmatprep.subr.mxu0 0.0
        %3977 = vmatpush1.xpose.msra.mxu0 0.0
        %3978 = vmatprep.subr.mxu0 0.0
        %3979 = vmatpush1.xpose.msra.mxu0 0.0
        %3980 = vmatprep.subr.mxu0 0.0
        %3981 = vmatpush1.xpose.msra.mxu0 0.0
        %3982 = vmatprep.subr.mxu0 0.0
        %3983 = vmatpush1.xpose.msra.mxu0 0.0
        %3984 = vmatprep.subr.mxu0 0.0
        %3985 = vmatpush1.xpose.msra.mxu0 0.0
        %3986 = vmatprep.subr.mxu0 0.0
        %3987 = vmatpush1.xpose.msra.mxu0 0.0
        %3988 = vmatprep.subr.mxu0 0.0
        %3989 = vmatpush1.xpose.msra.mxu0 0.0
        %3990 = vmatprep.subr.mxu0 0.0
        %3991 = vmatpush1.xpose.msra.mxu0 0.0
        %3992 = vmatprep.subr.mxu0 0.0
        %3993 = vmatpush1.xpose.msra.mxu0 0.0
        %3994 = vmatprep.subr.mxu0 0.0
        %3995 = vmatpush1.xpose.msra.mxu0 0.0
        %3996 = vmatprep.subr.mxu0 0.0
        %3997 = vmatpush1.xpose.msra.mxu0 0.0
        %3998 = vmatprep.subr.mxu0 0.0
        %3999 = vmatpush1.xpose.msra.mxu0 0.0
        %4000 = vmatprep.subr.mxu0 0.0
        %4001 = vmatpush1.xpose.msra.mxu0 0.0
        %4002 = vmatprep.subr.mxu0 0.0
        %4003 = vmatpush1.xpose.msra.mxu0 0.0
        %4004 = vmatprep.subr.mxu0 0.0
        %4005 = vmatpush1.xpose.msra.mxu0 0.0
        %4006 = vmatprep.subr.mxu0 0.0
        %4007 = vmatpush1.xpose.msra.mxu0 0.0
        %4008 = vmatprep.subr.mxu0 0.0
        %4009 = vmatpush1.xpose.msra.mxu0 0.0
        %4010 = vmatprep.subr.mxu0 0.0
        %4011 = vmatpush1.xpose.msra.mxu0 0.0
        %4012 = vmatprep.mubr.f32.mxu0 0.0
        %4013 = vmatmul.mubr.f32.gmra.mrb[0].mxu0 %v3937
        %v4014 = vpop.f32.mrb[0].mxu0
        %v4015 = vadd.f32 %v3947, %v4014
        %v4016 = vpop.f32.mrb[0].mxu0
        %4017 = vmatprep.mubr.f32.mxu0 0.0
        %4018 = vmatmul.mubr.f32.gmra.mrb[0].mxu0 %v3938
        %v4019 = vpop.f32.mrb[0].mxu0
        %v4020 = vadd.f32 %v3947, %v4019
        %v4021 = vpop.f32.mrb[0].mxu0
        %4022 = vdwg.mxu0
        %v4023 = vadd.f32 %v3845, %v4015
        %v4024 = vadd.f32 %v3846, %v4020
        %v4025 = vld [vmem:[%s186 + $0xdd] sm:$0x1]
        %v4026 = vld [vmem:[%s186 + $0xde] sm:$0x1]
        %v4027 = vsel %vm223, %v4023, 0.0
        %4028 = vadd.xlane.f32.xlu0 %v4027
        %v4029 = vpop.xlane.xlu0 %4028
        %v4030 = vsel %vm223, %v4024, 0.0
        %4031 = vadd.xlane.f32.xlu0 %v4030
        %v4032 = vpop.xlane.xlu0 %4031
        %v4033 = vmul.f32 %v4029, %v1789
        %v4034 = vmul.f32 %v4032, %v1789
        %v4035 = vsub.f32 %v4023, %v4033
        %v4036 = vsub.f32 %v4024, %v4034
        %v4037 = vmul.f32 %v4035, %v4035
        %v4038 = vmul.f32 %v4036, %v4036
        %v4039 = vsel %vm223, %v4037, 0.0
        %4040 = vadd.xlane.f32.xlu0 %v4039
        %v4041 = vpop.xlane.xlu0 %4040
        %v4042 = vsel %vm223, %v4038, 0.0
        %4043 = vadd.xlane.f32.xlu0 %v4042
        %v4044 = vpop.xlane.xlu0 %4043
        %v4045 = vmul.f32 %v4041, %v1789
        %v4046 = vmul.f32 %v4044, %v1789
        %v4047 = vadd.f32 %v4045, 1e-05
        %v4048 = vadd.f32 %v4046, 1e-05
        %v4049 = vrsqrt.pop %v4047
        %v4050 = vrsqrt.pop %v4048
        %v4051 = vmul.f32 %v4035, %v4049
        %v4052 = vmul.f32 %v4036, %v4050
        %v4053 = vlaneseq
        %v4054 = vshrl.u32 %v4053, 7
        %v4055 = vsub.s32 0, %v4054
        %v4056 = vrot.slane %v4025, %v4055
        %v4057 = vmul.f32 %v4051, %v4056
        %v4058 = vmul.f32 %v4052, %v4056
        %v4059 = vlaneseq
        %v4060 = vshrl.u32 %v4059, 7
        %v4061 = vsub.s32 0, %v4060
        %v4062 = vrot.slane %v4026, %v4061
        %v4063 = vadd.f32 %v4057, %v4062
        %v4064 = vadd.f32 %v4058, %v4062
        %4065 = vst.msk [vmem:[#allocation2] sm:$0xff] %vm223, %v4063
        %4066 = vst.msk [vmem:[#allocation2 + $0x8] sm:$0xff] %vm223, %v4064
        %p4067 = scmp.eq.s32.totalorder %s17, 1
        // Predicated region
        $region49: #{encoder_forward.1} parent=31 // pred_check
          %p4068 = pneg %p4067
        $region50: #{encoder_forward.1} parent=31 // pred_check_branch
          %4070 = sbr.rel (%p4068) target = $region52
        $region51: #{encoder_forward.1} parent=31 // pred_region
          %4071 = vst.msk [vmem:[#allocation9] sm:$0xff] %vm223, %v4063
          %4072 = vst.msk [vmem:[#allocation9 + $0x8] sm:$0xff] %vm223, %v4064
        $region52: #{encoder_forward.1} parent=31 // pred_fallthru
          _
        // Predicated region
        $region53: #{encoder_forward.1} parent=31 // pred_check
          %p4073 = pneg %p98
        $region54: #{encoder_forward.1} parent=31 // pred_check_branch
          %4075 = sbr.rel (%p4073) target = $region56
        $region55: #{encoder_forward.1} parent=31 // pred_region
          %s4077 = ssub.s32 256, 256
          %4078 = vsyncadd [#allocation5], %s4077
          %s4079 = sshll.u32 [#allocation9], 4
          %s4080 = int_to_ptr.vmem [resolvable:$true] %s4079
          %4085 = dma.vmem_to_hbm [thread:$0]  %s4080, 256, %s3, [#allocation5], 128, 128, 8
        $region56: #{encoder_forward.1} parent=31 // pred_fallthru
          _
        // Predicated region
        $region57: #{encoder_forward.1} parent=31 // pred_check
          %p4086 = pneg %p98
        $region58: #{encoder_forward.1} parent=31 // pred_check_branch
          %4088 = sbr.rel (%p4086) target = $region60
        $region59: #{encoder_forward.1} parent=31 // pred_region
          %4089 = dma.done [#allocation5], 256
        $region60: #{encoder_forward.1} parent=31 // pred_fallthru
          _
      $region32: #{encoder_forward.1} parent=5 // pred_fallthru
        _
      %p4090 = scmp.le.s32.totalorder 2, %s12
      // Predicated region
      $region61: #{encoder_forward.1} parent=5 // pred_check
        %p4091 = pneg %p4090
      $region62: #{encoder_forward.1} parent=5 // pred_check_branch
        %4093 = sbr.rel (%p4091) target = $region64
      $region63: #{encoder_forward.1} parent=5 // pred_region
        %s4094 = ssub.s32 %s12, 2
      $region64: #{encoder_forward.1} parent=5 // pred_fallthru
        _
    $region6: #{encoder_forward.1} parent=1 // loop_footer
      %s16 = sadd.s32 1, %s12
    $region7: #{encoder_forward.1} parent=1 // loop_footer_branch
      %11 = sbr.rel target = $region3
    $region8: #{encoder_forward.1} parent=1 // loop_exit
      _
    %4095 = vsyncpa [#allocation4], 1
    %s4096 = scalar_lea.sflag [#allocation4], 1
    %4097 = vsyncpa %s4096, 1
    %4098 = vsyncpa [#allocation7], 1
    %4099 = vsyncpa [#allocation5], 1
    %s4100 = scalar_lea.sflag [#allocation5], 1
    %4101 = vsyncpa %s4100, 1

</llo_original>
